<compile_context>
chip_gen: v6e
topology: v6e:2x2x1
jax: 0.10.0
libtpu: 0.0.40
codegen_flags: <defaults>
</compile_context>

<pallas_src>
import functools

import jax
import jax.numpy as jnp
import numpy as np
from jax.experimental import pallas as pl
from jax.experimental.pallas import tpu as pltpu  # noqa: F401

LEAKY_SLOPE = 0.2
IN_EPS = 1e-5


# ---------------------------------------------------------------------------
# Constant geometry matrices (numpy; depend only on static B and the static L
# schedule, so under jit they become compile-time constants).
# ---------------------------------------------------------------------------
def _conv_gather_mats(B, L_in, K, stride, pad):
    """G[k]: (B*L_in, B*L_out) 0/1 matrix s.t.
    (x @ G[k])[:, b*L_out + l] == x[:, b*L_in + (stride*l + k - pad)]
    (or 0 when that position falls in the zero padding)."""
    L_out = (L_in + 2 * pad - K) // stride + 1
    G = np.zeros((K, B * L_in, B * L_out), np.float32)
    for b in range(B):
        for l in range(L_out):
            for k in range(K):
                t = stride * l + k - pad
                if 0 <= t < L_in:
                    G[k, b * L_in + t, b * L_out + l] = 1.0
    return G, L_out


def _seg_avg_mat(B, L):
    """(B*L, B*L): y @ A broadcasts the per-batch-segment mean to every column."""
    A = np.zeros((B * L, B * L), np.float32)
    for b in range(B):
        A[b * L:(b + 1) * L, b * L:(b + 1) * L] = 1.0 / L
    return A


def _pool_mat(B, L):
    """(B*L, B): y @ M == per-batch mean over L (AdaptiveAvgPool1d(1))."""
    M = np.zeros((B * L, B), np.float32)
    for b in range(B):
        M[b * L:(b + 1) * L, b] = 1.0 / L
    return M


def _bcast_mat(B, L):
    """(B, B*L): v @ M repeats a per-batch column vector across its L segment."""
    M = np.zeros((B, B * L), np.float32)
    for b in range(B):
        M[b, b * L:(b + 1) * L] = 1.0
    return M


# ---------------------------------------------------------------------------
# The fused kernel: both encoder branches, all layers, VMEM-resident.
# ---------------------------------------------------------------------------
def _fused_encoder_kernel(*refs, content_ops, style_ops, n_in):
    in_refs = refs[:n_in]
    sp_ref, gl_ref = refs[n_in], refs[n_in + 1]

    def leaky(v):
        return jnp.where(v > 0, v, LEAKY_SLOPE * v)

    def mm(a, b):
        return jnp.dot(a, b, preferred_element_type=jnp.float32)

    def run(ops):
        h = in_refs[0][...]                       # x, (C0, B*L0)
        for op in ops:
            tag = op[0]
            if tag == "conv":
                _, w_i, b_i, g_i, K, a_i, act, extra = op
                bias = in_refs[b_i][...]          # (Cout, 1)
                vb = None
                if extra is not None:             # conditioning-vector channels,
                    wv_i, v_i, m_i = extra        # folded into this conv's weights
                    vb = mm(in_refs[v_i][...], in_refs[m_i][...])   # (A, B*L)
                if K == 1:                        # 1x1 conv: plain matmul
                    y = mm(in_refs[w_i][0], h) + bias
                    if vb is not None:
                        y = y + mm(in_refs[wv_i][0], vb)
                else:                             # k-tap conv via gather matmuls
                    y = bias
                    for k in range(K):
                        y = y + mm(in_refs[w_i][k], mm(h, in_refs[g_i][k]))
                        if vb is not None:
                            y = y + mm(in_refs[wv_i][k], mm(vb, in_refs[g_i][k]))
                if a_i is not None:               # InstanceNorm1d (affine=False)
                    A = in_refs[a_i][...]
                    mean = mm(y, A)
                    var = mm(y * y, A) - mean * mean
                    y = (y - mean) * jax.lax.rsqrt(jnp.maximum(var, 0.0) + IN_EPS)
                if act:                           # LeakyReLU(0.2)
                    y = leaky(y)
                h = y
            else:                                 # "pool_conv": avgpool + 1x1 conv
                _, mp_i, w_i, b_i = op
                pooled = mm(h, in_refs[mp_i][...])                 # (C, B)
                h = mm(in_refs[w_i][0], pooled) + in_refs[b_i][...]
        return h

    sp_ref[...] = run(content_ops)
    gl_ref[...] = run(style_ops)


# ---------------------------------------------------------------------------
# Wrapper: builds the static op plan + flat input list, calls one pallas_call.
# ---------------------------------------------------------------------------
def style_content_encoder(params, x, action_vecs=None, style_vecs=None):
    x = jnp.asarray(x, jnp.float32)
    B, C0, L0 = x.shape

    inputs = []

    def add(arr):
        inputs.append(jnp.asarray(arr, jnp.float32))
        return len(inputs) - 1

    # Input activations with batch folded into the lane axis: (C0, B*L0).
    add(jnp.transpose(x, (1, 0, 2)).reshape(C0, B * L0))

    cache = {}

    def g_mats(L_in):                 # k=3, stride=2, pad=1 geometry (shared)
        key = ("G", L_in)
        if key not in cache:
            G, L_out = _conv_gather_mats(B, L_in, 3, 2, 1)
            cache[key] = (add(G), L_out)
        return cache[key]

    def a_mat(L):                     # instance-norm segment averaging (shared)
        key = ("A", L)
        if key not in cache:
            cache[key] = add(_seg_avg_mat(B, L))
        return cache[key]

    def b_mat(L):                     # per-batch broadcast matrix (shared)
        key = ("Mb", L)
        if key not in cache:
            cache[key] = add(_bcast_mat(B, L))
        return cache[key]

    def add_w(w):                     # PyTorch (Cout, Cin, K) -> (K, Cout, Cin)
        return add(jnp.transpose(jnp.asarray(w, jnp.float32), (2, 0, 1)))

    def add_b(b):                     # (Cout,) -> (Cout, 1)
        return add(jnp.asarray(b, jnp.float32).reshape(-1, 1))

    # ---- content branch plan ----
    content_ops = []
    L = L0
    for (w, b) in params["content_mid"]:          # k=3, downsample, 'in', act
        g_i, L_out = g_mats(L)
        content_ops.append(("conv", add_w(w), add_b(b), g_i, 3,
                            a_mat(L_out), True, None))
        L = L_out
    L_mid = L
    content_extra = None
    if action_vecs is not None:                   # folded into first sp conv
        av = jnp.asarray(action_vecs, jnp.float32)
        content_extra = (add(av.T), b_mat(L_mid), av.shape[1])

    sp_layers = params["content_sp"]
    for idx, (w, b) in enumerate(sp_layers):      # k=1; last: no norm / no act
        is_last = idx == len(sp_layers) - 1
        extra = None
        if idx == 0 and content_extra is not None:
            v_i, m_i, a_dim = content_extra
            S = w.shape[1] - a_dim
            extra = (add_w(w[:, S:, :]), v_i, m_i)
            w_i = add_w(w[:, :S, :])
        else:
            w_i = add_w(w)
        content_ops.append(("conv", w_i, add_b(b), -1, 1,
                            None if is_last else a_mat(L_mid),
                            not is_last, extra))
    C_sp = sp_layers[-1][0].shape[0]

    # ---- style branch plan ----
    style_ops = []
    L = L0
    for (w, b) in params["style_mid"]:            # k=3, downsample, act, no norm
        g_i, L_out = g_mats(L)
        style_ops.append(("conv", add_w(w), add_b(b), g_i, 3, None, True, None))
        L = L_out
    style_extra = None
    if style_vecs is not None:                    # folded into first gl conv
        sv = jnp.asarray(style_vecs, jnp.float32)
        style_extra = (add(sv.T), b_mat(L), sv.shape[1])

    gl_layers = params["style_gl"]
    for idx, (w, b) in enumerate(gl_layers[:-1]): # k=3, downsample, act
        g_i, L_out = g_mats(L)
        extra = None
        if idx == 0 and style_extra is not None:
            v_i, m_i, a_dim = style_extra
            S = w.shape[1] - a_dim
            extra = (add_w(w[:, S:, :]), v_i, m_i)
            w_i = add_w(w[:, :S, :])
        else:
            w_i = add_w(w)
        style_ops.append(("conv", w_i, add_b(b), g_i, 3, None, True, extra))
        L = L_out
    mp_i = b_mat  # keep linters quiet? (unused alias removed below)
    mp_i = add(_pool_mat(B, L))                   # AdaptiveAvgPool1d(1)
    w, b = gl_layers[-1]                          # k=1, no act, no norm
    style_ops.append(("pool_conv", mp_i, add_w(w), add_b(b)))
    C_gl = w.shape[0]

    kernel = functools.partial(
        _fused_encoder_kernel,
        content_ops=tuple(content_ops),
        style_ops=tuple(style_ops),
        n_in=len(inputs),
    )

    # Single pallas_call, no grid: every operand is a whole-array VMEM block,
    # all intermediates stay on-chip (total footprint is a few KB).
    # TODO(synk): on v7x the two independent branches could be sharded across
    #             the 2 TensorCores (core_map); and for large L / channel
    #             counts an L-tile grid + bf16 matmuls would be needed —
    #             unnecessary at these sizes.
    sp_flat, gl_flat = pl.pallas_call(
        kernel,
        out_shape=(
            jax.ShapeDtypeStruct((C_sp, B * L_mid), jnp.float32),
            jax.ShapeDtypeStruct((C_gl, B), jnp.float32),
        ),
    )(*inputs)

    sp = sp_flat.reshape(C_sp, B, L_mid).transpose(1, 0, 2)   # (B, C_sp, L_mid)
    gl = gl_flat.T                                            # (B, 2*C_st)
    half = C_gl // 2
    return sp, gl[:, :half], gl[:, half:]                     # sp, gl_mu, gl_logvar


# ---------------------------------------------------------------------------
# Pure-JAX reference forward (for correctness validation).
# ---------------------------------------------------------------------------
def _ref_forward(params, x, action_vecs=None, style_vecs=None):
    def conv(h, w, b, stride, pad):
        y = jax.lax.conv_general_dilated(
            h, jnp.asarray(w, jnp.float32), window_strides=(stride,),
            padding=[(pad, pad)], dimension_numbers=("NCH", "OIH", "NCH"),
            precision=jax.lax.Precision.HIGHEST)
        return y + jnp.asarray(b, jnp.float32)[None, :, None]

    def inorm(y):
        m = y.mean(axis=-1, keepdims=True)
        v = y.var(axis=-1, keepdims=True)
        return (y - m) * jax.lax.rsqrt(v + IN_EPS)

    def leaky(v):
        return jnp.where(v > 0, v, LEAKY_SLOPE * v)

    x = jnp.asarray(x, jnp.float32)
    # content branch
    h = x
    for (w, b) in params["content_mid"]:
        h = leaky(inorm(conv(h, w, b, 2, 1)))
    if action_vecs is not None:
        av = jnp.asarray(action_vecs, jnp.float32)
        h = jnp.concatenate(
            [h, jnp.repeat(av[:, :, None], h.shape[-1], axis=-1)], axis=1)
    for (w, b) in params["content_sp"][:-1]:
        h = leaky(inorm(conv(h, w, b, 1, 0)))
    w, b = params["content_sp"][-1]
    sp = conv(h, w, b, 1, 0)
    # style branch
    h = x
    for (w, b) in params["style_mid"]:
        h = leaky(conv(h, w, b, 2, 1))
    if style_vecs is not None:
        sv = jnp.asarray(style_vecs, jnp.float32)
        h = jnp.concatenate(
            [h, jnp.repeat(sv[:, :, None], h.shape[-1], axis=-1)], axis=1)
    for (w, b) in params["style_gl"][:-1]:
        h = leaky(conv(h, w, b, 2, 1))
    w, b = params["style_gl"][-1]
    gl = conv(h.mean(axis=-1, keepdims=True), w, b, 1, 0)[:, :, 0]
    half = gl.shape[1] // 2
    return sp, gl[:, :half], gl[:, half:]


# ---------------------------------------------------------------------------
# Parameter construction (deterministic, in-script; PyTorch weight layout)
# ---------------------------------------------------------------------------
def _init_conv(key, cout, cin, k):
    kw, kb = jax.random.split(key)
    scale = 1.0 / jnp.sqrt(jnp.float32(cin * k))
    w = jax.random.normal(kw, (cout, cin, k), jnp.float32) * scale
    b = jax.random.normal(kb, (cout,), jnp.float32) * 0.01
    return w, b


def init_params(key, mid_channels, sp_channels, st_channels):
    params = {"content_mid": [], "content_sp": [], "style_mid": [], "style_gl": []}
    n_down = len(mid_channels) - 1
    # ContentEncoder.ToMidPoint : k=3, downsample, norm='in'
    for i in range(1, n_down + 1):
        key, sub = jax.random.split(key)
        params["content_mid"].append(_init_conv(sub, mid_channels[i], mid_channels[i - 1], 3))
    # ContentEncoder.ToSpatialCode : k=1, norm='in' ... final k=1 no act / no norm
    for i in range(len(sp_channels) - 1):
        key, sub = jax.random.split(key)
        params["content_sp"].append(_init_conv(sub, sp_channels[i + 1], sp_channels[i], 1))
    key, sub = jax.random.split(key)
    params["content_sp"].append(_init_conv(sub, sp_channels[-1], sp_channels[-1], 1))
    # StyleEncoder.ToMidPoint : k=3, downsample, no norm
    for i in range(1, n_down + 1):
        key, sub = jax.random.split(key)
        params["style_mid"].append(_init_conv(sub, mid_channels[i], mid_channels[i - 1], 3))
    # StyleEncoder.ToGlobalCode : k=3 downsample convs, then avgpool + k=1 conv (no act)
    for i in range(len(st_channels) - 1):
        key, sub = jax.random.split(key)
        params["style_gl"].append(_init_conv(sub, st_channels[i + 1], st_channels[i], 3))
    key, sub = jax.random.split(key)
    params["style_gl"].append(_init_conv(sub, st_channels[-1] * 2, st_channels[-1], 1))
    return params


def _check(got, want, tag):
    ok = bool(jnp.allclose(got, want, atol=5e-2, rtol=5e-2))
    assert ok, (tag, float(jnp.max(jnp.abs(got - want))))
    assert bool(jnp.all(jnp.isfinite(got))), tag


if __name__ == "__main__":
    key = jax.random.PRNGKey(0)
    B, L = 2, 16

    # ---- Config 1: no conditioning vectors ----
    mid_channels = [4, 8, 16]
    sp_channels = [16, 16, 8]      # sp_channels[0] == mid_channels[-1]
    st_channels = [16, 16]         # st_channels[0] == mid_channels[-1]
    key, kx, kp = jax.random.split(key, 3)
    x = jax.random.normal(kx, (B, mid_channels[0], L), jnp.float32)
    params = init_params(kp, mid_channels, sp_channels, st_channels)

    sp, mu, lv = jax.jit(style_content_encoder)(params, x)
    jax.block_until_ready((sp, mu, lv))
    assert sp.shape == (B, sp_channels[-1], L // 4), sp.shape
    assert mu.shape == (B, st_channels[-1]) and lv.shape == (B, st_channels[-1])
    rsp, rmu, rlv = _ref_forward(params, x)
    _check(sp, rsp, "sp"); _check(mu, rmu, "gl_mu"); _check(lv, rlv, "gl_logvar")

    # ---- Config 2: with action / style conditioning vectors ----
    action_dim, style_dim = 3, 2
    mid_channels2 = [4, 8, 16]
    sp_channels2 = [16 + action_dim, 16, 8]
    st_channels2 = [16 + style_dim, 16]
    key, kx2, kp2, ka, ks = jax.random.split(key, 5)
    x2 = jax.random.normal(kx2, (B, mid_channels2[0], L), jnp.float32)
    av = jax.random.normal(ka, (B, action_dim), jnp.float32)
    sv = jax.random.normal(ks, (B, style_dim), jnp.float32)
    params2 = init_params(kp2, mid_channels2, sp_channels2, st_channels2)

    sp2, mu2, lv2 = jax.jit(style_content_encoder)(params2, x2, av, sv)
    jax.block_until_ready((sp2, mu2, lv2))
    assert sp2.shape == (B, sp_channels2[-1], L // 4), sp2.shape
    assert mu2.shape == (B, st_channels2[-1]) and lv2.shape == (B, st_channels2[-1])
    rsp2, rmu2, rlv2 = _ref_forward(params2, x2, av, sv)
    _check(sp2, rsp2, "sp_vec"); _check(mu2, rmu2, "gl_mu_vec"); _check(lv2, rlv2, "gl_logvar_vec")

    print("KERNEL_OK")
</pallas_src>

<mosaic_0001>
module attributes {stable_mosaic.version = 11 : i64} {
  func.func @_fused_encoder_kernel(%arg0: memref<4x32xf32, #tpu.memory_space<vmem>>, %arg1: memref<3x32x16xf32, #tpu.memory_space<vmem>>, %arg2: memref<3x8x4xf32, #tpu.memory_space<vmem>>, %arg3: memref<8x1xf32, #tpu.memory_space<vmem>>, %arg4: memref<16x16xf32, #tpu.memory_space<vmem>>, %arg5: memref<3x16x8xf32, #tpu.memory_space<vmem>>, %arg6: memref<3x16x8xf32, #tpu.memory_space<vmem>>, %arg7: memref<16x1xf32, #tpu.memory_space<vmem>>, %arg8: memref<8x8xf32, #tpu.memory_space<vmem>>, %arg9: memref<1x16x16xf32, #tpu.memory_space<vmem>>, %arg10: memref<16x1xf32, #tpu.memory_space<vmem>>, %arg11: memref<1x8x16xf32, #tpu.memory_space<vmem>>, %arg12: memref<8x1xf32, #tpu.memory_space<vmem>>, %arg13: memref<1x8x8xf32, #tpu.memory_space<vmem>>, %arg14: memref<8x1xf32, #tpu.memory_space<vmem>>, %arg15: memref<3x8x4xf32, #tpu.memory_space<vmem>>, %arg16: memref<8x1xf32, #tpu.memory_space<vmem>>, %arg17: memref<3x16x8xf32, #tpu.memory_space<vmem>>, %arg18: memref<16x1xf32, #tpu.memory_space<vmem>>, %arg19: memref<3x8x4xf32, #tpu.memory_space<vmem>>, %arg20: memref<3x16x16xf32, #tpu.memory_space<vmem>>, %arg21: memref<16x1xf32, #tpu.memory_space<vmem>>, %arg22: memref<4x2xf32, #tpu.memory_space<vmem>>, %arg23: memref<1x32x16xf32, #tpu.memory_space<vmem>>, %arg24: memref<32x1xf32, #tpu.memory_space<vmem>>, %arg25: memref<8x8xf32, #tpu.memory_space<vmem>>, %arg26: memref<32x2xf32, #tpu.memory_space<vmem>>) attributes {dimension_semantics = [], scalar_prefetch = 0 : i64, scratch_operands = 0 : i64, tpu.core_type = #tpu.core_type<tc>} {
    %c0 = arith.constant 0 : index
    %c0_0 = arith.constant 0 : index
    %0 = vector.load %arg0[%c0, %c0_0] : memref<4x32xf32, #tpu.memory_space<vmem>>, vector<4x32xf32>
    %c0_1 = arith.constant 0 : index
    %c0_2 = arith.constant 0 : index
    %1 = vector.load %arg3[%c0_1, %c0_2] : memref<8x1xf32, #tpu.memory_space<vmem>>, vector<8x1xf32>
    %c0_3 = arith.constant 0 : index
    %c0_4 = arith.constant 0 : index
    %c0_5 = arith.constant 0 : index
    %2 = vector.load %arg2[%c0_3, %c0_4, %c0_5] : memref<3x8x4xf32, #tpu.memory_space<vmem>>, vector<1x8x4xf32>
    %3 = vector.shape_cast %2 : vector<1x8x4xf32> to vector<8x4xf32>
    %c0_6 = arith.constant 0 : index
    %c0_7 = arith.constant 0 : index
    %c0_8 = arith.constant 0 : index
    %4 = vector.load %arg1[%c0_6, %c0_7, %c0_8] : memref<3x32x16xf32, #tpu.memory_space<vmem>>, vector<1x32x16xf32>
    %5 = vector.shape_cast %4 : vector<1x32x16xf32> to vector<32x16xf32>
    %cst = arith.constant dense<0.000000e+00> : vector<4x16xf32>
    %6 = tpu.matmul %0, %5, %cst {dimension_numbers = #tpu.dot_dimension_numbers<[1], [0], [0], [1], [0, 0, 1, 1], [], []>} : vector<4x32xf32>, vector<32x16xf32>, vector<4x16xf32> -> vector<4x16xf32>
    %cst_9 = arith.constant dense<0.000000e+00> : vector<8x16xf32>
    %7 = tpu.matmul %3, %6, %cst_9 {dimension_numbers = #tpu.dot_dimension_numbers<[1], [0], [0], [1], [0, 0, 1, 1], [], []>} : vector<8x4xf32>, vector<4x16xf32>, vector<8x16xf32> -> vector<8x16xf32>
    %8 = vector.broadcast %1 : vector<8x1xf32> to vector<8x16xf32>
    %9 = arith.addf %8, %7 : vector<8x16xf32>
    %c1 = arith.constant 1 : index
    %c0_10 = arith.constant 0 : index
    %c0_11 = arith.constant 0 : index
    %10 = vector.load %arg2[%c1, %c0_10, %c0_11] : memref<3x8x4xf32, #tpu.memory_space<vmem>>, vector<1x8x4xf32>
    %11 = vector.shape_cast %10 : vector<1x8x4xf32> to vector<8x4xf32>
    %c1_12 = arith.constant 1 : index
    %c0_13 = arith.constant 0 : index
    %c0_14 = arith.constant 0 : index
    %12 = vector.load %arg1[%c1_12, %c0_13, %c0_14] : memref<3x32x16xf32, #tpu.memory_space<vmem>>, vector<1x32x16xf32>
    %13 = vector.shape_cast %12 : vector<1x32x16xf32> to vector<32x16xf32>
    %cst_15 = arith.constant dense<0.000000e+00> : vector<4x16xf32>
    %14 = tpu.matmul %0, %13, %cst_15 {dimension_numbers = #tpu.dot_dimension_numbers<[1], [0], [0], [1], [0, 0, 1, 1], [], []>} : vector<4x32xf32>, vector<32x16xf32>, vector<4x16xf32> -> vector<4x16xf32>
    %cst_16 = arith.constant dense<0.000000e+00> : vector<8x16xf32>
    %15 = tpu.matmul %11, %14, %cst_16 {dimension_numbers = #tpu.dot_dimension_numbers<[1], [0], [0], [1], [0, 0, 1, 1], [], []>} : vector<8x4xf32>, vector<4x16xf32>, vector<8x16xf32> -> vector<8x16xf32>
    %16 = arith.addf %9, %15 : vector<8x16xf32>
    %c2 = arith.constant 2 : index
    %c0_17 = arith.constant 0 : index
    %c0_18 = arith.constant 0 : index
    %17 = vector.load %arg2[%c2, %c0_17, %c0_18] : memref<3x8x4xf32, #tpu.memory_space<vmem>>, vector<1x8x4xf32>
    %18 = vector.shape_cast %17 : vector<1x8x4xf32> to vector<8x4xf32>
    %c2_19 = arith.constant 2 : index
    %c0_20 = arith.constant 0 : index
    %c0_21 = arith.constant 0 : index
    %19 = vector.load %arg1[%c2_19, %c0_20, %c0_21] : memref<3x32x16xf32, #tpu.memory_space<vmem>>, vector<1x32x16xf32>
    %20 = vector.shape_cast %19 : vector<1x32x16xf32> to vector<32x16xf32>
    %cst_22 = arith.constant dense<0.000000e+00> : vector<4x16xf32>
    %21 = tpu.matmul %0, %20, %cst_22 {dimension_numbers = #tpu.dot_dimension_numbers<[1], [0], [0], [1], [0, 0, 1, 1], [], []>} : vector<4x32xf32>, vector<32x16xf32>, vector<4x16xf32> -> vector<4x16xf32>
    %cst_23 = arith.constant dense<0.000000e+00> : vector<8x16xf32>
    %22 = tpu.matmul %18, %21, %cst_23 {dimension_numbers = #tpu.dot_dimension_numbers<[1], [0], [0], [1], [0, 0, 1, 1], [], []>} : vector<8x4xf32>, vector<4x16xf32>, vector<8x16xf32> -> vector<8x16xf32>
    %23 = arith.addf %16, %22 : vector<8x16xf32>
    %c0_24 = arith.constant 0 : index
    %c0_25 = arith.constant 0 : index
    %24 = vector.load %arg4[%c0_24, %c0_25] : memref<16x16xf32, #tpu.memory_space<vmem>>, vector<16x16xf32>
    %cst_26 = arith.constant dense<0.000000e+00> : vector<8x16xf32>
    %25 = tpu.matmul %23, %24, %cst_26 {dimension_numbers = #tpu.dot_dimension_numbers<[1], [0], [0], [1], [0, 0, 1, 1], [], []>} : vector<8x16xf32>, vector<16x16xf32>, vector<8x16xf32> -> vector<8x16xf32>
    %26 = arith.mulf %23, %23 : vector<8x16xf32>
    %cst_27 = arith.constant dense<0.000000e+00> : vector<8x16xf32>
    %27 = tpu.matmul %26, %24, %cst_27 {dimension_numbers = #tpu.dot_dimension_numbers<[1], [0], [0], [1], [0, 0, 1, 1], [], []>} : vector<8x16xf32>, vector<16x16xf32>, vector<8x16xf32> -> vector<8x16xf32>
    %28 = arith.mulf %25, %25 : vector<8x16xf32>
    %29 = arith.subf %27, %28 : vector<8x16xf32>
    %30 = arith.subf %23, %25 : vector<8x16xf32>
    %cst_28 = arith.constant 0.000000e+00 : f32
    %31 = vector.broadcast %cst_28 : f32 to vector<8x16xf32>
    %32 = arith.maximumf %29, %31 : vector<8x16xf32>
    %cst_29 = arith.constant 9.99999974E-6 : f32
    %33 = vector.broadcast %cst_29 : f32 to vector<8x16xf32>
    %34 = arith.addf %32, %33 : vector<8x16xf32>
    %35 = math.rsqrt %34 : vector<8x16xf32>
    %36 = arith.mulf %30, %35 : vector<8x16xf32>
    %cst_30 = arith.constant 0.000000e+00 : f32
    %37 = vector.broadcast %cst_30 : f32 to vector<8x16xf32>
    %38 = arith.cmpf ogt, %36, %37 : vector<8x16xf32>
    %cst_31 = arith.constant 2.000000e-01 : f32
    %39 = vector.broadcast %cst_31 : f32 to vector<8x16xf32>
    %40 = arith.mulf %39, %36 : vector<8x16xf32>
    %41 = arith.select %38, %36, %40 : vector<8x16xi1>, vector<8x16xf32>
    %c0_32 = arith.constant 0 : index
    %c0_33 = arith.constant 0 : index
    %42 = vector.load %arg7[%c0_32, %c0_33] : memref<16x1xf32, #tpu.memory_space<vmem>>, vector<16x1xf32>
    %c0_34 = arith.constant 0 : index
    %c0_35 = arith.constant 0 : index
    %c0_36 = arith.constant 0 : index
    %43 = vector.load %arg6[%c0_34, %c0_35, %c0_36] : memref<3x16x8xf32, #tpu.memory_space<vmem>>, vector<1x16x8xf32>
    %44 = vector.shape_cast %43 : vector<1x16x8xf32> to vector<16x8xf32>
    %c0_37 = arith.constant 0 : index
    %c0_38 = arith.constant 0 : index
    %c0_39 = arith.constant 0 : index
    %45 = vector.load %arg5[%c0_37, %c0_38, %c0_39] : memref<3x16x8xf32, #tpu.memory_space<vmem>>, vector<1x16x8xf32>
    %46 = vector.shape_cast %45 : vector<1x16x8xf32> to vector<16x8xf32>
    %cst_40 = arith.constant dense<0.000000e+00> : vector<8x8xf32>
    %47 = tpu.matmul %41, %46, %cst_40 {dimension_numbers = #tpu.dot_dimension_numbers<[1], [0], [0], [1], [0, 0, 1, 1], [], []>} : vector<8x16xf32>, vector<16x8xf32>, vector<8x8xf32> -> vector<8x8xf32>
    %cst_41 = arith.constant dense<0.000000e+00> : vector<16x8xf32>
    %48 = tpu.matmul %44, %47, %cst_41 {dimension_numbers = #tpu.dot_dimension_numbers<[1], [0], [0], [1], [0, 0, 1, 1], [], []>} : vector<16x8xf32>, vector<8x8xf32>, vector<16x8xf32> -> vector<16x8xf32>
    %49 = vector.broadcast %42 : vector<16x1xf32> to vector<16x8xf32>
    %50 = arith.addf %49, %48 : vector<16x8xf32>
    %c1_42 = arith.constant 1 : index
    %c0_43 = arith.constant 0 : index
    %c0_44 = arith.constant 0 : index
    %51 = vector.load %arg6[%c1_42, %c0_43, %c0_44] : memref<3x16x8xf32, #tpu.memory_space<vmem>>, vector<1x16x8xf32>
    %52 = vector.shape_cast %51 : vector<1x16x8xf32> to vector<16x8xf32>
    %c1_45 = arith.constant 1 : index
    %c0_46 = arith.constant 0 : index
    %c0_47 = arith.constant 0 : index
    %53 = vector.load %arg5[%c1_45, %c0_46, %c0_47] : memref<3x16x8xf32, #tpu.memory_space<vmem>>, vector<1x16x8xf32>
    %54 = vector.shape_cast %53 : vector<1x16x8xf32> to vector<16x8xf32>
    %cst_48 = arith.constant dense<0.000000e+00> : vector<8x8xf32>
    %55 = tpu.matmul %41, %54, %cst_48 {dimension_numbers = #tpu.dot_dimension_numbers<[1], [0], [0], [1], [0, 0, 1, 1], [], []>} : vector<8x16xf32>, vector<16x8xf32>, vector<8x8xf32> -> vector<8x8xf32>
    %cst_49 = arith.constant dense<0.000000e+00> : vector<16x8xf32>
    %56 = tpu.matmul %52, %55, %cst_49 {dimension_numbers = #tpu.dot_dimension_numbers<[1], [0], [0], [1], [0, 0, 1, 1], [], []>} : vector<16x8xf32>, vector<8x8xf32>, vector<16x8xf32> -> vector<16x8xf32>
    %57 = arith.addf %50, %56 : vector<16x8xf32>
    %c2_50 = arith.constant 2 : index
    %c0_51 = arith.constant 0 : index
    %c0_52 = arith.constant 0 : index
    %58 = vector.load %arg6[%c2_50, %c0_51, %c0_52] : memref<3x16x8xf32, #tpu.memory_space<vmem>>, vector<1x16x8xf32>
    %59 = vector.shape_cast %58 : vector<1x16x8xf32> to vector<16x8xf32>
    %c2_53 = arith.constant 2 : index
    %c0_54 = arith.constant 0 : index
    %c0_55 = arith.constant 0 : index
    %60 = vector.load %arg5[%c2_53, %c0_54, %c0_55] : memref<3x16x8xf32, #tpu.memory_space<vmem>>, vector<1x16x8xf32>
    %61 = vector.shape_cast %60 : vector<1x16x8xf32> to vector<16x8xf32>
    %cst_56 = arith.constant dense<0.000000e+00> : vector<8x8xf32>
    %62 = tpu.matmul %41, %61, %cst_56 {dimension_numbers = #tpu.dot_dimension_numbers<[1], [0], [0], [1], [0, 0, 1, 1], [], []>} : vector<8x16xf32>, vector<16x8xf32>, vector<8x8xf32> -> vector<8x8xf32>
    %cst_57 = arith.constant dense<0.000000e+00> : vector<16x8xf32>
    %63 = tpu.matmul %59, %62, %cst_57 {dimension_numbers = #tpu.dot_dimension_numbers<[1], [0], [0], [1], [0, 0, 1, 1], [], []>} : vector<16x8xf32>, vector<8x8xf32>, vector<16x8xf32> -> vector<16x8xf32>
    %64 = arith.addf %57, %63 : vector<16x8xf32>
    %c0_58 = arith.constant 0 : index
    %c0_59 = arith.constant 0 : index
    %65 = vector.load %arg8[%c0_58, %c0_59] : memref<8x8xf32, #tpu.memory_space<vmem>>, vector<8x8xf32>
    %cst_60 = arith.constant dense<0.000000e+00> : vector<16x8xf32>
    %66 = tpu.matmul %64, %65, %cst_60 {dimension_numbers = #tpu.dot_dimension_numbers<[1], [0], [0], [1], [0, 0, 1, 1], [], []>} : vector<16x8xf32>, vector<8x8xf32>, vector<16x8xf32> -> vector<16x8xf32>
    %67 = arith.mulf %64, %64 : vector<16x8xf32>
    %cst_61 = arith.constant dense<0.000000e+00> : vector<16x8xf32>
    %68 = tpu.matmul %67, %65, %cst_61 {dimension_numbers = #tpu.dot_dimension_numbers<[1], [0], [0], [1], [0, 0, 1, 1], [], []>} : vector<16x8xf32>, vector<8x8xf32>, vector<16x8xf32> -> vector<16x8xf32>
    %69 = arith.mulf %66, %66 : vector<16x8xf32>
    %70 = arith.subf %68, %69 : vector<16x8xf32>
    %71 = arith.subf %64, %66 : vector<16x8xf32>
    %cst_62 = arith.constant 0.000000e+00 : f32
    %72 = vector.broadcast %cst_62 : f32 to vector<16x8xf32>
    %73 = arith.maximumf %70, %72 : vector<16x8xf32>
    %cst_63 = arith.constant 9.99999974E-6 : f32
    %74 = vector.broadcast %cst_63 : f32 to vector<16x8xf32>
    %75 = arith.addf %73, %74 : vector<16x8xf32>
    %76 = math.rsqrt %75 : vector<16x8xf32>
    %77 = arith.mulf %71, %76 : vector<16x8xf32>
    %cst_64 = arith.constant 0.000000e+00 : f32
    %78 = vector.broadcast %cst_64 : f32 to vector<16x8xf32>
    %79 = arith.cmpf ogt, %77, %78 : vector<16x8xf32>
    %cst_65 = arith.constant 2.000000e-01 : f32
    %80 = vector.broadcast %cst_65 : f32 to vector<16x8xf32>
    %81 = arith.mulf %80, %77 : vector<16x8xf32>
    %82 = arith.select %79, %77, %81 : vector<16x8xi1>, vector<16x8xf32>
    %c0_66 = arith.constant 0 : index
    %c0_67 = arith.constant 0 : index
    %83 = vector.load %arg10[%c0_66, %c0_67] : memref<16x1xf32, #tpu.memory_space<vmem>>, vector<16x1xf32>
    %c0_68 = arith.constant 0 : index
    %c0_69 = arith.constant 0 : index
    %c0_70 = arith.constant 0 : index
    %84 = vector.load %arg9[%c0_68, %c0_69, %c0_70] : memref<1x16x16xf32, #tpu.memory_space<vmem>>, vector<1x16x16xf32>
    %85 = vector.shape_cast %84 : vector<1x16x16xf32> to vector<16x16xf32>
    %cst_71 = arith.constant dense<0.000000e+00> : vector<16x8xf32>
    %86 = tpu.matmul %85, %82, %cst_71 {dimension_numbers = #tpu.dot_dimension_numbers<[1], [0], [0], [1], [0, 0, 1, 1], [], []>} : vector<16x16xf32>, vector<16x8xf32>, vector<16x8xf32> -> vector<16x8xf32>
    %87 = vector.broadcast %83 : vector<16x1xf32> to vector<16x8xf32>
    %88 = arith.addf %86, %87 : vector<16x8xf32>
    %c0_72 = arith.constant 0 : index
    %c0_73 = arith.constant 0 : index
    %89 = vector.load %arg8[%c0_72, %c0_73] : memref<8x8xf32, #tpu.memory_space<vmem>>, vector<8x8xf32>
    %cst_74 = arith.constant dense<0.000000e+00> : vector<16x8xf32>
    %90 = tpu.matmul %88, %89, %cst_74 {dimension_numbers = #tpu.dot_dimension_numbers<[1], [0], [0], [1], [0, 0, 1, 1], [], []>} : vector<16x8xf32>, vector<8x8xf32>, vector<16x8xf32> -> vector<16x8xf32>
    %91 = arith.mulf %88, %88 : vector<16x8xf32>
    %cst_75 = arith.constant dense<0.000000e+00> : vector<16x8xf32>
    %92 = tpu.matmul %91, %89, %cst_75 {dimension_numbers = #tpu.dot_dimension_numbers<[1], [0], [0], [1], [0, 0, 1, 1], [], []>} : vector<16x8xf32>, vector<8x8xf32>, vector<16x8xf32> -> vector<16x8xf32>
    %93 = arith.mulf %90, %90 : vector<16x8xf32>
    %94 = arith.subf %92, %93 : vector<16x8xf32>
    %95 = arith.subf %88, %90 : vector<16x8xf32>
    %cst_76 = arith.constant 0.000000e+00 : f32
    %96 = vector.broadcast %cst_76 : f32 to vector<16x8xf32>
    %97 = arith.maximumf %94, %96 : vector<16x8xf32>
    %cst_77 = arith.constant 9.99999974E-6 : f32
    %98 = vector.broadcast %cst_77 : f32 to vector<16x8xf32>
    %99 = arith.addf %97, %98 : vector<16x8xf32>
    %100 = math.rsqrt %99 : vector<16x8xf32>
    %101 = arith.mulf %95, %100 : vector<16x8xf32>
    %cst_78 = arith.constant 0.000000e+00 : f32
    %102 = vector.broadcast %cst_78 : f32 to vector<16x8xf32>
    %103 = arith.cmpf ogt, %101, %102 : vector<16x8xf32>
    %cst_79 = arith.constant 2.000000e-01 : f32
    %104 = vector.broadcast %cst_79 : f32 to vector<16x8xf32>
    %105 = arith.mulf %104, %101 : vector<16x8xf32>
    %106 = arith.select %103, %101, %105 : vector<16x8xi1>, vector<16x8xf32>
    %c0_80 = arith.constant 0 : index
    %c0_81 = arith.constant 0 : index
    %107 = vector.load %arg12[%c0_80, %c0_81] : memref<8x1xf32, #tpu.memory_space<vmem>>, vector<8x1xf32>
    %c0_82 = arith.constant 0 : index
    %c0_83 = arith.constant 0 : index
    %c0_84 = arith.constant 0 : index
    %108 = vector.load %arg11[%c0_82, %c0_83, %c0_84] : memref<1x8x16xf32, #tpu.memory_space<vmem>>, vector<1x8x16xf32>
    %109 = vector.shape_cast %108 : vector<1x8x16xf32> to vector<8x16xf32>
    %cst_85 = arith.constant dense<0.000000e+00> : vector<8x8xf32>
    %110 = tpu.matmul %109, %106, %cst_85 {dimension_numbers = #tpu.dot_dimension_numbers<[1], [0], [0], [1], [0, 0, 1, 1], [], []>} : vector<8x16xf32>, vector<16x8xf32>, vector<8x8xf32> -> vector<8x8xf32>
    %111 = vector.broadcast %107 : vector<8x1xf32> to vector<8x8xf32>
    %112 = arith.addf %110, %111 : vector<8x8xf32>
    %c0_86 = arith.constant 0 : index
    %c0_87 = arith.constant 0 : index
    %113 = vector.load %arg8[%c0_86, %c0_87] : memref<8x8xf32, #tpu.memory_space<vmem>>, vector<8x8xf32>
    %cst_88 = arith.constant dense<0.000000e+00> : vector<8x8xf32>
    %114 = tpu.matmul %112, %113, %cst_88 {dimension_numbers = #tpu.dot_dimension_numbers<[1], [0], [0], [1], [0, 0, 1, 1], [], []>} : vector<8x8xf32>, vector<8x8xf32>, vector<8x8xf32> -> vector<8x8xf32>
    %115 = arith.mulf %112, %112 : vector<8x8xf32>
    %cst_89 = arith.constant dense<0.000000e+00> : vector<8x8xf32>
    %116 = tpu.matmul %115, %113, %cst_89 {dimension_numbers = #tpu.dot_dimension_numbers<[1], [0], [0], [1], [0, 0, 1, 1], [], []>} : vector<8x8xf32>, vector<8x8xf32>, vector<8x8xf32> -> vector<8x8xf32>
    %117 = arith.mulf %114, %114 : vector<8x8xf32>
    %118 = arith.subf %116, %117 : vector<8x8xf32>
    %119 = arith.subf %112, %114 : vector<8x8xf32>
    %cst_90 = arith.constant 0.000000e+00 : f32
    %120 = vector.broadcast %cst_90 : f32 to vector<8x8xf32>
    %121 = arith.maximumf %118, %120 : vector<8x8xf32>
    %cst_91 = arith.constant 9.99999974E-6 : f32
    %122 = vector.broadcast %cst_91 : f32 to vector<8x8xf32>
    %123 = arith.addf %121, %122 : vector<8x8xf32>
    %124 = math.rsqrt %123 : vector<8x8xf32>
    %125 = arith.mulf %119, %124 : vector<8x8xf32>
    %cst_92 = arith.constant 0.000000e+00 : f32
    %126 = vector.broadcast %cst_92 : f32 to vector<8x8xf32>
    %127 = arith.cmpf ogt, %125, %126 : vector<8x8xf32>
    %cst_93 = arith.constant 2.000000e-01 : f32
    %128 = vector.broadcast %cst_93 : f32 to vector<8x8xf32>
    %129 = arith.mulf %128, %125 : vector<8x8xf32>
    %130 = arith.select %127, %125, %129 : vector<8x8xi1>, vector<8x8xf32>
    %c0_94 = arith.constant 0 : index
    %c0_95 = arith.constant 0 : index
    %131 = vector.load %arg14[%c0_94, %c0_95] : memref<8x1xf32, #tpu.memory_space<vmem>>, vector<8x1xf32>
    %c0_96 = arith.constant 0 : index
    %c0_97 = arith.constant 0 : index
    %c0_98 = arith.constant 0 : index
    %132 = vector.load %arg13[%c0_96, %c0_97, %c0_98] : memref<1x8x8xf32, #tpu.memory_space<vmem>>, vector<1x8x8xf32>
    %133 = vector.shape_cast %132 : vector<1x8x8xf32> to vector<8x8xf32>
    %cst_99 = arith.constant dense<0.000000e+00> : vector<8x8xf32>
    %134 = tpu.matmul %133, %130, %cst_99 {dimension_numbers = #tpu.dot_dimension_numbers<[1], [0], [0], [1], [0, 0, 1, 1], [], []>} : vector<8x8xf32>, vector<8x8xf32>, vector<8x8xf32> -> vector<8x8xf32>
    %135 = vector.broadcast %131 : vector<8x1xf32> to vector<8x8xf32>
    %136 = arith.addf %134, %135 : vector<8x8xf32>
    %c0_100 = arith.constant 0 : index
    %c0_101 = arith.constant 0 : index
    %137 = vector.load %arg25[%c0_100, %c0_101] : memref<8x8xf32, #tpu.memory_space<vmem>>, vector<8x8xf32>
    tpu.vector_store %arg25[%c0_100, %c0_101], %136 {strides = array<i32>} : memref<8x8xf32, #tpu.memory_space<vmem>>, vector<8x8xf32>,
    %c0_102 = arith.constant 0 : index
    %c0_103 = arith.constant 0 : index
    %138 = vector.load %arg0[%c0_102, %c0_103] : memref<4x32xf32, #tpu.memory_space<vmem>>, vector<4x32xf32>
    %c0_104 = arith.constant 0 : index
    %c0_105 = arith.constant 0 : index
    %139 = vector.load %arg16[%c0_104, %c0_105] : memref<8x1xf32, #tpu.memory_space<vmem>>, vector<8x1xf32>
    %c0_106 = arith.constant 0 : index
    %c0_107 = arith.constant 0 : index
    %c0_108 = arith.constant 0 : index
    %140 = vector.load %arg15[%c0_106, %c0_107, %c0_108] : memref<3x8x4xf32, #tpu.memory_space<vmem>>, vector<1x8x4xf32>
    %141 = vector.shape_cast %140 : vector<1x8x4xf32> to vector<8x4xf32>
    %c0_109 = arith.constant 0 : index
    %c0_110 = arith.constant 0 : index
    %c0_111 = arith.constant 0 : index
    %142 = vector.load %arg1[%c0_109, %c0_110, %c0_111] : memref<3x32x16xf32, #tpu.memory_space<vmem>>, vector<1x32x16xf32>
    %143 = vector.shape_cast %142 : vector<1x32x16xf32> to vector<32x16xf32>
    %cst_112 = arith.constant dense<0.000000e+00> : vector<4x16xf32>
    %144 = tpu.matmul %138, %143, %cst_112 {dimension_numbers = #tpu.dot_dimension_numbers<[1], [0], [0], [1], [0, 0, 1, 1], [], []>} : vector<4x32xf32>, vector<32x16xf32>, vector<4x16xf32> -> vector<4x16xf32>
    %cst_113 = arith.constant dense<0.000000e+00> : vector<8x16xf32>
    %145 = tpu.matmul %141, %144, %cst_113 {dimension_numbers = #tpu.dot_dimension_numbers<[1], [0], [0], [1], [0, 0, 1, 1], [], []>} : vector<8x4xf32>, vector<4x16xf32>, vector<8x16xf32> -> vector<8x16xf32>
    %146 = vector.broadcast %139 : vector<8x1xf32> to vector<8x16xf32>
    %147 = arith.addf %146, %145 : vector<8x16xf32>
    %c1_114 = arith.constant 1 : index
    %c0_115 = arith.constant 0 : index
    %c0_116 = arith.constant 0 : index
    %148 = vector.load %arg15[%c1_114, %c0_115, %c0_116] : memref<3x8x4xf32, #tpu.memory_space<vmem>>, vector<1x8x4xf32>
    %149 = vector.shape_cast %148 : vector<1x8x4xf32> to vector<8x4xf32>
    %c1_117 = arith.constant 1 : index
    %c0_118 = arith.constant 0 : index
    %c0_119 = arith.constant 0 : index
    %150 = vector.load %arg1[%c1_117, %c0_118, %c0_119] : memref<3x32x16xf32, #tpu.memory_space<vmem>>, vector<1x32x16xf32>
    %151 = vector.shape_cast %150 : vector<1x32x16xf32> to vector<32x16xf32>
    %cst_120 = arith.constant dense<0.000000e+00> : vector<4x16xf32>
    %152 = tpu.matmul %138, %151, %cst_120 {dimension_numbers = #tpu.dot_dimension_numbers<[1], [0], [0], [1], [0, 0, 1, 1], [], []>} : vector<4x32xf32>, vector<32x16xf32>, vector<4x16xf32> -> vector<4x16xf32>
    %cst_121 = arith.constant dense<0.000000e+00> : vector<8x16xf32>
    %153 = tpu.matmul %149, %152, %cst_121 {dimension_numbers = #tpu.dot_dimension_numbers<[1], [0], [0], [1], [0, 0, 1, 1], [], []>} : vector<8x4xf32>, vector<4x16xf32>, vector<8x16xf32> -> vector<8x16xf32>
    %154 = arith.addf %147, %153 : vector<8x16xf32>
    %c2_122 = arith.constant 2 : index
    %c0_123 = arith.constant 0 : index
    %c0_124 = arith.constant 0 : index
    %155 = vector.load %arg15[%c2_122, %c0_123, %c0_124] : memref<3x8x4xf32, #tpu.memory_space<vmem>>, vector<1x8x4xf32>
    %156 = vector.shape_cast %155 : vector<1x8x4xf32> to vector<8x4xf32>
    %c2_125 = arith.constant 2 : index
    %c0_126 = arith.constant 0 : index
    %c0_127 = arith.constant 0 : index
    %157 = vector.load %arg1[%c2_125, %c0_126, %c0_127] : memref<3x32x16xf32, #tpu.memory_space<vmem>>, vector<1x32x16xf32>
    %158 = vector.shape_cast %157 : vector<1x32x16xf32> to vector<32x16xf32>
    %cst_128 = arith.constant dense<0.000000e+00> : vector<4x16xf32>
    %159 = tpu.matmul %138, %158, %cst_128 {dimension_numbers = #tpu.dot_dimension_numbers<[1], [0], [0], [1], [0, 0, 1, 1], [], []>} : vector<4x32xf32>, vector<32x16xf32>, vector<4x16xf32> -> vector<4x16xf32>
    %cst_129 = arith.constant dense<0.000000e+00> : vector<8x16xf32>
    %160 = tpu.matmul %156, %159, %cst_129 {dimension_numbers = #tpu.dot_dimension_numbers<[1], [0], [0], [1], [0, 0, 1, 1], [], []>} : vector<8x4xf32>, vector<4x16xf32>, vector<8x16xf32> -> vector<8x16xf32>
    %161 = arith.addf %154, %160 : vector<8x16xf32>
    %cst_130 = arith.constant 0.000000e+00 : f32
    %162 = vector.broadcast %cst_130 : f32 to vector<8x16xf32>
    %163 = arith.cmpf ogt, %161, %162 : vector<8x16xf32>
    %cst_131 = arith.constant 2.000000e-01 : f32
    %164 = vector.broadcast %cst_131 : f32 to vector<8x16xf32>
    %165 = arith.mulf %164, %161 : vector<8x16xf32>
    %166 = arith.select %163, %161, %165 : vector<8x16xi1>, vector<8x16xf32>
    %c0_132 = arith.constant 0 : index
    %c0_133 = arith.constant 0 : index
    %167 = vector.load %arg18[%c0_132, %c0_133] : memref<16x1xf32, #tpu.memory_space<vmem>>, vector<16x1xf32>
    %c0_134 = arith.constant 0 : index
    %c0_135 = arith.constant 0 : index
    %c0_136 = arith.constant 0 : index
    %168 = vector.load %arg17[%c0_134, %c0_135, %c0_136] : memref<3x16x8xf32, #tpu.memory_space<vmem>>, vector<1x16x8xf32>
    %169 = vector.shape_cast %168 : vector<1x16x8xf32> to vector<16x8xf32>
    %c0_137 = arith.constant 0 : index
    %c0_138 = arith.constant 0 : index
    %c0_139 = arith.constant 0 : index
    %170 = vector.load %arg5[%c0_137, %c0_138, %c0_139] : memref<3x16x8xf32, #tpu.memory_space<vmem>>, vector<1x16x8xf32>
    %171 = vector.shape_cast %170 : vector<1x16x8xf32> to vector<16x8xf32>
    %cst_140 = arith.constant dense<0.000000e+00> : vector<8x8xf32>
    %172 = tpu.matmul %166, %171, %cst_140 {dimension_numbers = #tpu.dot_dimension_numbers<[1], [0], [0], [1], [0, 0, 1, 1], [], []>} : vector<8x16xf32>, vector<16x8xf32>, vector<8x8xf32> -> vector<8x8xf32>
    %cst_141 = arith.constant dense<0.000000e+00> : vector<16x8xf32>
    %173 = tpu.matmul %169, %172, %cst_141 {dimension_numbers = #tpu.dot_dimension_numbers<[1], [0], [0], [1], [0, 0, 1, 1], [], []>} : vector<16x8xf32>, vector<8x8xf32>, vector<16x8xf32> -> vector<16x8xf32>
    %174 = vector.broadcast %167 : vector<16x1xf32> to vector<16x8xf32>
    %175 = arith.addf %174, %173 : vector<16x8xf32>
    %c1_142 = arith.constant 1 : index
    %c0_143 = arith.constant 0 : index
    %c0_144 = arith.constant 0 : index
    %176 = vector.load %arg17[%c1_142, %c0_143, %c0_144] : memref<3x16x8xf32, #tpu.memory_space<vmem>>, vector<1x16x8xf32>
    %177 = vector.shape_cast %176 : vector<1x16x8xf32> to vector<16x8xf32>
    %c1_145 = arith.constant 1 : index
    %c0_146 = arith.constant 0 : index
    %c0_147 = arith.constant 0 : index
    %178 = vector.load %arg5[%c1_145, %c0_146, %c0_147] : memref<3x16x8xf32, #tpu.memory_space<vmem>>, vector<1x16x8xf32>
    %179 = vector.shape_cast %178 : vector<1x16x8xf32> to vector<16x8xf32>
    %cst_148 = arith.constant dense<0.000000e+00> : vector<8x8xf32>
    %180 = tpu.matmul %166, %179, %cst_148 {dimension_numbers = #tpu.dot_dimension_numbers<[1], [0], [0], [1], [0, 0, 1, 1], [], []>} : vector<8x16xf32>, vector<16x8xf32>, vector<8x8xf32> -> vector<8x8xf32>
    %cst_149 = arith.constant dense<0.000000e+00> : vector<16x8xf32>
    %181 = tpu.matmul %177, %180, %cst_149 {dimension_numbers = #tpu.dot_dimension_numbers<[1], [0], [0], [1], [0, 0, 1, 1], [], []>} : vector<16x8xf32>, vector<8x8xf32>, vector<16x8xf32> -> vector<16x8xf32>
    %182 = arith.addf %175, %181 : vector<16x8xf32>
    %c2_150 = arith.constant 2 : index
    %c0_151 = arith.constant 0 : index
    %c0_152 = arith.constant 0 : index
    %183 = vector.load %arg17[%c2_150, %c0_151, %c0_152] : memref<3x16x8xf32, #tpu.memory_space<vmem>>, vector<1x16x8xf32>
    %184 = vector.shape_cast %183 : vector<1x16x8xf32> to vector<16x8xf32>
    %c2_153 = arith.constant 2 : index
    %c0_154 = arith.constant 0 : index
    %c0_155 = arith.constant 0 : index
    %185 = vector.load %arg5[%c2_153, %c0_154, %c0_155] : memref<3x16x8xf32, #tpu.memory_space<vmem>>, vector<1x16x8xf32>
    %186 = vector.shape_cast %185 : vector<1x16x8xf32> to vector<16x8xf32>
    %cst_156 = arith.constant dense<0.000000e+00> : vector<8x8xf32>
    %187 = tpu.matmul %166, %186, %cst_156 {dimension_numbers = #tpu.dot_dimension_numbers<[1], [0], [0], [1], [0, 0, 1, 1], [], []>} : vector<8x16xf32>, vector<16x8xf32>, vector<8x8xf32> -> vector<8x8xf32>
    %cst_157 = arith.constant dense<0.000000e+00> : vector<16x8xf32>
    %188 = tpu.matmul %184, %187, %cst_157 {dimension_numbers = #tpu.dot_dimension_numbers<[1], [0], [0], [1], [0, 0, 1, 1], [], []>} : vector<16x8xf32>, vector<8x8xf32>, vector<16x8xf32> -> vector<16x8xf32>
    %189 = arith.addf %182, %188 : vector<16x8xf32>
    %cst_158 = arith.constant 0.000000e+00 : f32
    %190 = vector.broadcast %cst_158 : f32 to vector<16x8xf32>
    %191 = arith.cmpf ogt, %189, %190 : vector<16x8xf32>
    %cst_159 = arith.constant 2.000000e-01 : f32
    %192 = vector.broadcast %cst_159 : f32 to vector<16x8xf32>
    %193 = arith.mulf %192, %189 : vector<16x8xf32>
    %194 = arith.select %191, %189, %193 : vector<16x8xi1>, vector<16x8xf32>
    %c0_160 = arith.constant 0 : index
    %c0_161 = arith.constant 0 : index
    %195 = vector.load %arg21[%c0_160, %c0_161] : memref<16x1xf32, #tpu.memory_space<vmem>>, vector<16x1xf32>
    %c0_162 = arith.constant 0 : index
    %c0_163 = arith.constant 0 : index
    %c0_164 = arith.constant 0 : index
    %196 = vector.load %arg20[%c0_162, %c0_163, %c0_164] : memref<3x16x16xf32, #tpu.memory_space<vmem>>, vector<1x16x16xf32>
    %197 = vector.shape_cast %196 : vector<1x16x16xf32> to vector<16x16xf32>
    %c0_165 = arith.constant 0 : index
    %c0_166 = arith.constant 0 : index
    %c0_167 = arith.constant 0 : index
    %198 = vector.load %arg19[%c0_165, %c0_166, %c0_167] : memref<3x8x4xf32, #tpu.memory_space<vmem>>, vector<1x8x4xf32>
    %199 = vector.shape_cast %198 : vector<1x8x4xf32> to vector<8x4xf32>
    %cst_168 = arith.constant dense<0.000000e+00> : vector<16x4xf32>
    %200 = tpu.matmul %194, %199, %cst_168 {dimension_numbers = #tpu.dot_dimension_numbers<[1], [0], [0], [1], [0, 0, 1, 1], [], []>} : vector<16x8xf32>, vector<8x4xf32>, vector<16x4xf32> -> vector<16x4xf32>
    %cst_169 = arith.constant dense<0.000000e+00> : vector<16x4xf32>
    %201 = tpu.matmul %197, %200, %cst_169 {dimension_numbers = #tpu.dot_dimension_numbers<[1], [0], [0], [1], [0, 0, 1, 1], [], []>} : vector<16x16xf32>, vector<16x4xf32>, vector<16x4xf32> -> vector<16x4xf32>
    %202 = vector.broadcast %195 : vector<16x1xf32> to vector<16x4xf32>
    %203 = arith.addf %202, %201 : vector<16x4xf32>
    %c1_170 = arith.constant 1 : index
    %c0_171 = arith.constant 0 : index
    %c0_172 = arith.constant 0 : index
    %204 = vector.load %arg20[%c1_170, %c0_171, %c0_172] : memref<3x16x16xf32, #tpu.memory_space<vmem>>, vector<1x16x16xf32>
    %205 = vector.shape_cast %204 : vector<1x16x16xf32> to vector<16x16xf32>
    %c1_173 = arith.constant 1 : index
    %c0_174 = arith.constant 0 : index
    %c0_175 = arith.constant 0 : index
    %206 = vector.load %arg19[%c1_173, %c0_174, %c0_175] : memref<3x8x4xf32, #tpu.memory_space<vmem>>, vector<1x8x4xf32>
    %207 = vector.shape_cast %206 : vector<1x8x4xf32> to vector<8x4xf32>
    %cst_176 = arith.constant dense<0.000000e+00> : vector<16x4xf32>
    %208 = tpu.matmul %194, %207, %cst_176 {dimension_numbers = #tpu.dot_dimension_numbers<[1], [0], [0], [1], [0, 0, 1, 1], [], []>} : vector<16x8xf32>, vector<8x4xf32>, vector<16x4xf32> -> vector<16x4xf32>
    %cst_177 = arith.constant dense<0.000000e+00> : vector<16x4xf32>
    %209 = tpu.matmul %205, %208, %cst_177 {dimension_numbers = #tpu.dot_dimension_numbers<[1], [0], [0], [1], [0, 0, 1, 1], [], []>} : vector<16x16xf32>, vector<16x4xf32>, vector<16x4xf32> -> vector<16x4xf32>
    %210 = arith.addf %203, %209 : vector<16x4xf32>
    %c2_178 = arith.constant 2 : index
    %c0_179 = arith.constant 0 : index
    %c0_180 = arith.constant 0 : index
    %211 = vector.load %arg20[%c2_178, %c0_179, %c0_180] : memref<3x16x16xf32, #tpu.memory_space<vmem>>, vector<1x16x16xf32>
    %212 = vector.shape_cast %211 : vector<1x16x16xf32> to vector<16x16xf32>
    %c2_181 = arith.constant 2 : index
    %c0_182 = arith.constant 0 : index
    %c0_183 = arith.constant 0 : index
    %213 = vector.load %arg19[%c2_181, %c0_182, %c0_183] : memref<3x8x4xf32, #tpu.memory_space<vmem>>, vector<1x8x4xf32>
    %214 = vector.shape_cast %213 : vector<1x8x4xf32> to vector<8x4xf32>
    %cst_184 = arith.constant dense<0.000000e+00> : vector<16x4xf32>
    %215 = tpu.matmul %194, %214, %cst_184 {dimension_numbers = #tpu.dot_dimension_numbers<[1], [0], [0], [1], [0, 0, 1, 1], [], []>} : vector<16x8xf32>, vector<8x4xf32>, vector<16x4xf32> -> vector<16x4xf32>
    %cst_185 = arith.constant dense<0.000000e+00> : vector<16x4xf32>
    %216 = tpu.matmul %212, %215, %cst_185 {dimension_numbers = #tpu.dot_dimension_numbers<[1], [0], [0], [1], [0, 0, 1, 1], [], []>} : vector<16x16xf32>, vector<16x4xf32>, vector<16x4xf32> -> vector<16x4xf32>
    %217 = arith.addf %210, %216 : vector<16x4xf32>
    %cst_186 = arith.constant 0.000000e+00 : f32
    %218 = vector.broadcast %cst_186 : f32 to vector<16x4xf32>
    %219 = arith.cmpf ogt, %217, %218 : vector<16x4xf32>
    %cst_187 = arith.constant 2.000000e-01 : f32
    %220 = vector.broadcast %cst_187 : f32 to vector<16x4xf32>
    %221 = arith.mulf %220, %217 : vector<16x4xf32>
    %222 = arith.select %219, %217, %221 : vector<16x4xi1>, vector<16x4xf32>
    %c0_188 = arith.constant 0 : index
    %c0_189 = arith.constant 0 : index
    %223 = vector.load %arg22[%c0_188, %c0_189] : memref<4x2xf32, #tpu.memory_space<vmem>>, vector<4x2xf32>
    %cst_190 = arith.constant dense<0.000000e+00> : vector<16x2xf32>
    %224 = tpu.matmul %222, %223, %cst_190 {dimension_numbers = #tpu.dot_dimension_numbers<[1], [0], [0], [1], [0, 0, 1, 1], [], []>} : vector<16x4xf32>, vector<4x2xf32>, vector<16x2xf32> -> vector<16x2xf32>
    %c0_191 = arith.constant 0 : index
    %c0_192 = arith.constant 0 : index
    %c0_193 = arith.constant 0 : index
    %225 = vector.load %arg23[%c0_191, %c0_192, %c0_193] : memref<1x32x16xf32, #tpu.memory_space<vmem>>, vector<1x32x16xf32>
    %226 = vector.shape_cast %225 : vector<1x32x16xf32> to vector<32x16xf32>
    %cst_194 = arith.constant dense<0.000000e+00> : vector<32x2xf32>
    %227 = tpu.matmul %226, %224, %cst_194 {dimension_numbers = #tpu.dot_dimension_numbers<[1], [0], [0], [1], [0, 0, 1, 1], [], []>} : vector<32x16xf32>, vector<16x2xf32>, vector<32x2xf32> -> vector<32x2xf32>
    %c0_195 = arith.constant 0 : index
    %c0_196 = arith.constant 0 : index
    %228 = vector.load %arg24[%c0_195, %c0_196] : memref<32x1xf32, #tpu.memory_space<vmem>>, vector<32x1xf32>
    %229 = vector.broadcast %228 : vector<32x1xf32> to vector<32x2xf32>
    %230 = arith.addf %227, %229 : vector<32x2xf32>
    %c0_197 = arith.constant 0 : index
    %c0_198 = arith.constant 0 : index
    %231 = vector.load %arg26[%c0_197, %c0_198] : memref<32x2xf32, #tpu.memory_space<vmem>>, vector<32x2xf32>
    tpu.vector_store %arg26[%c0_197, %c0_198], %230 {strides = array<i32>} : memref<32x2xf32, #tpu.memory_space<vmem>>, vector<32x2xf32>,
    return
  }
}

</mosaic_0001>

<llo_original>
// kernel: style_content_encoder.1
$region0: #{style_content_encoder.1}
  #allocation0 [shape = 'u32[]', space=smem, size = 0x4, offset = 0x4, fixed_abs, tag = 'smem constant byte address 0x4 - core index']
  #allocation1 [shape = 'u32[144,128]{1,0:T(1,128)}', space=vmem, size = 0x12000, scoped, tag = 'internal scratch']
  %s0 = inlined_call_operand.vmem [shape: f32[4,32], index: 0, kind: input, shape index: {}]
  %s1 = inlined_call_operand.vmem [shape: f32[3,32,16], index: 1, kind: input, shape index: {}]
  %s2 = inlined_call_operand.vmem [shape: f32[3,8,4], index: 2, kind: input, shape index: {}]
  %s3 = inlined_call_operand.vmem [shape: f32[8,1], index: 3, kind: input, shape index: {}]
  %s4 = inlined_call_operand.vmem [shape: f32[16,16], index: 4, kind: input, shape index: {}]
  %s5 = inlined_call_operand.vmem [shape: f32[3,16,8], index: 5, kind: input, shape index: {}]
  %s6 = inlined_call_operand.vmem [shape: f32[3,16,8], index: 6, kind: input, shape index: {}]
  %s7 = inlined_call_operand.vmem [shape: f32[16,1], index: 7, kind: input, shape index: {}]
  %s8 = inlined_call_operand.vmem [shape: f32[8,8], index: 8, kind: input, shape index: {}]
  %s9 = inlined_call_operand.vmem [shape: f32[1,16,16], index: 9, kind: input, shape index: {}]
  %s10 = inlined_call_operand.vmem [shape: f32[16,1], index: 10, kind: input, shape index: {}]
  %s11 = inlined_call_operand.vmem [shape: f32[1,8,16], index: 11, kind: input, shape index: {}]
  %s12 = inlined_call_operand.vmem [shape: f32[8,1], index: 12, kind: input, shape index: {}]
  %s13 = inlined_call_operand.vmem [shape: f32[1,8,8], index: 13, kind: input, shape index: {}]
  %s14 = inlined_call_operand.vmem [shape: f32[8,1], index: 14, kind: input, shape index: {}]
  %s15 = inlined_call_operand.vmem [shape: f32[3,8,4], index: 15, kind: input, shape index: {}]
  %s16 = inlined_call_operand.vmem [shape: f32[8,1], index: 16, kind: input, shape index: {}]
  %s17 = inlined_call_operand.vmem [shape: f32[3,16,8], index: 17, kind: input, shape index: {}]
  %s18 = inlined_call_operand.vmem [shape: f32[16,1], index: 18, kind: input, shape index: {}]
  %s19 = inlined_call_operand.vmem [shape: f32[3,8,4], index: 19, kind: input, shape index: {}]
  %s20 = inlined_call_operand.vmem [shape: f32[3,16,16], index: 20, kind: input, shape index: {}]
  %s21 = inlined_call_operand.vmem [shape: f32[16,1], index: 21, kind: input, shape index: {}]
  %s22 = inlined_call_operand.vmem [shape: f32[4,2], index: 22, kind: input, shape index: {}]
  %s23 = inlined_call_operand.vmem [shape: f32[1,32,16], index: 23, kind: input, shape index: {}]
  %s24 = inlined_call_operand.vmem [shape: f32[32,1], index: 24, kind: input, shape index: {}]
  %s25 = inlined_call_operand.vmem [shape: f32[8,8], index: 25, kind: output, shape index: {0}]
  %s26 = inlined_call_operand.vmem [shape: f32[32,2], index: 26, kind: output, shape index: {1}]
  %27 = xla_tuple %s25, %s26
  %s28 = sld [smem:[#allocation0]]
  $region118: #{style_content_encoder.1} parent=0
    _
  %s30 = ssub.s32 1, %s28
  %s31 = scalar_select 0, %s30, %s28
  // Predicated region
  $region2: #{style_content_encoder.1} parent=0 // pred_check
    _
  $region3: #{style_content_encoder.1} parent=0 // pred_check_branch
    %33 = sbr.rel (0) target = $region5
  $region4: #{style_content_encoder.1} parent=0 // pred_region
    _
  $region5: #{style_content_encoder.1} parent=0 // pred_fallthru
    _
  // Predicated region
  $region6: #{style_content_encoder.1} parent=0 // pred_check
    _
  $region7: #{style_content_encoder.1} parent=0 // pred_check_branch
    %35 = sbr.rel (0) target = $region9
  $region8: #{style_content_encoder.1} parent=0 // pred_region
    _
  $region9: #{style_content_encoder.1} parent=0 // pred_fallthru
    _
  // Predicated region
  $region10: #{style_content_encoder.1} parent=0 // pred_check
    _
  $region11: #{style_content_encoder.1} parent=0 // pred_check_branch
    %37 = sbr.rel (0) target = $region13
  $region12: #{style_content_encoder.1} parent=0 // pred_region
    _
  $region13: #{style_content_encoder.1} parent=0 // pred_fallthru
    _
  // Predicated region
  $region14: #{style_content_encoder.1} parent=0 // pred_check
    _
  $region15: #{style_content_encoder.1} parent=0 // pred_check_branch
    %39 = sbr.rel (0) target = $region17
  $region16: #{style_content_encoder.1} parent=0 // pred_region
    _
  $region17: #{style_content_encoder.1} parent=0 // pred_fallthru
    _
  // Predicated region
  $region18: #{style_content_encoder.1} parent=0 // pred_check
    _
  $region19: #{style_content_encoder.1} parent=0 // pred_check_branch
    %41 = sbr.rel (0) target = $region21
  $region20: #{style_content_encoder.1} parent=0 // pred_region
    _
  $region21: #{style_content_encoder.1} parent=0 // pred_fallthru
    _
  // Predicated region
  $region22: #{style_content_encoder.1} parent=0 // pred_check
    _
  $region23: #{style_content_encoder.1} parent=0 // pred_check_branch
    %43 = sbr.rel (0) target = $region25
  $region24: #{style_content_encoder.1} parent=0 // pred_region
    _
  $region25: #{style_content_encoder.1} parent=0 // pred_fallthru
    _
  // Predicated region
  $region26: #{style_content_encoder.1} parent=0 // pred_check
    _
  $region27: #{style_content_encoder.1} parent=0 // pred_check_branch
    %45 = sbr.rel (0) target = $region29
  $region28: #{style_content_encoder.1} parent=0 // pred_region
    _
  $region29: #{style_content_encoder.1} parent=0 // pred_fallthru
    _
  // Predicated region
  $region30: #{style_content_encoder.1} parent=0 // pred_check
    _
  $region31: #{style_content_encoder.1} parent=0 // pred_check_branch
    %47 = sbr.rel (0) target = $region33
  $region32: #{style_content_encoder.1} parent=0 // pred_region
    _
  $region33: #{style_content_encoder.1} parent=0 // pred_fallthru
    _
  // Predicated region
  $region34: #{style_content_encoder.1} parent=0 // pred_check
    _
  $region35: #{style_content_encoder.1} parent=0 // pred_check_branch
    %49 = sbr.rel (0) target = $region37
  $region36: #{style_content_encoder.1} parent=0 // pred_region
    _
  $region37: #{style_content_encoder.1} parent=0 // pred_fallthru
    _
  // Predicated region
  $region38: #{style_content_encoder.1} parent=0 // pred_check
    _
  $region39: #{style_content_encoder.1} parent=0 // pred_check_branch
    %51 = sbr.rel (0) target = $region41
  $region40: #{style_content_encoder.1} parent=0 // pred_region
    _
  $region41: #{style_content_encoder.1} parent=0 // pred_fallthru
    _
  // Predicated region
  $region42: #{style_content_encoder.1} parent=0 // pred_check
    _
  $region43: #{style_content_encoder.1} parent=0 // pred_check_branch
    %53 = sbr.rel (0) target = $region45
  $region44: #{style_content_encoder.1} parent=0 // pred_region
    _
  $region45: #{style_content_encoder.1} parent=0 // pred_fallthru
    _
  // Predicated region
  $region46: #{style_content_encoder.1} parent=0 // pred_check
    _
  $region47: #{style_content_encoder.1} parent=0 // pred_check_branch
    %55 = sbr.rel (0) target = $region49
  $region48: #{style_content_encoder.1} parent=0 // pred_region
    _
  $region49: #{style_content_encoder.1} parent=0 // pred_fallthru
    _
  // Predicated region
  $region50: #{style_content_encoder.1} parent=0 // pred_check
    _
  $region51: #{style_content_encoder.1} parent=0 // pred_check_branch
    %57 = sbr.rel (0) target = $region53
  $region52: #{style_content_encoder.1} parent=0 // pred_region
    _
  $region53: #{style_content_encoder.1} parent=0 // pred_fallthru
    _
  // Predicated region
  $region54: #{style_content_encoder.1} parent=0 // pred_check
    _
  $region55: #{style_content_encoder.1} parent=0 // pred_check_branch
    %59 = sbr.rel (0) target = $region57
  $region56: #{style_content_encoder.1} parent=0 // pred_region
    _
  $region57: #{style_content_encoder.1} parent=0 // pred_fallthru
    _
  // Predicated region
  $region58: #{style_content_encoder.1} parent=0 // pred_check
    _
  $region59: #{style_content_encoder.1} parent=0 // pred_check_branch
    %61 = sbr.rel (0) target = $region61
  $region60: #{style_content_encoder.1} parent=0 // pred_region
    _
  $region61: #{style_content_encoder.1} parent=0 // pred_fallthru
    _
  // Predicated region
  $region62: #{style_content_encoder.1} parent=0 // pred_check
    _
  $region63: #{style_content_encoder.1} parent=0 // pred_check_branch
    %63 = sbr.rel (0) target = $region65
  $region64: #{style_content_encoder.1} parent=0 // pred_region
    _
  $region65: #{style_content_encoder.1} parent=0 // pred_fallthru
    _
  // Predicated region
  $region66: #{style_content_encoder.1} parent=0 // pred_check
    _
  $region67: #{style_content_encoder.1} parent=0 // pred_check_branch
    %65 = sbr.rel (0) target = $region69
  $region68: #{style_content_encoder.1} parent=0 // pred_region
    _
  $region69: #{style_content_encoder.1} parent=0 // pred_fallthru
    _
  // Predicated region
  $region70: #{style_content_encoder.1} parent=0 // pred_check
    _
  $region71: #{style_content_encoder.1} parent=0 // pred_check_branch
    %67 = sbr.rel (0) target = $region73
  $region72: #{style_content_encoder.1} parent=0 // pred_region
    _
  $region73: #{style_content_encoder.1} parent=0 // pred_fallthru
    _
  // Predicated region
  $region74: #{style_content_encoder.1} parent=0 // pred_check
    _
  $region75: #{style_content_encoder.1} parent=0 // pred_check_branch
    %69 = sbr.rel (0) target = $region77
  $region76: #{style_content_encoder.1} parent=0 // pred_region
    _
  $region77: #{style_content_encoder.1} parent=0 // pred_fallthru
    _
  // Predicated region
  $region78: #{style_content_encoder.1} parent=0 // pred_check
    _
  $region79: #{style_content_encoder.1} parent=0 // pred_check_branch
    %71 = sbr.rel (0) target = $region81
  $region80: #{style_content_encoder.1} parent=0 // pred_region
    _
  $region81: #{style_content_encoder.1} parent=0 // pred_fallthru
    _
  // Predicated region
  $region82: #{style_content_encoder.1} parent=0 // pred_check
    _
  $region83: #{style_content_encoder.1} parent=0 // pred_check_branch
    %73 = sbr.rel (0) target = $region85
  $region84: #{style_content_encoder.1} parent=0 // pred_region
    _
  $region85: #{style_content_encoder.1} parent=0 // pred_fallthru
    _
  // Predicated region
  $region86: #{style_content_encoder.1} parent=0 // pred_check
    _
  $region87: #{style_content_encoder.1} parent=0 // pred_check_branch
    %75 = sbr.rel (0) target = $region89
  $region88: #{style_content_encoder.1} parent=0 // pred_region
    _
  $region89: #{style_content_encoder.1} parent=0 // pred_fallthru
    _
  // Predicated region
  $region90: #{style_content_encoder.1} parent=0 // pred_check
    _
  $region91: #{style_content_encoder.1} parent=0 // pred_check_branch
    %77 = sbr.rel (0) target = $region93
  $region92: #{style_content_encoder.1} parent=0 // pred_region
    _
  $region93: #{style_content_encoder.1} parent=0 // pred_fallthru
    _
  // Predicated region
  $region94: #{style_content_encoder.1} parent=0 // pred_check
    _
  $region95: #{style_content_encoder.1} parent=0 // pred_check_branch
    %79 = sbr.rel (0) target = $region97
  $region96: #{style_content_encoder.1} parent=0 // pred_region
    _
  $region97: #{style_content_encoder.1} parent=0 // pred_fallthru
    _
  // Predicated region
  $region98: #{style_content_encoder.1} parent=0 // pred_check
    _
  $region99: #{style_content_encoder.1} parent=0 // pred_check_branch
    %81 = sbr.rel (0) target = $region101
  $region100: #{style_content_encoder.1} parent=0 // pred_region
    _
  $region101: #{style_content_encoder.1} parent=0 // pred_fallthru
    _
  %v82 = vld [vmem:[%s0] sm:$0xf]
  %v83 = vld [vmem:[%s3] sm:$0xff]
  %v84 = vld [vmem:[%s2] sm:$0xff]
  %v85 = vld [vmem:[%s1] sm:$0xff]
  %v86 = vld [vmem:[%s1 + $0x8] sm:$0xff]
  %v87 = vld [vmem:[%s1 + $0x10] sm:$0xff]
  %v88 = vld [vmem:[%s1 + $0x18] sm:$0xff]
  %vm89 = vcmask 261120
  %v91 = vsel %vm89, %v82, 0
  %93 = vmatprep.subr.mxu0 0.0
  %94 = vmatpush1.msra.mxu0 0.0
  %95 = vmatprep.subr.mxu0 0.0
  %96 = vmatpush1.msra.mxu0 0.0
  %97 = vmatprep.subr.mxu0 0.0
  %98 = vmatpush1.msra.mxu0 0.0
  %99 = vmatprep.subr.mxu0 0.0
  %100 = vmatpush1.msra.mxu0 0.0
  %101 = vmatprep.subr.mxu0 0.0
  %102 = vmatpush1.msra.mxu0 0.0
  %103 = vmatprep.subr.mxu0 0.0
  %104 = vmatpush1.msra.mxu0 0.0
  %105 = vmatprep.subr.mxu0 0.0
  %106 = vmatpush1.msra.mxu0 0.0
  %107 = vmatprep.subr.mxu0 0.0
  %108 = vmatpush1.msra.mxu0 0.0
  %109 = vmatprep.subr.mxu0 0.0
  %110 = vmatpush1.msra.mxu0 0.0
  %111 = vmatprep.subr.mxu0 0.0
  %112 = vmatpush1.msra.mxu0 0.0
  %113 = vmatprep.subr.mxu0 0.0
  %114 = vmatpush1.msra.mxu0 0.0
  %115 = vmatprep.subr.mxu0 0.0
  %116 = vmatpush1.msra.mxu0 0.0
  %117 = vmatprep.subr.mxu0 0.0
  %118 = vmatpush1.msra.mxu0 %v88
  %119 = vmatprep.subr.mxu0 0.0
  %120 = vmatpush1.msra.mxu0 %v87
  %121 = vmatprep.subr.mxu0 0.0
  %122 = vmatpush1.msra.mxu0 %v86
  %123 = vmatprep.subr.mxu0 0.0
  %124 = vmatpush1.msra.mxu0 %v85
  %125 = vmatprep.subr.mxu0 0.0
  %126 = vmatpush2.msra.mxu0 0.0
  %127 = vmatprep.subr.mxu0 0.0
  %128 = vmatpush2.msra.mxu0 0.0
  %129 = vmatprep.subr.mxu0 0.0
  %130 = vmatpush2.msra.mxu0 0.0
  %131 = vmatprep.subr.mxu0 0.0
  %132 = vmatpush2.msra.mxu0 0.0
  %133 = vmatprep.subr.mxu0 0.0
  %134 = vmatpush2.msra.mxu0 0.0
  %135 = vmatprep.subr.mxu0 0.0
  %136 = vmatpush2.msra.mxu0 0.0
  %137 = vmatprep.subr.mxu0 0.0
  %138 = vmatpush2.msra.mxu0 0.0
  %139 = vmatprep.subr.mxu0 0.0
  %140 = vmatpush2.msra.mxu0 0.0
  %141 = vmatprep.subr.mxu0 0.0
  %142 = vmatpush2.msra.mxu0 0.0
  %143 = vmatprep.subr.mxu0 0.0
  %144 = vmatpush2.msra.mxu0 0.0
  %145 = vmatprep.subr.mxu0 0.0
  %146 = vmatpush2.msra.mxu0 0.0
  %147 = vmatprep.subr.mxu0 0.0
  %148 = vmatpush2.msra.mxu0 0.0
  %149 = vmatprep.subr.mxu0 0.0
  %150 = vmatpush2.msra.mxu0 0.0
  %151 = vmatprep.subr.mxu0 0.0
  %152 = vmatpush2.msra.mxu0 0.0
  %153 = vmatprep.subr.mxu0 0.0
  %154 = vmatpush2.msra.mxu0 0.0
  %155 = vmatprep.subr.mxu0 0.0
  %156 = vmatpush2.msra.mxu0 0.0
  %157 = vmatprep.mubr.f32.mxu0 0.0
  %158 = vmatmul.mubr.f32.gmra.mxu0 %v91
  %v159 = vpop.f32.mrf.mxu0
  %v160 = vadd.f32 0.0, %v159
  %v161 = vpop.f32.mrf.mxu0
  %162 = vdwg.mxu0
  %vm163 = vcmask 31744
  %v165 = vsel %vm163, %v84, 0
  %vm167 = vcmask 1043456
  %v169 = vsel %vm167, %v160, 0
  %171 = vmatprep.subr.mxu0 0.0
  %172 = vmatpush1.msra.mxu0 0.0
  %173 = vmatprep.subr.mxu0 0.0
  %174 = vmatpush1.msra.mxu0 0.0
  %175 = vmatprep.subr.mxu0 0.0
  %176 = vmatpush1.msra.mxu0 0.0
  %177 = vmatprep.subr.mxu0 0.0
  %178 = vmatpush1.msra.mxu0 0.0
  %179 = vmatprep.subr.mxu0 0.0
  %180 = vmatpush1.msra.mxu0 0.0
  %181 = vmatprep.subr.mxu0 0.0
  %182 = vmatpush1.msra.mxu0 0.0
  %183 = vmatprep.subr.mxu0 0.0
  %184 = vmatpush1.msra.mxu0 0.0
  %185 = vmatprep.subr.mxu0 0.0
  %186 = vmatpush1.msra.mxu0 0.0
  %187 = vmatprep.subr.mxu0 0.0
  %188 = vmatpush1.msra.mxu0 0.0
  %189 = vmatprep.subr.mxu0 0.0
  %190 = vmatpush1.msra.mxu0 0.0
  %191 = vmatprep.subr.mxu0 0.0
  %192 = vmatpush1.msra.mxu0 0.0
  %193 = vmatprep.subr.mxu0 0.0
  %194 = vmatpush1.msra.mxu0 0.0
  %195 = vmatprep.subr.mxu0 0.0
  %196 = vmatpush1.msra.mxu0 0.0
  %197 = vmatprep.subr.mxu0 0.0
  %198 = vmatpush1.msra.mxu0 0.0
  %199 = vmatprep.subr.mxu0 0.0
  %200 = vmatpush1.msra.mxu0 0.0
  %201 = vmatprep.subr.mxu0 0.0
  %202 = vmatpush1.msra.mxu0 %v169
  %203 = vmatprep.subr.mxu0 0.0
  %204 = vmatpush2.msra.mxu0 0.0
  %205 = vmatprep.subr.mxu0 0.0
  %206 = vmatpush2.msra.mxu0 0.0
  %207 = vmatprep.subr.mxu0 0.0
  %208 = vmatpush2.msra.mxu0 0.0
  %209 = vmatprep.subr.mxu0 0.0
  %210 = vmatpush2.msra.mxu0 0.0
  %211 = vmatprep.subr.mxu0 0.0
  %212 = vmatpush2.msra.mxu0 0.0
  %213 = vmatprep.subr.mxu0 0.0
  %214 = vmatpush2.msra.mxu0 0.0
  %215 = vmatprep.subr.mxu0 0.0
  %216 = vmatpush2.msra.mxu0 0.0
  %217 = vmatprep.subr.mxu0 0.0
  %218 = vmatpush2.msra.mxu0 0.0
  %219 = vmatprep.subr.mxu0 0.0
  %220 = vmatpush2.msra.mxu0 0.0
  %221 = vmatprep.subr.mxu0 0.0
  %222 = vmatpush2.msra.mxu0 0.0
  %223 = vmatprep.subr.mxu0 0.0
  %224 = vmatpush2.msra.mxu0 0.0
  %225 = vmatprep.subr.mxu0 0.0
  %226 = vmatpush2.msra.mxu0 0.0
  %227 = vmatprep.subr.mxu0 0.0
  %228 = vmatpush2.msra.mxu0 0.0
  %229 = vmatprep.subr.mxu0 0.0
  %230 = vmatpush2.msra.mxu0 0.0
  %231 = vmatprep.subr.mxu0 0.0
  %232 = vmatpush2.msra.mxu0 0.0
  %233 = vmatprep.subr.mxu0 0.0
  %234 = vmatpush2.msra.mxu0 0.0
  %235 = vmatprep.mubr.f32.mxu0 0.0
  %236 = vmatmul.mubr.f32.gmra.mxu0 %v165
  %v237 = vpop.f32.mrf.mxu0
  %v238 = vadd.f32 0.0, %v237
  %v239 = vpop.f32.mrf.mxu0
  %240 = vdwg.mxu0
  %242 = vset.pattern.permute.xlu0 0
  %243 = vperm.xlu0 %242, %v83
  %v244 = vpop.permute.xlu0 %243
  %v246 = vadd.f32 %v244, %v238
  %s247 = scalar_lea.vmem %s2, 8
  %v248 = vld [vmem:[%s247] sm:$0xff]
  %s249 = scalar_lea.vmem %s1, 32
  %v250 = vld [vmem:[%s249] sm:$0xff]
  %v251 = vld [vmem:[%s249 + $0x8] sm:$0xff]
  %v252 = vld [vmem:[%s249 + $0x10] sm:$0xff]
  %v253 = vld [vmem:[%s249 + $0x18] sm:$0xff]
  %254 = vmatprep.subr.mxu0 0.0
  %255 = vmatpush1.msra.mxu0 0.0
  %256 = vmatprep.subr.mxu0 0.0
  %257 = vmatpush1.msra.mxu0 0.0
  %258 = vmatprep.subr.mxu0 0.0
  %259 = vmatpush1.msra.mxu0 0.0
  %260 = vmatprep.subr.mxu0 0.0
  %261 = vmatpush1.msra.mxu0 0.0
  %262 = vmatprep.subr.mxu0 0.0
  %263 = vmatpush1.msra.mxu0 0.0
  %264 = vmatprep.subr.mxu0 0.0
  %265 = vmatpush1.msra.mxu0 0.0
  %266 = vmatprep.subr.mxu0 0.0
  %267 = vmatpush1.msra.mxu0 0.0
  %268 = vmatprep.subr.mxu0 0.0
  %269 = vmatpush1.msra.mxu0 0.0
  %270 = vmatprep.subr.mxu0 0.0
  %271 = vmatpush1.msra.mxu0 0.0
  %272 = vmatprep.subr.mxu0 0.0
  %273 = vmatpush1.msra.mxu0 0.0
  %274 = vmatprep.subr.mxu0 0.0
  %275 = vmatpush1.msra.mxu0 0.0
  %276 = vmatprep.subr.mxu0 0.0
  %277 = vmatpush1.msra.mxu0 0.0
  %278 = vmatprep.subr.mxu0 0.0
  %279 = vmatpush1.msra.mxu0 %v253
  %280 = vmatprep.subr.mxu0 0.0
  %281 = vmatpush1.msra.mxu0 %v252
  %282 = vmatprep.subr.mxu0 0.0
  %283 = vmatpush1.msra.mxu0 %v251
  %284 = vmatprep.subr.mxu0 0.0
  %285 = vmatpush1.msra.mxu0 %v250
  %286 = vmatprep.subr.mxu0 0.0
  %287 = vmatpush2.msra.mxu0 0.0
  %288 = vmatprep.subr.mxu0 0.0
  %289 = vmatpush2.msra.mxu0 0.0
  %290 = vmatprep.subr.mxu0 0.0
  %291 = vmatpush2.msra.mxu0 0.0
  %292 = vmatprep.subr.mxu0 0.0
  %293 = vmatpush2.msra.mxu0 0.0
  %294 = vmatprep.subr.mxu0 0.0
  %295 = vmatpush2.msra.mxu0 0.0
  %296 = vmatprep.subr.mxu0 0.0
  %297 = vmatpush2.msra.mxu0 0.0
  %298 = vmatprep.subr.mxu0 0.0
  %299 = vmatpush2.msra.mxu0 0.0
  %300 = vmatprep.subr.mxu0 0.0
  %301 = vmatpush2.msra.mxu0 0.0
  %302 = vmatprep.subr.mxu0 0.0
  %303 = vmatpush2.msra.mxu0 0.0
  %304 = vmatprep.subr.mxu0 0.0
  %305 = vmatpush2.msra.mxu0 0.0
  %306 = vmatprep.subr.mxu0 0.0
  %307 = vmatpush2.msra.mxu0 0.0
  %308 = vmatprep.subr.mxu0 0.0
  %309 = vmatpush2.msra.mxu0 0.0
  %310 = vmatprep.subr.mxu0 0.0
  %311 = vmatpush2.msra.mxu0 0.0
  %312 = vmatprep.subr.mxu0 0.0
  %313 = vmatpush2.msra.mxu0 0.0
  %314 = vmatprep.subr.mxu0 0.0
  %315 = vmatpush2.msra.mxu0 0.0
  %316 = vmatprep.subr.mxu0 0.0
  %317 = vmatpush2.msra.mxu0 0.0
  %318 = vmatprep.mubr.f32.mxu0 0.0
  %319 = vmatmul.mubr.f32.gmra.mxu0 %v91
  %v320 = vpop.f32.mrf.mxu0
  %v321 = vadd.f32 0.0, %v320
  %v322 = vpop.f32.mrf.mxu0
  %323 = vdwg.mxu0
  %v325 = vsel %vm163, %v248, 0
  %v328 = vsel %vm167, %v321, 0
  %330 = vmatprep.subr.mxu0 0.0
  %331 = vmatpush1.msra.mxu0 0.0
  %332 = vmatprep.subr.mxu0 0.0
  %333 = vmatpush1.msra.mxu0 0.0
  %334 = vmatprep.subr.mxu0 0.0
  %335 = vmatpush1.msra.mxu0 0.0
  %336 = vmatprep.subr.mxu0 0.0
  %337 = vmatpush1.msra.mxu0 0.0
  %338 = vmatprep.subr.mxu0 0.0
  %339 = vmatpush1.msra.mxu0 0.0
  %340 = vmatprep.subr.mxu0 0.0
  %341 = vmatpush1.msra.mxu0 0.0
  %342 = vmatprep.subr.mxu0 0.0
  %343 = vmatpush1.msra.mxu0 0.0
  %344 = vmatprep.subr.mxu0 0.0
  %345 = vmatpush1.msra.mxu0 0.0
  %346 = vmatprep.subr.mxu0 0.0
  %347 = vmatpush1.msra.mxu0 0.0
  %348 = vmatprep.subr.mxu0 0.0
  %349 = vmatpush1.msra.mxu0 0.0
  %350 = vmatprep.subr.mxu0 0.0
  %351 = vmatpush1.msra.mxu0 0.0
  %352 = vmatprep.subr.mxu0 0.0
  %353 = vmatpush1.msra.mxu0 0.0
  %354 = vmatprep.subr.mxu0 0.0
  %355 = vmatpush1.msra.mxu0 0.0
  %356 = vmatprep.subr.mxu0 0.0
  %357 = vmatpush1.msra.mxu0 0.0
  %358 = vmatprep.subr.mxu0 0.0
  %359 = vmatpush1.msra.mxu0 0.0
  %360 = vmatprep.subr.mxu0 0.0
  %361 = vmatpush1.msra.mxu0 %v328
  %362 = vmatprep.subr.mxu0 0.0
  %363 = vmatpush2.msra.mxu0 0.0
  %364 = vmatprep.subr.mxu0 0.0
  %365 = vmatpush2.msra.mxu0 0.0
  %366 = vmatprep.subr.mxu0 0.0
  %367 = vmatpush2.msra.mxu0 0.0
  %368 = vmatprep.subr.mxu0 0.0
  %369 = vmatpush2.msra.mxu0 0.0
  %370 = vmatprep.subr.mxu0 0.0
  %371 = vmatpush2.msra.mxu0 0.0
  %372 = vmatprep.subr.mxu0 0.0
  %373 = vmatpush2.msra.mxu0 0.0
  %374 = vmatprep.subr.mxu0 0.0
  %375 = vmatpush2.msra.mxu0 0.0
  %376 = vmatprep.subr.mxu0 0.0
  %377 = vmatpush2.msra.mxu0 0.0
  %378 = vmatprep.subr.mxu0 0.0
  %379 = vmatpush2.msra.mxu0 0.0
  %380 = vmatprep.subr.mxu0 0.0
  %381 = vmatpush2.msra.mxu0 0.0
  %382 = vmatprep.subr.mxu0 0.0
  %383 = vmatpush2.msra.mxu0 0.0
  %384 = vmatprep.subr.mxu0 0.0
  %385 = vmatpush2.msra.mxu0 0.0
  %386 = vmatprep.subr.mxu0 0.0
  %387 = vmatpush2.msra.mxu0 0.0
  %388 = vmatprep.subr.mxu0 0.0
  %389 = vmatpush2.msra.mxu0 0.0
  %390 = vmatprep.subr.mxu0 0.0
  %391 = vmatpush2.msra.mxu0 0.0
  %392 = vmatprep.subr.mxu0 0.0
  %393 = vmatpush2.msra.mxu0 0.0
  %394 = vmatprep.mubr.f32.mxu0 0.0
  %395 = vmatmul.mubr.f32.gmra.mxu0 %v325
  %v396 = vpop.f32.mrf.mxu0
  %v397 = vadd.f32 0.0, %v396
  %v398 = vpop.f32.mrf.mxu0
  %399 = vdwg.mxu0
  %v400 = vadd.f32 %v246, %v397
  %s401 = scalar_lea.vmem %s2, 16
  %v402 = vld [vmem:[%s401] sm:$0xff]
  %s403 = scalar_lea.vmem %s1, 64
  %v404 = vld [vmem:[%s403] sm:$0xff]
  %v405 = vld [vmem:[%s403 + $0x8] sm:$0xff]
  %v406 = vld [vmem:[%s403 + $0x10] sm:$0xff]
  %v407 = vld [vmem:[%s403 + $0x18] sm:$0xff]
  %408 = vmatprep.subr.mxu0 0.0
  %409 = vmatpush1.msra.mxu0 0.0
  %410 = vmatprep.subr.mxu0 0.0
  %411 = vmatpush1.msra.mxu0 0.0
  %412 = vmatprep.subr.mxu0 0.0
  %413 = vmatpush1.msra.mxu0 0.0
  %414 = vmatprep.subr.mxu0 0.0
  %415 = vmatpush1.msra.mxu0 0.0
  %416 = vmatprep.subr.mxu0 0.0
  %417 = vmatpush1.msra.mxu0 0.0
  %418 = vmatprep.subr.mxu0 0.0
  %419 = vmatpush1.msra.mxu0 0.0
  %420 = vmatprep.subr.mxu0 0.0
  %421 = vmatpush1.msra.mxu0 0.0
  %422 = vmatprep.subr.mxu0 0.0
  %423 = vmatpush1.msra.mxu0 0.0
  %424 = vmatprep.subr.mxu0 0.0
  %425 = vmatpush1.msra.mxu0 0.0
  %426 = vmatprep.subr.mxu0 0.0
  %427 = vmatpush1.msra.mxu0 0.0
  %428 = vmatprep.subr.mxu0 0.0
  %429 = vmatpush1.msra.mxu0 0.0
  %430 = vmatprep.subr.mxu0 0.0
  %431 = vmatpush1.msra.mxu0 0.0
  %432 = vmatprep.subr.mxu0 0.0
  %433 = vmatpush1.msra.mxu0 %v407
  %434 = vmatprep.subr.mxu0 0.0
  %435 = vmatpush1.msra.mxu0 %v406
  %436 = vmatprep.subr.mxu0 0.0
  %437 = vmatpush1.msra.mxu0 %v405
  %438 = vmatprep.subr.mxu0 0.0
  %439 = vmatpush1.msra.mxu0 %v404
  %440 = vmatprep.subr.mxu0 0.0
  %441 = vmatpush2.msra.mxu0 0.0
  %442 = vmatprep.subr.mxu0 0.0
  %443 = vmatpush2.msra.mxu0 0.0
  %444 = vmatprep.subr.mxu0 0.0
  %445 = vmatpush2.msra.mxu0 0.0
  %446 = vmatprep.subr.mxu0 0.0
  %447 = vmatpush2.msra.mxu0 0.0
  %448 = vmatprep.subr.mxu0 0.0
  %449 = vmatpush2.msra.mxu0 0.0
  %450 = vmatprep.subr.mxu0 0.0
  %451 = vmatpush2.msra.mxu0 0.0
  %452 = vmatprep.subr.mxu0 0.0
  %453 = vmatpush2.msra.mxu0 0.0
  %454 = vmatprep.subr.mxu0 0.0
  %455 = vmatpush2.msra.mxu0 0.0
  %456 = vmatprep.subr.mxu0 0.0
  %457 = vmatpush2.msra.mxu0 0.0
  %458 = vmatprep.subr.mxu0 0.0
  %459 = vmatpush2.msra.mxu0 0.0
  %460 = vmatprep.subr.mxu0 0.0
  %461 = vmatpush2.msra.mxu0 0.0
  %462 = vmatprep.subr.mxu0 0.0
  %463 = vmatpush2.msra.mxu0 0.0
  %464 = vmatprep.subr.mxu0 0.0
  %465 = vmatpush2.msra.mxu0 0.0
  %466 = vmatprep.subr.mxu0 0.0
  %467 = vmatpush2.msra.mxu0 0.0
  %468 = vmatprep.subr.mxu0 0.0
  %469 = vmatpush2.msra.mxu0 0.0
  %470 = vmatprep.subr.mxu0 0.0
  %471 = vmatpush2.msra.mxu0 0.0
  %472 = vmatprep.mubr.f32.mxu0 0.0
  %473 = vmatmul.mubr.f32.gmra.mxu0 %v91
  %v474 = vpop.f32.mrf.mxu0
  %v475 = vadd.f32 0.0, %v474
  %v476 = vpop.f32.mrf.mxu0
  %477 = vdwg.mxu0
  %v479 = vsel %vm163, %v402, 0
  %v482 = vsel %vm167, %v475, 0
  %484 = vmatprep.subr.mxu0 0.0
  %485 = vmatpush1.msra.mxu0 0.0
  %486 = vmatprep.subr.mxu0 0.0
  %487 = vmatpush1.msra.mxu0 0.0
  %488 = vmatprep.subr.mxu0 0.0
  %489 = vmatpush1.msra.mxu0 0.0
  %490 = vmatprep.subr.mxu0 0.0
  %491 = vmatpush1.msra.mxu0 0.0
  %492 = vmatprep.subr.mxu0 0.0
  %493 = vmatpush1.msra.mxu0 0.0
  %494 = vmatprep.subr.mxu0 0.0
  %495 = vmatpush1.msra.mxu0 0.0
  %496 = vmatprep.subr.mxu0 0.0
  %497 = vmatpush1.msra.mxu0 0.0
  %498 = vmatprep.subr.mxu0 0.0
  %499 = vmatpush1.msra.mxu0 0.0
  %500 = vmatprep.subr.mxu0 0.0
  %501 = vmatpush1.msra.mxu0 0.0
  %502 = vmatprep.subr.mxu0 0.0
  %503 = vmatpush1.msra.mxu0 0.0
  %504 = vmatprep.subr.mxu0 0.0
  %505 = vmatpush1.msra.mxu0 0.0
  %506 = vmatprep.subr.mxu0 0.0
  %507 = vmatpush1.msra.mxu0 0.0
  %508 = vmatprep.subr.mxu0 0.0
  %509 = vmatpush1.msra.mxu0 0.0
  %510 = vmatprep.subr.mxu0 0.0
  %511 = vmatpush1.msra.mxu0 0.0
  %512 = vmatprep.subr.mxu0 0.0
  %513 = vmatpush1.msra.mxu0 0.0
  %514 = vmatprep.subr.mxu0 0.0
  %515 = vmatpush1.msra.mxu0 %v482
  %516 = vmatprep.subr.mxu0 0.0
  %517 = vmatpush2.msra.mxu0 0.0
  %518 = vmatprep.subr.mxu0 0.0
  %519 = vmatpush2.msra.mxu0 0.0
  %520 = vmatprep.subr.mxu0 0.0
  %521 = vmatpush2.msra.mxu0 0.0
  %522 = vmatprep.subr.mxu0 0.0
  %523 = vmatpush2.msra.mxu0 0.0
  %524 = vmatprep.subr.mxu0 0.0
  %525 = vmatpush2.msra.mxu0 0.0
  %526 = vmatprep.subr.mxu0 0.0
  %527 = vmatpush2.msra.mxu0 0.0
  %528 = vmatprep.subr.mxu0 0.0
  %529 = vmatpush2.msra.mxu0 0.0
  %530 = vmatprep.subr.mxu0 0.0
  %531 = vmatpush2.msra.mxu0 0.0
  %532 = vmatprep.subr.mxu0 0.0
  %533 = vmatpush2.msra.mxu0 0.0
  %534 = vmatprep.subr.mxu0 0.0
  %535 = vmatpush2.msra.mxu0 0.0
  %536 = vmatprep.subr.mxu0 0.0
  %537 = vmatpush2.msra.mxu0 0.0
  %538 = vmatprep.subr.mxu0 0.0
  %539 = vmatpush2.msra.mxu0 0.0
  %540 = vmatprep.subr.mxu0 0.0
  %541 = vmatpush2.msra.mxu0 0.0
  %542 = vmatprep.subr.mxu0 0.0
  %543 = vmatpush2.msra.mxu0 0.0
  %544 = vmatprep.subr.mxu0 0.0
  %545 = vmatpush2.msra.mxu0 0.0
  %546 = vmatprep.subr.mxu0 0.0
  %547 = vmatpush2.msra.mxu0 0.0
  %548 = vmatprep.mubr.f32.mxu0 0.0
  %549 = vmatmul.mubr.f32.gmra.mxu0 %v479
  %v550 = vpop.f32.mrf.mxu0
  %v551 = vadd.f32 0.0, %v550
  %v552 = vpop.f32.mrf.mxu0
  %553 = vdwg.mxu0
  %v554 = vadd.f32 %v400, %v551
  %v555 = vld [vmem:[%s4] sm:$0xff]
  %v556 = vld [vmem:[%s4 + $0x8] sm:$0xff]
  %vm557 = vcmask 130048
  %v559 = vsel %vm557, %v554, 0
  %561 = vmatprep.subr.mxu0 0.0
  %562 = vmatpush1.msra.mxu0 0.0
  %563 = vmatprep.subr.mxu0 0.0
  %564 = vmatpush1.msra.mxu0 0.0
  %565 = vmatprep.subr.mxu0 0.0
  %566 = vmatpush1.msra.mxu0 0.0
  %567 = vmatprep.subr.mxu0 0.0
  %568 = vmatpush1.msra.mxu0 0.0
  %569 = vmatprep.subr.mxu0 0.0
  %570 = vmatpush1.msra.mxu0 0.0
  %571 = vmatprep.subr.mxu0 0.0
  %572 = vmatpush1.msra.mxu0 0.0
  %573 = vmatprep.subr.mxu0 0.0
  %574 = vmatpush1.msra.mxu0 0.0
  %575 = vmatprep.subr.mxu0 0.0
  %576 = vmatpush1.msra.mxu0 0.0
  %577 = vmatprep.subr.mxu0 0.0
  %578 = vmatpush1.msra.mxu0 0.0
  %579 = vmatprep.subr.mxu0 0.0
  %580 = vmatpush1.msra.mxu0 0.0
  %581 = vmatprep.subr.mxu0 0.0
  %582 = vmatpush1.msra.mxu0 0.0
  %583 = vmatprep.subr.mxu0 0.0
  %584 = vmatpush1.msra.mxu0 0.0
  %585 = vmatprep.subr.mxu0 0.0
  %586 = vmatpush1.msra.mxu0 0.0
  %587 = vmatprep.subr.mxu0 0.0
  %588 = vmatpush1.msra.mxu0 0.0
  %589 = vmatprep.subr.mxu0 0.0
  %590 = vmatpush1.msra.mxu0 %v556
  %591 = vmatprep.subr.mxu0 0.0
  %592 = vmatpush1.msra.mxu0 %v555
  %593 = vmatprep.subr.mxu0 0.0
  %594 = vmatpush2.msra.mxu0 0.0
  %595 = vmatprep.subr.mxu0 0.0
  %596 = vmatpush2.msra.mxu0 0.0
  %597 = vmatprep.subr.mxu0 0.0
  %598 = vmatpush2.msra.mxu0 0.0
  %599 = vmatprep.subr.mxu0 0.0
  %600 = vmatpush2.msra.mxu0 0.0
  %601 = vmatprep.subr.mxu0 0.0
  %602 = vmatpush2.msra.mxu0 0.0
  %603 = vmatprep.subr.mxu0 0.0
  %604 = vmatpush2.msra.mxu0 0.0
  %605 = vmatprep.subr.mxu0 0.0
  %606 = vmatpush2.msra.mxu0 0.0
  %607 = vmatprep.subr.mxu0 0.0
  %608 = vmatpush2.msra.mxu0 0.0
  %609 = vmatprep.subr.mxu0 0.0
  %610 = vmatpush2.msra.mxu0 0.0
  %611 = vmatprep.subr.mxu0 0.0
  %612 = vmatpush2.msra.mxu0 0.0
  %613 = vmatprep.subr.mxu0 0.0
  %614 = vmatpush2.msra.mxu0 0.0
  %615 = vmatprep.subr.mxu0 0.0
  %616 = vmatpush2.msra.mxu0 0.0
  %617 = vmatprep.subr.mxu0 0.0
  %618 = vmatpush2.msra.mxu0 0.0
  %619 = vmatprep.subr.mxu0 0.0
  %620 = vmatpush2.msra.mxu0 0.0
  %621 = vmatprep.subr.mxu0 0.0
  %622 = vmatpush2.msra.mxu0 0.0
  %623 = vmatprep.subr.mxu0 0.0
  %624 = vmatpush2.msra.mxu0 0.0
  %625 = vmatprep.mubr.f32.mxu0 0.0
  %626 = vmatmul.mubr.f32.gmra.mxu0 %v559
  %v627 = vpop.f32.mrf.mxu0
  %v628 = vadd.f32 0.0, %v627
  %v629 = vpop.f32.mrf.mxu0
  %630 = vdwg.mxu0
  %v631 = vmul.f32 %v554, %v554
  %v633 = vsel %vm557, %v631, 0
  %635 = vmatprep.subr.mxu0 0.0
  %636 = vmatpush1.msra.mxu0 0.0
  %637 = vmatprep.subr.mxu0 0.0
  %638 = vmatpush1.msra.mxu0 0.0
  %639 = vmatprep.subr.mxu0 0.0
  %640 = vmatpush1.msra.mxu0 0.0
  %641 = vmatprep.subr.mxu0 0.0
  %642 = vmatpush1.msra.mxu0 0.0
  %643 = vmatprep.subr.mxu0 0.0
  %644 = vmatpush1.msra.mxu0 0.0
  %645 = vmatprep.subr.mxu0 0.0
  %646 = vmatpush1.msra.mxu0 0.0
  %647 = vmatprep.subr.mxu0 0.0
  %648 = vmatpush1.msra.mxu0 0.0
  %649 = vmatprep.subr.mxu0 0.0
  %650 = vmatpush1.msra.mxu0 0.0
  %651 = vmatprep.subr.mxu0 0.0
  %652 = vmatpush1.msra.mxu0 0.0
  %653 = vmatprep.subr.mxu0 0.0
  %654 = vmatpush1.msra.mxu0 0.0
  %655 = vmatprep.subr.mxu0 0.0
  %656 = vmatpush1.msra.mxu0 0.0
  %657 = vmatprep.subr.mxu0 0.0
  %658 = vmatpush1.msra.mxu0 0.0
  %659 = vmatprep.subr.mxu0 0.0
  %660 = vmatpush1.msra.mxu0 0.0
  %661 = vmatprep.subr.mxu0 0.0
  %662 = vmatpush1.msra.mxu0 0.0
  %663 = vmatprep.subr.mxu0 0.0
  %664 = vmatpush1.msra.mxu0 %v556
  %665 = vmatprep.subr.mxu0 0.0
  %666 = vmatpush1.msra.mxu0 %v555
  %667 = vmatprep.subr.mxu0 0.0
  %668 = vmatpush2.msra.mxu0 0.0
  %669 = vmatprep.subr.mxu0 0.0
  %670 = vmatpush2.msra.mxu0 0.0
  %671 = vmatprep.subr.mxu0 0.0
  %672 = vmatpush2.msra.mxu0 0.0
  %673 = vmatprep.subr.mxu0 0.0
  %674 = vmatpush2.msra.mxu0 0.0
  %675 = vmatprep.subr.mxu0 0.0
  %676 = vmatpush2.msra.mxu0 0.0
  %677 = vmatprep.subr.mxu0 0.0
  %678 = vmatpush2.msra.mxu0 0.0
  %679 = vmatprep.subr.mxu0 0.0
  %680 = vmatpush2.msra.mxu0 0.0
  %681 = vmatprep.subr.mxu0 0.0
  %682 = vmatpush2.msra.mxu0 0.0
  %683 = vmatprep.subr.mxu0 0.0
  %684 = vmatpush2.msra.mxu0 0.0
  %685 = vmatprep.subr.mxu0 0.0
  %686 = vmatpush2.msra.mxu0 0.0
  %687 = vmatprep.subr.mxu0 0.0
  %688 = vmatpush2.msra.mxu0 0.0
  %689 = vmatprep.subr.mxu0 0.0
  %690 = vmatpush2.msra.mxu0 0.0
  %691 = vmatprep.subr.mxu0 0.0
  %692 = vmatpush2.msra.mxu0 0.0
  %693 = vmatprep.subr.mxu0 0.0
  %694 = vmatpush2.msra.mxu0 0.0
  %695 = vmatprep.subr.mxu0 0.0
  %696 = vmatpush2.msra.mxu0 0.0
  %697 = vmatprep.subr.mxu0 0.0
  %698 = vmatpush2.msra.mxu0 0.0
  %699 = vmatprep.mubr.f32.mxu0 0.0
  %700 = vmatmul.mubr.f32.gmra.mxu0 %v633
  %v701 = vpop.f32.mrf.mxu0
  %v702 = vadd.f32 0.0, %v701
  %v703 = vpop.f32.mrf.mxu0
  %704 = vdwg.mxu0
  %v705 = vmul.f32 %v628, %v628
  %v706 = vsub.f32 %v702, %v705
  %v707 = vsub.f32 %v554, %v628
  %v708 = vmax.f32 %v706, 0.0
  %v709 = vadd.f32 %v708, 1e-05
  %v710 = vrsqrt.pop %v709
  %v711 = vmul.f32 %v707, %v710
  %vm712 = vcmp.gt.f32.partialorder %v711, 0.0
  %v713 = vmul.f32 %v711, 0.2
  %v714 = vsel %vm712, %v711, %v713
  %v715 = vld [vmem:[%s7] sm:$0xff]
  %v716 = vld [vmem:[%s7 + $0x8] sm:$0xff]
  %v717 = vld [vmem:[%s6] sm:$0xff]
  %v718 = vld [vmem:[%s6 + $0x8] sm:$0xff]
  %v719 = vld [vmem:[%s5] sm:$0xff]
  %v720 = vld [vmem:[%s5 + $0x8] sm:$0xff]
  %v722 = vsel %vm557, %v714, 0
  %724 = vmatprep.subr.mxu0 0.0
  %725 = vmatpush1.msra.mxu0 0.0
  %726 = vmatprep.subr.mxu0 0.0
  %727 = vmatpush1.msra.mxu0 0.0
  %728 = vmatprep.subr.mxu0 0.0
  %729 = vmatpush1.msra.mxu0 0.0
  %730 = vmatprep.subr.mxu0 0.0
  %731 = vmatpush1.msra.mxu0 0.0
  %732 = vmatprep.subr.mxu0 0.0
  %733 = vmatpush1.msra.mxu0 0.0
  %734 = vmatprep.subr.mxu0 0.0
  %735 = vmatpush1.msra.mxu0 0.0
  %736 = vmatprep.subr.mxu0 0.0
  %737 = vmatpush1.msra.mxu0 0.0
  %738 = vmatprep.subr.mxu0 0.0
  %739 = vmatpush1.msra.mxu0 0.0
  %740 = vmatprep.subr.mxu0 0.0
  %741 = vmatpush1.msra.mxu0 0.0
  %742 = vmatprep.subr.mxu0 0.0
  %743 = vmatpush1.msra.mxu0 0.0
  %744 = vmatprep.subr.mxu0 0.0
  %745 = vmatpush1.msra.mxu0 0.0
  %746 = vmatprep.subr.mxu0 0.0
  %747 = vmatpush1.msra.mxu0 0.0
  %748 = vmatprep.subr.mxu0 0.0
  %749 = vmatpush1.msra.mxu0 0.0
  %750 = vmatprep.subr.mxu0 0.0
  %751 = vmatpush1.msra.mxu0 0.0
  %752 = vmatprep.subr.mxu0 0.0
  %753 = vmatpush1.msra.mxu0 %v720
  %754 = vmatprep.subr.mxu0 0.0
  %755 = vmatpush1.msra.mxu0 %v719
  %756 = vmatprep.subr.mxu0 0.0
  %757 = vmatpush2.msra.mxu0 0.0
  %758 = vmatprep.subr.mxu0 0.0
  %759 = vmatpush2.msra.mxu0 0.0
  %760 = vmatprep.subr.mxu0 0.0
  %761 = vmatpush2.msra.mxu0 0.0
  %762 = vmatprep.subr.mxu0 0.0
  %763 = vmatpush2.msra.mxu0 0.0
  %764 = vmatprep.subr.mxu0 0.0
  %765 = vmatpush2.msra.mxu0 0.0
  %766 = vmatprep.subr.mxu0 0.0
  %767 = vmatpush2.msra.mxu0 0.0
  %768 = vmatprep.subr.mxu0 0.0
  %769 = vmatpush2.msra.mxu0 0.0
  %770 = vmatprep.subr.mxu0 0.0
  %771 = vmatpush2.msra.mxu0 0.0
  %772 = vmatprep.subr.mxu0 0.0
  %773 = vmatpush2.msra.mxu0 0.0
  %774 = vmatprep.subr.mxu0 0.0
  %775 = vmatpush2.msra.mxu0 0.0
  %776 = vmatprep.subr.mxu0 0.0
  %777 = vmatpush2.msra.mxu0 0.0
  %778 = vmatprep.subr.mxu0 0.0
  %779 = vmatpush2.msra.mxu0 0.0
  %780 = vmatprep.subr.mxu0 0.0
  %781 = vmatpush2.msra.mxu0 0.0
  %782 = vmatprep.subr.mxu0 0.0
  %783 = vmatpush2.msra.mxu0 0.0
  %784 = vmatprep.subr.mxu0 0.0
  %785 = vmatpush2.msra.mxu0 0.0
  %786 = vmatprep.subr.mxu0 0.0
  %787 = vmatpush2.msra.mxu0 0.0
  %788 = vmatprep.mubr.f32.mxu0 0.0
  %789 = vmatmul.mubr.f32.gmra.mxu0 %v722
  %v790 = vpop.f32.mrf.mxu0
  %v791 = vadd.f32 0.0, %v790
  %v792 = vpop.f32.mrf.mxu0
  %793 = vdwg.mxu0
  %vm794 = vcmask 64512
  %v796 = vsel %vm794, %v717, 0
  %v799 = vsel %vm794, %v718, 0
  %801 = vmatprep.subr.mxu0 0.0
  %802 = vmatpush1.msra.mxu0 0.0
  %803 = vmatprep.subr.mxu0 0.0
  %804 = vmatpush1.msra.mxu0 0.0
  %805 = vmatprep.subr.mxu0 0.0
  %806 = vmatpush1.msra.mxu0 0.0
  %807 = vmatprep.subr.mxu0 0.0
  %808 = vmatpush1.msra.mxu0 0.0
  %809 = vmatprep.subr.mxu0 0.0
  %810 = vmatpush1.msra.mxu0 0.0
  %811 = vmatprep.subr.mxu0 0.0
  %812 = vmatpush1.msra.mxu0 0.0
  %813 = vmatprep.subr.mxu0 0.0
  %814 = vmatpush1.msra.mxu0 0.0
  %815 = vmatprep.subr.mxu0 0.0
  %816 = vmatpush1.msra.mxu0 0.0
  %817 = vmatprep.subr.mxu0 0.0
  %818 = vmatpush1.msra.mxu0 0.0
  %819 = vmatprep.subr.mxu0 0.0
  %820 = vmatpush1.msra.mxu0 0.0
  %821 = vmatprep.subr.mxu0 0.0
  %822 = vmatpush1.msra.mxu0 0.0
  %823 = vmatprep.subr.mxu0 0.0
  %824 = vmatpush1.msra.mxu0 0.0
  %825 = vmatprep.subr.mxu0 0.0
  %826 = vmatpush1.msra.mxu0 0.0
  %827 = vmatprep.subr.mxu0 0.0
  %828 = vmatpush1.msra.mxu0 0.0
  %829 = vmatprep.subr.mxu0 0.0
  %830 = vmatpush1.msra.mxu0 0.0
  %831 = vmatprep.subr.mxu0 0.0
  %832 = vmatpush1.msra.mxu0 %v791
  %833 = vmatprep.subr.mxu0 0.0
  %834 = vmatpush2.msra.mxu0 0.0
  %835 = vmatprep.subr.mxu0 0.0
  %836 = vmatpush2.msra.mxu0 0.0
  %837 = vmatprep.subr.mxu0 0.0
  %838 = vmatpush2.msra.mxu0 0.0
  %839 = vmatprep.subr.mxu0 0.0
  %840 = vmatpush2.msra.mxu0 0.0
  %841 = vmatprep.subr.mxu0 0.0
  %842 = vmatpush2.msra.mxu0 0.0
  %843 = vmatprep.subr.mxu0 0.0
  %844 = vmatpush2.msra.mxu0 0.0
  %845 = vmatprep.subr.mxu0 0.0
  %846 = vmatpush2.msra.mxu0 0.0
  %847 = vmatprep.subr.mxu0 0.0
  %848 = vmatpush2.msra.mxu0 0.0
  %849 = vmatprep.subr.mxu0 0.0
  %850 = vmatpush2.msra.mxu0 0.0
  %851 = vmatprep.subr.mxu0 0.0
  %852 = vmatpush2.msra.mxu0 0.0
  %853 = vmatprep.subr.mxu0 0.0
  %854 = vmatpush2.msra.mxu0 0.0
  %855 = vmatprep.subr.mxu0 0.0
  %856 = vmatpush2.msra.mxu0 0.0
  %857 = vmatprep.subr.mxu0 0.0
  %858 = vmatpush2.msra.mxu0 0.0
  %859 = vmatprep.subr.mxu0 0.0
  %860 = vmatpush2.msra.mxu0 0.0
  %861 = vmatprep.subr.mxu0 0.0
  %862 = vmatpush2.msra.mxu0 0.0
  %863 = vmatprep.subr.mxu0 0.0
  %864 = vmatpush2.msra.mxu0 0.0
  %865 = vmatprep.mubr.f32.mxu0 0.0
  %866 = vmatmul.mubr.f32.gmra.mxu0 %v796
  %v867 = vpop.f32.mrf.mxu0
  %v868 = vadd.f32 0.0, %v867
  %v869 = vpop.f32.mrf.mxu0
  %870 = vmatprep.mubr.f32.mxu0 0.0
  %871 = vmatmul.mubr.f32.gmra.mxu0 %v799
  %v872 = vpop.f32.mrf.mxu0
  %v873 = vadd.f32 0.0, %v872
  %v874 = vpop.f32.mrf.mxu0
  %875 = vdwg.mxu0
  %877 = vset.pattern.permute.xlu0 0
  %878 = vperm.xlu0 %877, %v715
  %v879 = vpop.permute.xlu0 %878
  %882 = vset.pattern.permute.xlu0 0
  %883 = vperm.xlu0 %882, %v716
  %v884 = vpop.permute.xlu0 %883
  %v886 = vadd.f32 %v879, %v868
  %v887 = vadd.f32 %v884, %v873
  %s888 = scalar_lea.vmem %s6, 16
  %v889 = vld [vmem:[%s888] sm:$0xff]
  %v890 = vld [vmem:[%s888 + $0x8] sm:$0xff]
  %s891 = scalar_lea.vmem %s5, 16
  %v892 = vld [vmem:[%s891] sm:$0xff]
  %v893 = vld [vmem:[%s891 + $0x8] sm:$0xff]
  %894 = vmatprep.subr.mxu0 0.0
  %895 = vmatpush1.msra.mxu0 0.0
  %896 = vmatprep.subr.mxu0 0.0
  %897 = vmatpush1.msra.mxu0 0.0
  %898 = vmatprep.subr.mxu0 0.0
  %899 = vmatpush1.msra.mxu0 0.0
  %900 = vmatprep.subr.mxu0 0.0
  %901 = vmatpush1.msra.mxu0 0.0
  %902 = vmatprep.subr.mxu0 0.0
  %903 = vmatpush1.msra.mxu0 0.0
  %904 = vmatprep.subr.mxu0 0.0
  %905 = vmatpush1.msra.mxu0 0.0
  %906 = vmatprep.subr.mxu0 0.0
  %907 = vmatpush1.msra.mxu0 0.0
  %908 = vmatprep.subr.mxu0 0.0
  %909 = vmatpush1.msra.mxu0 0.0
  %910 = vmatprep.subr.mxu0 0.0
  %911 = vmatpush1.msra.mxu0 0.0
  %912 = vmatprep.subr.mxu0 0.0
  %913 = vmatpush1.msra.mxu0 0.0
  %914 = vmatprep.subr.mxu0 0.0
  %915 = vmatpush1.msra.mxu0 0.0
  %916 = vmatprep.subr.mxu0 0.0
  %917 = vmatpush1.msra.mxu0 0.0
  %918 = vmatprep.subr.mxu0 0.0
  %919 = vmatpush1.msra.mxu0 0.0
  %920 = vmatprep.subr.mxu0 0.0
  %921 = vmatpush1.msra.mxu0 0.0
  %922 = vmatprep.subr.mxu0 0.0
  %923 = vmatpush1.msra.mxu0 %v893
  %924 = vmatprep.subr.mxu0 0.0
  %925 = vmatpush1.msra.mxu0 %v892
  %926 = vmatprep.subr.mxu0 0.0
  %927 = vmatpush2.msra.mxu0 0.0
  %928 = vmatprep.subr.mxu0 0.0
  %929 = vmatpush2.msra.mxu0 0.0
  %930 = vmatprep.subr.mxu0 0.0
  %931 = vmatpush2.msra.mxu0 0.0
  %932 = vmatprep.subr.mxu0 0.0
  %933 = vmatpush2.msra.mxu0 0.0
  %934 = vmatprep.subr.mxu0 0.0
  %935 = vmatpush2.msra.mxu0 0.0
  %936 = vmatprep.subr.mxu0 0.0
  %937 = vmatpush2.msra.mxu0 0.0
  %938 = vmatprep.subr.mxu0 0.0
  %939 = vmatpush2.msra.mxu0 0.0
  %940 = vmatprep.subr.mxu0 0.0
  %941 = vmatpush2.msra.mxu0 0.0
  %942 = vmatprep.subr.mxu0 0.0
  %943 = vmatpush2.msra.mxu0 0.0
  %944 = vmatprep.subr.mxu0 0.0
  %945 = vmatpush2.msra.mxu0 0.0
  %946 = vmatprep.subr.mxu0 0.0
  %947 = vmatpush2.msra.mxu0 0.0
  %948 = vmatprep.subr.mxu0 0.0
  %949 = vmatpush2.msra.mxu0 0.0
  %950 = vmatprep.subr.mxu0 0.0
  %951 = vmatpush2.msra.mxu0 0.0
  %952 = vmatprep.subr.mxu0 0.0
  %953 = vmatpush2.msra.mxu0 0.0
  %954 = vmatprep.subr.mxu0 0.0
  %955 = vmatpush2.msra.mxu0 0.0
  %956 = vmatprep.subr.mxu0 0.0
  %957 = vmatpush2.msra.mxu0 0.0
  %958 = vmatprep.mubr.f32.mxu0 0.0
  %959 = vmatmul.mubr.f32.gmra.mxu0 %v722
  %v960 = vpop.f32.mrf.mxu0
  %v961 = vadd.f32 0.0, %v960
  %v962 = vpop.f32.mrf.mxu0
  %963 = vdwg.mxu0
  %v965 = vsel %vm794, %v889, 0
  %v968 = vsel %vm794, %v890, 0
  %970 = vmatprep.subr.mxu0 0.0
  %971 = vmatpush1.msra.mxu0 0.0
  %972 = vmatprep.subr.mxu0 0.0
  %973 = vmatpush1.msra.mxu0 0.0
  %974 = vmatprep.subr.mxu0 0.0
  %975 = vmatpush1.msra.mxu0 0.0
  %976 = vmatprep.subr.mxu0 0.0
  %977 = vmatpush1.msra.mxu0 0.0
  %978 = vmatprep.subr.mxu0 0.0
  %979 = vmatpush1.msra.mxu0 0.0
  %980 = vmatprep.subr.mxu0 0.0
  %981 = vmatpush1.msra.mxu0 0.0
  %982 = vmatprep.subr.mxu0 0.0
  %983 = vmatpush1.msra.mxu0 0.0
  %984 = vmatprep.subr.mxu0 0.0
  %985 = vmatpush1.msra.mxu0 0.0
  %986 = vmatprep.subr.mxu0 0.0
  %987 = vmatpush1.msra.mxu0 0.0
  %988 = vmatprep.subr.mxu0 0.0
  %989 = vmatpush1.msra.mxu0 0.0
  %990 = vmatprep.subr.mxu0 0.0
  %991 = vmatpush1.msra.mxu0 0.0
  %992 = vmatprep.subr.mxu0 0.0
  %993 = vmatpush1.msra.mxu0 0.0
  %994 = vmatprep.subr.mxu0 0.0
  %995 = vmatpush1.msra.mxu0 0.0
  %996 = vmatprep.subr.mxu0 0.0
  %997 = vmatpush1.msra.mxu0 0.0
  %998 = vmatprep.subr.mxu0 0.0
  %999 = vmatpush1.msra.mxu0 0.0
  %1000 = vmatprep.subr.mxu0 0.0
  %1001 = vmatpush1.msra.mxu0 %v961
  %1002 = vmatprep.subr.mxu0 0.0
  %1003 = vmatpush2.msra.mxu0 0.0
  %1004 = vmatprep.subr.mxu0 0.0
  %1005 = vmatpush2.msra.mxu0 0.0
  %1006 = vmatprep.subr.mxu0 0.0
  %1007 = vmatpush2.msra.mxu0 0.0
  %1008 = vmatprep.subr.mxu0 0.0
  %1009 = vmatpush2.msra.mxu0 0.0
  %1010 = vmatprep.subr.mxu0 0.0
  %1011 = vmatpush2.msra.mxu0 0.0
  %1012 = vmatprep.subr.mxu0 0.0
  %1013 = vmatpush2.msra.mxu0 0.0
  %1014 = vmatprep.subr.mxu0 0.0
  %1015 = vmatpush2.msra.mxu0 0.0
  %1016 = vmatprep.subr.mxu0 0.0
  %1017 = vmatpush2.msra.mxu0 0.0
  %1018 = vmatprep.subr.mxu0 0.0
  %1019 = vmatpush2.msra.mxu0 0.0
  %1020 = vmatprep.subr.mxu0 0.0
  %1021 = vmatpush2.msra.mxu0 0.0
  %1022 = vmatprep.subr.mxu0 0.0
  %1023 = vmatpush2.msra.mxu0 0.0
  %1024 = vmatprep.subr.mxu0 0.0
  %1025 = vmatpush2.msra.mxu0 0.0
  %1026 = vmatprep.subr.mxu0 0.0
  %1027 = vmatpush2.msra.mxu0 0.0
  %1028 = vmatprep.subr.mxu0 0.0
  %1029 = vmatpush2.msra.mxu0 0.0
  %1030 = vmatprep.subr.mxu0 0.0
  %1031 = vmatpush2.msra.mxu0 0.0
  %1032 = vmatprep.subr.mxu0 0.0
  %1033 = vmatpush2.msra.mxu0 0.0
  %1034 = vmatprep.mubr.f32.mxu0 0.0
  %1035 = vmatmul.mubr.f32.gmra.mxu0 %v965
  %v1036 = vpop.f32.mrf.mxu0
  %v1037 = vadd.f32 0.0, %v1036
  %v1038 = vpop.f32.mrf.mxu0
  %1039 = vmatprep.mubr.f32.mxu0 0.0
  %1040 = vmatmul.mubr.f32.gmra.mxu0 %v968
  %v1041 = vpop.f32.mrf.mxu0
  %v1042 = vadd.f32 0.0, %v1041
  %v1043 = vpop.f32.mrf.mxu0
  %1044 = vdwg.mxu0
  %v1045 = vadd.f32 %v886, %v1037
  %v1046 = vadd.f32 %v887, %v1042
  %s1047 = scalar_lea.vmem %s6, 32
  %v1048 = vld [vmem:[%s1047] sm:$0xff]
  %v1049 = vld [vmem:[%s1047 + $0x8] sm:$0xff]
  %s1050 = scalar_lea.vmem %s5, 32
  %v1051 = vld [vmem:[%s1050] sm:$0xff]
  %v1052 = vld [vmem:[%s1050 + $0x8] sm:$0xff]
  %1053 = vmatprep.subr.mxu0 0.0
  %1054 = vmatpush1.msra.mxu0 0.0
  %1055 = vmatprep.subr.mxu0 0.0
  %1056 = vmatpush1.msra.mxu0 0.0
  %1057 = vmatprep.subr.mxu0 0.0
  %1058 = vmatpush1.msra.mxu0 0.0
  %1059 = vmatprep.subr.mxu0 0.0
  %1060 = vmatpush1.msra.mxu0 0.0
  %1061 = vmatprep.subr.mxu0 0.0
  %1062 = vmatpush1.msra.mxu0 0.0
  %1063 = vmatprep.subr.mxu0 0.0
  %1064 = vmatpush1.msra.mxu0 0.0
  %1065 = vmatprep.subr.mxu0 0.0
  %1066 = vmatpush1.msra.mxu0 0.0
  %1067 = vmatprep.subr.mxu0 0.0
  %1068 = vmatpush1.msra.mxu0 0.0
  %1069 = vmatprep.subr.mxu0 0.0
  %1070 = vmatpush1.msra.mxu0 0.0
  %1071 = vmatprep.subr.mxu0 0.0
  %1072 = vmatpush1.msra.mxu0 0.0
  %1073 = vmatprep.subr.mxu0 0.0
  %1074 = vmatpush1.msra.mxu0 0.0
  %1075 = vmatprep.subr.mxu0 0.0
  %1076 = vmatpush1.msra.mxu0 0.0
  %1077 = vmatprep.subr.mxu0 0.0
  %1078 = vmatpush1.msra.mxu0 0.0
  %1079 = vmatprep.subr.mxu0 0.0
  %1080 = vmatpush1.msra.mxu0 0.0
  %1081 = vmatprep.subr.mxu0 0.0
  %1082 = vmatpush1.msra.mxu0 %v1052
  %1083 = vmatprep.subr.mxu0 0.0
  %1084 = vmatpush1.msra.mxu0 %v1051
  %1085 = vmatprep.subr.mxu0 0.0
  %1086 = vmatpush2.msra.mxu0 0.0
  %1087 = vmatprep.subr.mxu0 0.0
  %1088 = vmatpush2.msra.mxu0 0.0
  %1089 = vmatprep.subr.mxu0 0.0
  %1090 = vmatpush2.msra.mxu0 0.0
  %1091 = vmatprep.subr.mxu0 0.0
  %1092 = vmatpush2.msra.mxu0 0.0
  %1093 = vmatprep.subr.mxu0 0.0
  %1094 = vmatpush2.msra.mxu0 0.0
  %1095 = vmatprep.subr.mxu0 0.0
  %1096 = vmatpush2.msra.mxu0 0.0
  %1097 = vmatprep.subr.mxu0 0.0
  %1098 = vmatpush2.msra.mxu0 0.0
  %1099 = vmatprep.subr.mxu0 0.0
  %1100 = vmatpush2.msra.mxu0 0.0
  %1101 = vmatprep.subr.mxu0 0.0
  %1102 = vmatpush2.msra.mxu0 0.0
  %1103 = vmatprep.subr.mxu0 0.0
  %1104 = vmatpush2.msra.mxu0 0.0
  %1105 = vmatprep.subr.mxu0 0.0
  %1106 = vmatpush2.msra.mxu0 0.0
  %1107 = vmatprep.subr.mxu0 0.0
  %1108 = vmatpush2.msra.mxu0 0.0
  %1109 = vmatprep.subr.mxu0 0.0
  %1110 = vmatpush2.msra.mxu0 0.0
  %1111 = vmatprep.subr.mxu0 0.0
  %1112 = vmatpush2.msra.mxu0 0.0
  %1113 = vmatprep.subr.mxu0 0.0
  %1114 = vmatpush2.msra.mxu0 0.0
  %1115 = vmatprep.subr.mxu0 0.0
  %1116 = vmatpush2.msra.mxu0 0.0
  %1117 = vmatprep.mubr.f32.mxu0 0.0
  %1118 = vmatmul.mubr.f32.gmra.mxu0 %v722
  %v1119 = vpop.f32.mrf.mxu0
  %v1120 = vadd.f32 0.0, %v1119
  %v1121 = vpop.f32.mrf.mxu0
  %1122 = vdwg.mxu0
  %v1124 = vsel %vm794, %v1048, 0
  %v1127 = vsel %vm794, %v1049, 0
  %1129 = vmatprep.subr.mxu0 0.0
  %1130 = vmatpush1.msra.mxu0 0.0
  %1131 = vmatprep.subr.mxu0 0.0
  %1132 = vmatpush1.msra.mxu0 0.0
  %1133 = vmatprep.subr.mxu0 0.0
  %1134 = vmatpush1.msra.mxu0 0.0
  %1135 = vmatprep.subr.mxu0 0.0
  %1136 = vmatpush1.msra.mxu0 0.0
  %1137 = vmatprep.subr.mxu0 0.0
  %1138 = vmatpush1.msra.mxu0 0.0
  %1139 = vmatprep.subr.mxu0 0.0
  %1140 = vmatpush1.msra.mxu0 0.0
  %1141 = vmatprep.subr.mxu0 0.0
  %1142 = vmatpush1.msra.mxu0 0.0
  %1143 = vmatprep.subr.mxu0 0.0
  %1144 = vmatpush1.msra.mxu0 0.0
  %1145 = vmatprep.subr.mxu0 0.0
  %1146 = vmatpush1.msra.mxu0 0.0
  %1147 = vmatprep.subr.mxu0 0.0
  %1148 = vmatpush1.msra.mxu0 0.0
  %1149 = vmatprep.subr.mxu0 0.0
  %1150 = vmatpush1.msra.mxu0 0.0
  %1151 = vmatprep.subr.mxu0 0.0
  %1152 = vmatpush1.msra.mxu0 0.0
  %1153 = vmatprep.subr.mxu0 0.0
  %1154 = vmatpush1.msra.mxu0 0.0
  %1155 = vmatprep.subr.mxu0 0.0
  %1156 = vmatpush1.msra.mxu0 0.0
  %1157 = vmatprep.subr.mxu0 0.0
  %1158 = vmatpush1.msra.mxu0 0.0
  %1159 = vmatprep.subr.mxu0 0.0
  %1160 = vmatpush1.msra.mxu0 %v1120
  %1161 = vmatprep.subr.mxu0 0.0
  %1162 = vmatpush2.msra.mxu0 0.0
  %1163 = vmatprep.subr.mxu0 0.0
  %1164 = vmatpush2.msra.mxu0 0.0
  %1165 = vmatprep.subr.mxu0 0.0
  %1166 = vmatpush2.msra.mxu0 0.0
  %1167 = vmatprep.subr.mxu0 0.0
  %1168 = vmatpush2.msra.mxu0 0.0
  %1169 = vmatprep.subr.mxu0 0.0
  %1170 = vmatpush2.msra.mxu0 0.0
  %1171 = vmatprep.subr.mxu0 0.0
  %1172 = vmatpush2.msra.mxu0 0.0
  %1173 = vmatprep.subr.mxu0 0.0
  %1174 = vmatpush2.msra.mxu0 0.0
  %1175 = vmatprep.subr.mxu0 0.0
  %1176 = vmatpush2.msra.mxu0 0.0
  %1177 = vmatprep.subr.mxu0 0.0
  %1178 = vmatpush2.msra.mxu0 0.0
  %1179 = vmatprep.subr.mxu0 0.0
  %1180 = vmatpush2.msra.mxu0 0.0
  %1181 = vmatprep.subr.mxu0 0.0
  %1182 = vmatpush2.msra.mxu0 0.0
  %1183 = vmatprep.subr.mxu0 0.0
  %1184 = vmatpush2.msra.mxu0 0.0
  %1185 = vmatprep.subr.mxu0 0.0
  %1186 = vmatpush2.msra.mxu0 0.0
  %1187 = vmatprep.subr.mxu0 0.0
  %1188 = vmatpush2.msra.mxu0 0.0
  %1189 = vmatprep.subr.mxu0 0.0
  %1190 = vmatpush2.msra.mxu0 0.0
  %1191 = vmatprep.subr.mxu0 0.0
  %1192 = vmatpush2.msra.mxu0 0.0
  %1193 = vmatprep.mubr.f32.mxu0 0.0
  %1194 = vmatmul.mubr.f32.gmra.mxu0 %v1124
  %v1195 = vpop.f32.mrf.mxu0
  %v1196 = vadd.f32 0.0, %v1195
  %v1197 = vpop.f32.mrf.mxu0
  %1198 = vmatprep.mubr.f32.mxu0 0.0
  %1199 = vmatmul.mubr.f32.gmra.mxu0 %v1127
  %v1200 = vpop.f32.mrf.mxu0
  %v1201 = vadd.f32 0.0, %v1200
  %v1202 = vpop.f32.mrf.mxu0
  %1203 = vdwg.mxu0
  %v1204 = vadd.f32 %v1045, %v1196
  %v1205 = vadd.f32 %v1046, %v1201
  %v1206 = vld [vmem:[%s8] sm:$0xff]
  %v1208 = vsel %vm794, %v1204, 0
  %v1211 = vsel %vm794, %v1205, 0
  %1213 = vmatprep.subr.mxu0 0.0
  %1214 = vmatpush1.msra.mxu0 0.0
  %1215 = vmatprep.subr.mxu0 0.0
  %1216 = vmatpush1.msra.mxu0 0.0
  %1217 = vmatprep.subr.mxu0 0.0
  %1218 = vmatpush1.msra.mxu0 0.0
  %1219 = vmatprep.subr.mxu0 0.0
  %1220 = vmatpush1.msra.mxu0 0.0
  %1221 = vmatprep.subr.mxu0 0.0
  %1222 = vmatpush1.msra.mxu0 0.0
  %1223 = vmatprep.subr.mxu0 0.0
  %1224 = vmatpush1.msra.mxu0 0.0
  %1225 = vmatprep.subr.mxu0 0.0
  %1226 = vmatpush1.msra.mxu0 0.0
  %1227 = vmatprep.subr.mxu0 0.0
  %1228 = vmatpush1.msra.mxu0 0.0
  %1229 = vmatprep.subr.mxu0 0.0
  %1230 = vmatpush1.msra.mxu0 0.0
  %1231 = vmatprep.subr.mxu0 0.0
  %1232 = vmatpush1.msra.mxu0 0.0
  %1233 = vmatprep.subr.mxu0 0.0
  %1234 = vmatpush1.msra.mxu0 0.0
  %1235 = vmatprep.subr.mxu0 0.0
  %1236 = vmatpush1.msra.mxu0 0.0
  %1237 = vmatprep.subr.mxu0 0.0
  %1238 = vmatpush1.msra.mxu0 0.0
  %1239 = vmatprep.subr.mxu0 0.0
  %1240 = vmatpush1.msra.mxu0 0.0
  %1241 = vmatprep.subr.mxu0 0.0
  %1242 = vmatpush1.msra.mxu0 0.0
  %1243 = vmatprep.subr.mxu0 0.0
  %1244 = vmatpush1.msra.mxu0 %v1206
  %1245 = vmatprep.subr.mxu0 0.0
  %1246 = vmatpush2.msra.mxu0 0.0
  %1247 = vmatprep.subr.mxu0 0.0
  %1248 = vmatpush2.msra.mxu0 0.0
  %1249 = vmatprep.subr.mxu0 0.0
  %1250 = vmatpush2.msra.mxu0 0.0
  %1251 = vmatprep.subr.mxu0 0.0
  %1252 = vmatpush2.msra.mxu0 0.0
  %1253 = vmatprep.subr.mxu0 0.0
  %1254 = vmatpush2.msra.mxu0 0.0
  %1255 = vmatprep.subr.mxu0 0.0
  %1256 = vmatpush2.msra.mxu0 0.0
  %1257 = vmatprep.subr.mxu0 0.0
  %1258 = vmatpush2.msra.mxu0 0.0
  %1259 = vmatprep.subr.mxu0 0.0
  %1260 = vmatpush2.msra.mxu0 0.0
  %1261 = vmatprep.subr.mxu0 0.0
  %1262 = vmatpush2.msra.mxu0 0.0
  %1263 = vmatprep.subr.mxu0 0.0
  %1264 = vmatpush2.msra.mxu0 0.0
  %1265 = vmatprep.subr.mxu0 0.0
  %1266 = vmatpush2.msra.mxu0 0.0
  %1267 = vmatprep.subr.mxu0 0.0
  %1268 = vmatpush2.msra.mxu0 0.0
  %1269 = vmatprep.subr.mxu0 0.0
  %1270 = vmatpush2.msra.mxu0 0.0
  %1271 = vmatprep.subr.mxu0 0.0
  %1272 = vmatpush2.msra.mxu0 0.0
  %1273 = vmatprep.subr.mxu0 0.0
  %1274 = vmatpush2.msra.mxu0 0.0
  %1275 = vmatprep.subr.mxu0 0.0
  %1276 = vmatpush2.msra.mxu0 0.0
  %1277 = vmatprep.mubr.f32.mxu0 0.0
  %1278 = vmatmul.mubr.f32.gmra.mxu0 %v1208
  %v1279 = vpop.f32.mrf.mxu0
  %v1280 = vadd.f32 0.0, %v1279
  %v1281 = vpop.f32.mrf.mxu0
  %1282 = vmatprep.mubr.f32.mxu0 0.0
  %1283 = vmatmul.mubr.f32.gmra.mxu0 %v1211
  %v1284 = vpop.f32.mrf.mxu0
  %v1285 = vadd.f32 0.0, %v1284
  %v1286 = vpop.f32.mrf.mxu0
  %1287 = vdwg.mxu0
  %v1288 = vmul.f32 %v1204, %v1204
  %v1289 = vmul.f32 %v1205, %v1205
  %v1291 = vsel %vm794, %v1288, 0
  %v1294 = vsel %vm794, %v1289, 0
  %1296 = vmatprep.subr.mxu0 0.0
  %1297 = vmatpush1.msra.mxu0 0.0
  %1298 = vmatprep.subr.mxu0 0.0
  %1299 = vmatpush1.msra.mxu0 0.0
  %1300 = vmatprep.subr.mxu0 0.0
  %1301 = vmatpush1.msra.mxu0 0.0
  %1302 = vmatprep.subr.mxu0 0.0
  %1303 = vmatpush1.msra.mxu0 0.0
  %1304 = vmatprep.subr.mxu0 0.0
  %1305 = vmatpush1.msra.mxu0 0.0
  %1306 = vmatprep.subr.mxu0 0.0
  %1307 = vmatpush1.msra.mxu0 0.0
  %1308 = vmatprep.subr.mxu0 0.0
  %1309 = vmatpush1.msra.mxu0 0.0
  %1310 = vmatprep.subr.mxu0 0.0
  %1311 = vmatpush1.msra.mxu0 0.0
  %1312 = vmatprep.subr.mxu0 0.0
  %1313 = vmatpush1.msra.mxu0 0.0
  %1314 = vmatprep.subr.mxu0 0.0
  %1315 = vmatpush1.msra.mxu0 0.0
  %1316 = vmatprep.subr.mxu0 0.0
  %1317 = vmatpush1.msra.mxu0 0.0
  %1318 = vmatprep.subr.mxu0 0.0
  %1319 = vmatpush1.msra.mxu0 0.0
  %1320 = vmatprep.subr.mxu0 0.0
  %1321 = vmatpush1.msra.mxu0 0.0
  %1322 = vmatprep.subr.mxu0 0.0
  %1323 = vmatpush1.msra.mxu0 0.0
  %1324 = vmatprep.subr.mxu0 0.0
  %1325 = vmatpush1.msra.mxu0 0.0
  %1326 = vmatprep.subr.mxu0 0.0
  %1327 = vmatpush1.msra.mxu0 %v1206
  %1328 = vmatprep.subr.mxu0 0.0
  %1329 = vmatpush2.msra.mxu0 0.0
  %1330 = vmatprep.subr.mxu0 0.0
  %1331 = vmatpush2.msra.mxu0 0.0
  %1332 = vmatprep.subr.mxu0 0.0
  %1333 = vmatpush2.msra.mxu0 0.0
  %1334 = vmatprep.subr.mxu0 0.0
  %1335 = vmatpush2.msra.mxu0 0.0
  %1336 = vmatprep.subr.mxu0 0.0
  %1337 = vmatpush2.msra.mxu0 0.0
  %1338 = vmatprep.subr.mxu0 0.0
  %1339 = vmatpush2.msra.mxu0 0.0
  %1340 = vmatprep.subr.mxu0 0.0
  %1341 = vmatpush2.msra.mxu0 0.0
  %1342 = vmatprep.subr.mxu0 0.0
  %1343 = vmatpush2.msra.mxu0 0.0
  %1344 = vmatprep.subr.mxu0 0.0
  %1345 = vmatpush2.msra.mxu0 0.0
  %1346 = vmatprep.subr.mxu0 0.0
  %1347 = vmatpush2.msra.mxu0 0.0
  %1348 = vmatprep.subr.mxu0 0.0
  %1349 = vmatpush2.msra.mxu0 0.0
  %1350 = vmatprep.subr.mxu0 0.0
  %1351 = vmatpush2.msra.mxu0 0.0
  %1352 = vmatprep.subr.mxu0 0.0
  %1353 = vmatpush2.msra.mxu0 0.0
  %1354 = vmatprep.subr.mxu0 0.0
  %1355 = vmatpush2.msra.mxu0 0.0
  %1356 = vmatprep.subr.mxu0 0.0
  %1357 = vmatpush2.msra.mxu0 0.0
  %1358 = vmatprep.subr.mxu0 0.0
  %1359 = vmatpush2.msra.mxu0 0.0
  %1360 = vmatprep.mubr.f32.mxu0 0.0
  %1361 = vmatmul.mubr.f32.gmra.mxu0 %v1291
  %v1362 = vpop.f32.mrf.mxu0
  %v1363 = vadd.f32 0.0, %v1362
  %v1364 = vpop.f32.mrf.mxu0
  %1365 = vmatprep.mubr.f32.mxu0 0.0
  %1366 = vmatmul.mubr.f32.gmra.mxu0 %v1294
  %v1367 = vpop.f32.mrf.mxu0
  %v1368 = vadd.f32 0.0, %v1367
  %v1369 = vpop.f32.mrf.mxu0
  %1370 = vdwg.mxu0
  %v1371 = vmul.f32 %v1280, %v1280
  %v1372 = vmul.f32 %v1285, %v1285
  %v1373 = vsub.f32 %v1363, %v1371
  %v1374 = vsub.f32 %v1368, %v1372
  %v1375 = vsub.f32 %v1204, %v1280
  %v1376 = vsub.f32 %v1205, %v1285
  %v1377 = vmax.f32 %v1373, 0.0
  %v1378 = vmax.f32 %v1374, 0.0
  %v1379 = vadd.f32 %v1377, 1e-05
  %v1380 = vadd.f32 %v1378, 1e-05
  %v1381 = vrsqrt.pop %v1379
  %v1382 = vrsqrt.pop %v1380
  %v1383 = vmul.f32 %v1375, %v1381
  %v1384 = vmul.f32 %v1376, %v1382
  %vm1385 = vcmp.gt.f32.partialorder %v1383, 0.0
  %vm1386 = vcmp.gt.f32.partialorder %v1384, 0.0
  %v1387 = vmul.f32 %v1383, 0.2
  %v1388 = vmul.f32 %v1384, 0.2
  %v1389 = vsel %vm1385, %v1383, %v1387
  %v1390 = vsel %vm1386, %v1384, %v1388
  %v1391 = vld [vmem:[%s10] sm:$0xff]
  %v1392 = vld [vmem:[%s10 + $0x8] sm:$0xff]
  %v1393 = vld [vmem:[%s9] sm:$0xff]
  %v1394 = vld [vmem:[%s9 + $0x8] sm:$0xff]
  %1396 = vset.pattern.permute.xlu0 0
  %1397 = vperm.xlu0 %1396, %v1391
  %v1398 = vpop.permute.xlu0 %1397
  %1401 = vset.pattern.permute.xlu0 0
  %1402 = vperm.xlu0 %1401, %v1392
  %v1403 = vpop.permute.xlu0 %1402
  %v1406 = vsel %vm557, %v1393, 0
  %v1409 = vsel %vm557, %v1394, 0
  %1411 = vmatprep.subr.mxu0 0.0
  %1412 = vmatpush1.msra.mxu0 0.0
  %1413 = vmatprep.subr.mxu0 0.0
  %1414 = vmatpush1.msra.mxu0 0.0
  %1415 = vmatprep.subr.mxu0 0.0
  %1416 = vmatpush1.msra.mxu0 0.0
  %1417 = vmatprep.subr.mxu0 0.0
  %1418 = vmatpush1.msra.mxu0 0.0
  %1419 = vmatprep.subr.mxu0 0.0
  %1420 = vmatpush1.msra.mxu0 0.0
  %1421 = vmatprep.subr.mxu0 0.0
  %1422 = vmatpush1.msra.mxu0 0.0
  %1423 = vmatprep.subr.mxu0 0.0
  %1424 = vmatpush1.msra.mxu0 0.0
  %1425 = vmatprep.subr.mxu0 0.0
  %1426 = vmatpush1.msra.mxu0 0.0
  %1427 = vmatprep.subr.mxu0 0.0
  %1428 = vmatpush1.msra.mxu0 0.0
  %1429 = vmatprep.subr.mxu0 0.0
  %1430 = vmatpush1.msra.mxu0 0.0
  %1431 = vmatprep.subr.mxu0 0.0
  %1432 = vmatpush1.msra.mxu0 0.0
  %1433 = vmatprep.subr.mxu0 0.0
  %1434 = vmatpush1.msra.mxu0 0.0
  %1435 = vmatprep.subr.mxu0 0.0
  %1436 = vmatpush1.msra.mxu0 0.0
  %1437 = vmatprep.subr.mxu0 0.0
  %1438 = vmatpush1.msra.mxu0 0.0
  %1439 = vmatprep.subr.mxu0 0.0
  %1440 = vmatpush1.msra.mxu0 %v1390
  %1441 = vmatprep.subr.mxu0 0.0
  %1442 = vmatpush1.msra.mxu0 %v1389
  %1443 = vmatprep.subr.mxu0 0.0
  %1444 = vmatpush2.msra.mxu0 0.0
  %1445 = vmatprep.subr.mxu0 0.0
  %1446 = vmatpush2.msra.mxu0 0.0
  %1447 = vmatprep.subr.mxu0 0.0
  %1448 = vmatpush2.msra.mxu0 0.0
  %1449 = vmatprep.subr.mxu0 0.0
  %1450 = vmatpush2.msra.mxu0 0.0
  %1451 = vmatprep.subr.mxu0 0.0
  %1452 = vmatpush2.msra.mxu0 0.0
  %1453 = vmatprep.subr.mxu0 0.0
  %1454 = vmatpush2.msra.mxu0 0.0
  %1455 = vmatprep.subr.mxu0 0.0
  %1456 = vmatpush2.msra.mxu0 0.0
  %1457 = vmatprep.subr.mxu0 0.0
  %1458 = vmatpush2.msra.mxu0 0.0
  %1459 = vmatprep.subr.mxu0 0.0
  %1460 = vmatpush2.msra.mxu0 0.0
  %1461 = vmatprep.subr.mxu0 0.0
  %1462 = vmatpush2.msra.mxu0 0.0
  %1463 = vmatprep.subr.mxu0 0.0
  %1464 = vmatpush2.msra.mxu0 0.0
  %1465 = vmatprep.subr.mxu0 0.0
  %1466 = vmatpush2.msra.mxu0 0.0
  %1467 = vmatprep.subr.mxu0 0.0
  %1468 = vmatpush2.msra.mxu0 0.0
  %1469 = vmatprep.subr.mxu0 0.0
  %1470 = vmatpush2.msra.mxu0 0.0
  %1471 = vmatprep.subr.mxu0 0.0
  %1472 = vmatpush2.msra.mxu0 0.0
  %1473 = vmatprep.subr.mxu0 0.0
  %1474 = vmatpush2.msra.mxu0 0.0
  %1475 = vmatprep.mubr.f32.mxu0 0.0
  %1476 = vmatmul.mubr.f32.gmra.mxu0 %v1406
  %v1477 = vpop.f32.mrf.mxu0
  %v1478 = vadd.f32 %v1398, %v1477
  %v1479 = vpop.f32.mrf.mxu0
  %1480 = vmatprep.mubr.f32.mxu0 0.0
  %1481 = vmatmul.mubr.f32.gmra.mxu0 %v1409
  %v1482 = vpop.f32.mrf.mxu0
  %v1483 = vadd.f32 %v1403, %v1482
  %v1484 = vpop.f32.mrf.mxu0
  %1485 = vdwg.mxu0
  %v1487 = vsel %vm794, %v1478, 0
  %v1490 = vsel %vm794, %v1483, 0
  %1492 = vmatprep.subr.mxu0 0.0
  %1493 = vmatpush1.msra.mxu0 0.0
  %1494 = vmatprep.subr.mxu0 0.0
  %1495 = vmatpush1.msra.mxu0 0.0
  %1496 = vmatprep.subr.mxu0 0.0
  %1497 = vmatpush1.msra.mxu0 0.0
  %1498 = vmatprep.subr.mxu0 0.0
  %1499 = vmatpush1.msra.mxu0 0.0
  %1500 = vmatprep.subr.mxu0 0.0
  %1501 = vmatpush1.msra.mxu0 0.0
  %1502 = vmatprep.subr.mxu0 0.0
  %1503 = vmatpush1.msra.mxu0 0.0
  %1504 = vmatprep.subr.mxu0 0.0
  %1505 = vmatpush1.msra.mxu0 0.0
  %1506 = vmatprep.subr.mxu0 0.0
  %1507 = vmatpush1.msra.mxu0 0.0
  %1508 = vmatprep.subr.mxu0 0.0
  %1509 = vmatpush1.msra.mxu0 0.0
  %1510 = vmatprep.subr.mxu0 0.0
  %1511 = vmatpush1.msra.mxu0 0.0
  %1512 = vmatprep.subr.mxu0 0.0
  %1513 = vmatpush1.msra.mxu0 0.0
  %1514 = vmatprep.subr.mxu0 0.0
  %1515 = vmatpush1.msra.mxu0 0.0
  %1516 = vmatprep.subr.mxu0 0.0
  %1517 = vmatpush1.msra.mxu0 0.0
  %1518 = vmatprep.subr.mxu0 0.0
  %1519 = vmatpush1.msra.mxu0 0.0
  %1520 = vmatprep.subr.mxu0 0.0
  %1521 = vmatpush1.msra.mxu0 0.0
  %1522 = vmatprep.subr.mxu0 0.0
  %1523 = vmatpush1.msra.mxu0 %v1206
  %1524 = vmatprep.subr.mxu0 0.0
  %1525 = vmatpush2.msra.mxu0 0.0
  %1526 = vmatprep.subr.mxu0 0.0
  %1527 = vmatpush2.msra.mxu0 0.0
  %1528 = vmatprep.subr.mxu0 0.0
  %1529 = vmatpush2.msra.mxu0 0.0
  %1530 = vmatprep.subr.mxu0 0.0
  %1531 = vmatpush2.msra.mxu0 0.0
  %1532 = vmatprep.subr.mxu0 0.0
  %1533 = vmatpush2.msra.mxu0 0.0
  %1534 = vmatprep.subr.mxu0 0.0
  %1535 = vmatpush2.msra.mxu0 0.0
  %1536 = vmatprep.subr.mxu0 0.0
  %1537 = vmatpush2.msra.mxu0 0.0
  %1538 = vmatprep.subr.mxu0 0.0
  %1539 = vmatpush2.msra.mxu0 0.0
  %1540 = vmatprep.subr.mxu0 0.0
  %1541 = vmatpush2.msra.mxu0 0.0
  %1542 = vmatprep.subr.mxu0 0.0
  %1543 = vmatpush2.msra.mxu0 0.0
  %1544 = vmatprep.subr.mxu0 0.0
  %1545 = vmatpush2.msra.mxu0 0.0
  %1546 = vmatprep.subr.mxu0 0.0
  %1547 = vmatpush2.msra.mxu0 0.0
  %1548 = vmatprep.subr.mxu0 0.0
  %1549 = vmatpush2.msra.mxu0 0.0
  %1550 = vmatprep.subr.mxu0 0.0
  %1551 = vmatpush2.msra.mxu0 0.0
  %1552 = vmatprep.subr.mxu0 0.0
  %1553 = vmatpush2.msra.mxu0 0.0
  %1554 = vmatprep.subr.mxu0 0.0
  %1555 = vmatpush2.msra.mxu0 0.0
  %1556 = vmatprep.mubr.f32.mxu0 0.0
  %1557 = vmatmul.mubr.f32.gmra.mxu0 %v1487
  %v1558 = vpop.f32.mrf.mxu0
  %v1559 = vadd.f32 0.0, %v1558
  %v1560 = vpop.f32.mrf.mxu0
  %1561 = vmatprep.mubr.f32.mxu0 0.0
  %1562 = vmatmul.mubr.f32.gmra.mxu0 %v1490
  %v1563 = vpop.f32.mrf.mxu0
  %v1564 = vadd.f32 0.0, %v1563
  %v1565 = vpop.f32.mrf.mxu0
  %1566 = vdwg.mxu0
  %v1567 = vmul.f32 %v1478, %v1478
  %v1568 = vmul.f32 %v1483, %v1483
  %v1570 = vsel %vm794, %v1567, 0
  %v1573 = vsel %vm794, %v1568, 0
  %1575 = vmatprep.subr.mxu0 0.0
  %1576 = vmatpush1.msra.mxu0 0.0
  %1577 = vmatprep.subr.mxu0 0.0
  %1578 = vmatpush1.msra.mxu0 0.0
  %1579 = vmatprep.subr.mxu0 0.0
  %1580 = vmatpush1.msra.mxu0 0.0
  %1581 = vmatprep.subr.mxu0 0.0
  %1582 = vmatpush1.msra.mxu0 0.0
  %1583 = vmatprep.subr.mxu0 0.0
  %1584 = vmatpush1.msra.mxu0 0.0
  %1585 = vmatprep.subr.mxu0 0.0
  %1586 = vmatpush1.msra.mxu0 0.0
  %1587 = vmatprep.subr.mxu0 0.0
  %1588 = vmatpush1.msra.mxu0 0.0
  %1589 = vmatprep.subr.mxu0 0.0
  %1590 = vmatpush1.msra.mxu0 0.0
  %1591 = vmatprep.subr.mxu0 0.0
  %1592 = vmatpush1.msra.mxu0 0.0
  %1593 = vmatprep.subr.mxu0 0.0
  %1594 = vmatpush1.msra.mxu0 0.0
  %1595 = vmatprep.subr.mxu0 0.0
  %1596 = vmatpush1.msra.mxu0 0.0
  %1597 = vmatprep.subr.mxu0 0.0
  %1598 = vmatpush1.msra.mxu0 0.0
  %1599 = vmatprep.subr.mxu0 0.0
  %1600 = vmatpush1.msra.mxu0 0.0
  %1601 = vmatprep.subr.mxu0 0.0
  %1602 = vmatpush1.msra.mxu0 0.0
  %1603 = vmatprep.subr.mxu0 0.0
  %1604 = vmatpush1.msra.mxu0 0.0
  %1605 = vmatprep.subr.mxu0 0.0
  %1606 = vmatpush1.msra.mxu0 %v1206
  %1607 = vmatprep.subr.mxu0 0.0
  %1608 = vmatpush2.msra.mxu0 0.0
  %1609 = vmatprep.subr.mxu0 0.0
  %1610 = vmatpush2.msra.mxu0 0.0
  %1611 = vmatprep.subr.mxu0 0.0
  %1612 = vmatpush2.msra.mxu0 0.0
  %1613 = vmatprep.subr.mxu0 0.0
  %1614 = vmatpush2.msra.mxu0 0.0
  %1615 = vmatprep.subr.mxu0 0.0
  %1616 = vmatpush2.msra.mxu0 0.0
  %1617 = vmatprep.subr.mxu0 0.0
  %1618 = vmatpush2.msra.mxu0 0.0
  %1619 = vmatprep.subr.mxu0 0.0
  %1620 = vmatpush2.msra.mxu0 0.0
  %1621 = vmatprep.subr.mxu0 0.0
  %1622 = vmatpush2.msra.mxu0 0.0
  %1623 = vmatprep.subr.mxu0 0.0
  %1624 = vmatpush2.msra.mxu0 0.0
  %1625 = vmatprep.subr.mxu0 0.0
  %1626 = vmatpush2.msra.mxu0 0.0
  %1627 = vmatprep.subr.mxu0 0.0
  %1628 = vmatpush2.msra.mxu0 0.0
  %1629 = vmatprep.subr.mxu0 0.0
  %1630 = vmatpush2.msra.mxu0 0.0
  %1631 = vmatprep.subr.mxu0 0.0
  %1632 = vmatpush2.msra.mxu0 0.0
  %1633 = vmatprep.subr.mxu0 0.0
  %1634 = vmatpush2.msra.mxu0 0.0
  %1635 = vmatprep.subr.mxu0 0.0
  %1636 = vmatpush2.msra.mxu0 0.0
  %1637 = vmatprep.subr.mxu0 0.0
  %1638 = vmatpush2.msra.mxu0 0.0
  %1639 = vmatprep.mubr.f32.mxu0 0.0
  %1640 = vmatmul.mubr.f32.gmra.mxu0 %v1570
  %v1641 = vpop.f32.mrf.mxu0
  %v1642 = vadd.f32 0.0, %v1641
  %v1643 = vpop.f32.mrf.mxu0
  %1644 = vmatprep.mubr.f32.mxu0 0.0
  %1645 = vmatmul.mubr.f32.gmra.mxu0 %v1573
  %v1646 = vpop.f32.mrf.mxu0
  %v1647 = vadd.f32 0.0, %v1646
  %v1648 = vpop.f32.mrf.mxu0
  %1649 = vdwg.mxu0
  %v1650 = vmul.f32 %v1559, %v1559
  %v1651 = vmul.f32 %v1564, %v1564
  %v1652 = vsub.f32 %v1642, %v1650
  %v1653 = vsub.f32 %v1647, %v1651
  %v1654 = vsub.f32 %v1478, %v1559
  %v1655 = vsub.f32 %v1483, %v1564
  %v1656 = vmax.f32 %v1652, 0.0
  %v1657 = vmax.f32 %v1653, 0.0
  %v1658 = vadd.f32 %v1656, 1e-05
  %v1659 = vadd.f32 %v1657, 1e-05
  %v1660 = vrsqrt.pop %v1658
  %v1661 = vrsqrt.pop %v1659
  %v1662 = vmul.f32 %v1654, %v1660
  %v1663 = vmul.f32 %v1655, %v1661
  %vm1664 = vcmp.gt.f32.partialorder %v1662, 0.0
  %vm1665 = vcmp.gt.f32.partialorder %v1663, 0.0
  %v1666 = vmul.f32 %v1662, 0.2
  %v1667 = vmul.f32 %v1663, 0.2
  %v1668 = vsel %vm1664, %v1662, %v1666
  %v1669 = vsel %vm1665, %v1663, %v1667
  %v1670 = vld [vmem:[%s12] sm:$0xff]
  %v1671 = vld [vmem:[%s11] sm:$0xff]
  %1673 = vset.pattern.permute.xlu0 0
  %1674 = vperm.xlu0 %1673, %v1670
  %v1675 = vpop.permute.xlu0 %1674
  %v1678 = vsel %vm557, %v1671, 0
  %1680 = vmatprep.subr.mxu0 0.0
  %1681 = vmatpush1.msra.mxu0 0.0
  %1682 = vmatprep.subr.mxu0 0.0
  %1683 = vmatpush1.msra.mxu0 0.0
  %1684 = vmatprep.subr.mxu0 0.0
  %1685 = vmatpush1.msra.mxu0 0.0
  %1686 = vmatprep.subr.mxu0 0.0
  %1687 = vmatpush1.msra.mxu0 0.0
  %1688 = vmatprep.subr.mxu0 0.0
  %1689 = vmatpush1.msra.mxu0 0.0
  %1690 = vmatprep.subr.mxu0 0.0
  %1691 = vmatpush1.msra.mxu0 0.0
  %1692 = vmatprep.subr.mxu0 0.0
  %1693 = vmatpush1.msra.mxu0 0.0
  %1694 = vmatprep.subr.mxu0 0.0
  %1695 = vmatpush1.msra.mxu0 0.0
  %1696 = vmatprep.subr.mxu0 0.0
  %1697 = vmatpush1.msra.mxu0 0.0
  %1698 = vmatprep.subr.mxu0 0.0
  %1699 = vmatpush1.msra.mxu0 0.0
  %1700 = vmatprep.subr.mxu0 0.0
  %1701 = vmatpush1.msra.mxu0 0.0
  %1702 = vmatprep.subr.mxu0 0.0
  %1703 = vmatpush1.msra.mxu0 0.0
  %1704 = vmatprep.subr.mxu0 0.0
  %1705 = vmatpush1.msra.mxu0 0.0
  %1706 = vmatprep.subr.mxu0 0.0
  %1707 = vmatpush1.msra.mxu0 0.0
  %1708 = vmatprep.subr.mxu0 0.0
  %1709 = vmatpush1.msra.mxu0 %v1669
  %1710 = vmatprep.subr.mxu0 0.0
  %1711 = vmatpush1.msra.mxu0 %v1668
  %1712 = vmatprep.subr.mxu0 0.0
  %1713 = vmatpush2.msra.mxu0 0.0
  %1714 = vmatprep.subr.mxu0 0.0
  %1715 = vmatpush2.msra.mxu0 0.0
  %1716 = vmatprep.subr.mxu0 0.0
  %1717 = vmatpush2.msra.mxu0 0.0
  %1718 = vmatprep.subr.mxu0 0.0
  %1719 = vmatpush2.msra.mxu0 0.0
  %1720 = vmatprep.subr.mxu0 0.0
  %1721 = vmatpush2.msra.mxu0 0.0
  %1722 = vmatprep.subr.mxu0 0.0
  %1723 = vmatpush2.msra.mxu0 0.0
  %1724 = vmatprep.subr.mxu0 0.0
  %1725 = vmatpush2.msra.mxu0 0.0
  %1726 = vmatprep.subr.mxu0 0.0
  %1727 = vmatpush2.msra.mxu0 0.0
  %1728 = vmatprep.subr.mxu0 0.0
  %1729 = vmatpush2.msra.mxu0 0.0
  %1730 = vmatprep.subr.mxu0 0.0
  %1731 = vmatpush2.msra.mxu0 0.0
  %1732 = vmatprep.subr.mxu0 0.0
  %1733 = vmatpush2.msra.mxu0 0.0
  %1734 = vmatprep.subr.mxu0 0.0
  %1735 = vmatpush2.msra.mxu0 0.0
  %1736 = vmatprep.subr.mxu0 0.0
  %1737 = vmatpush2.msra.mxu0 0.0
  %1738 = vmatprep.subr.mxu0 0.0
  %1739 = vmatpush2.msra.mxu0 0.0
  %1740 = vmatprep.subr.mxu0 0.0
  %1741 = vmatpush2.msra.mxu0 0.0
  %1742 = vmatprep.subr.mxu0 0.0
  %1743 = vmatpush2.msra.mxu0 0.0
  %1744 = vmatprep.mubr.f32.mxu0 0.0
  %1745 = vmatmul.mubr.f32.gmra.mxu0 %v1678
  %v1746 = vpop.f32.mrf.mxu0
  %v1747 = vadd.f32 %v1675, %v1746
  %v1748 = vpop.f32.mrf.mxu0
  %1749 = vdwg.mxu0
  %v1751 = vsel %vm794, %v1747, 0
  %1753 = vmatprep.subr.mxu0 0.0
  %1754 = vmatpush1.msra.mxu0 0.0
  %1755 = vmatprep.subr.mxu0 0.0
  %1756 = vmatpush1.msra.mxu0 0.0
  %1757 = vmatprep.subr.mxu0 0.0
  %1758 = vmatpush1.msra.mxu0 0.0
  %1759 = vmatprep.subr.mxu0 0.0
  %1760 = vmatpush1.msra.mxu0 0.0
  %1761 = vmatprep.subr.mxu0 0.0
  %1762 = vmatpush1.msra.mxu0 0.0
  %1763 = vmatprep.subr.mxu0 0.0
  %1764 = vmatpush1.msra.mxu0 0.0
  %1765 = vmatprep.subr.mxu0 0.0
  %1766 = vmatpush1.msra.mxu0 0.0
  %1767 = vmatprep.subr.mxu0 0.0
  %1768 = vmatpush1.msra.mxu0 0.0
  %1769 = vmatprep.subr.mxu0 0.0
  %1770 = vmatpush1.msra.mxu0 0.0
  %1771 = vmatprep.subr.mxu0 0.0
  %1772 = vmatpush1.msra.mxu0 0.0
  %1773 = vmatprep.subr.mxu0 0.0
  %1774 = vmatpush1.msra.mxu0 0.0
  %1775 = vmatprep.subr.mxu0 0.0
  %1776 = vmatpush1.msra.mxu0 0.0
  %1777 = vmatprep.subr.mxu0 0.0
  %1778 = vmatpush1.msra.mxu0 0.0
  %1779 = vmatprep.subr.mxu0 0.0
  %1780 = vmatpush1.msra.mxu0 0.0
  %1781 = vmatprep.subr.mxu0 0.0
  %1782 = vmatpush1.msra.mxu0 0.0
  %1783 = vmatprep.subr.mxu0 0.0
  %1784 = vmatpush1.msra.mxu0 %v1206
  %1785 = vmatprep.subr.mxu0 0.0
  %1786 = vmatpush2.msra.mxu0 0.0
  %1787 = vmatprep.subr.mxu0 0.0
  %1788 = vmatpush2.msra.mxu0 0.0
  %1789 = vmatprep.subr.mxu0 0.0
  %1790 = vmatpush2.msra.mxu0 0.0
  %1791 = vmatprep.subr.mxu0 0.0
  %1792 = vmatpush2.msra.mxu0 0.0
  %1793 = vmatprep.subr.mxu0 0.0
  %1794 = vmatpush2.msra.mxu0 0.0
  %1795 = vmatprep.subr.mxu0 0.0
  %1796 = vmatpush2.msra.mxu0 0.0
  %1797 = vmatprep.subr.mxu0 0.0
  %1798 = vmatpush2.msra.mxu0 0.0
  %1799 = vmatprep.subr.mxu0 0.0
  %1800 = vmatpush2.msra.mxu0 0.0
  %1801 = vmatprep.subr.mxu0 0.0
  %1802 = vmatpush2.msra.mxu0 0.0
  %1803 = vmatprep.subr.mxu0 0.0
  %1804 = vmatpush2.msra.mxu0 0.0
  %1805 = vmatprep.subr.mxu0 0.0
  %1806 = vmatpush2.msra.mxu0 0.0
  %1807 = vmatprep.subr.mxu0 0.0
  %1808 = vmatpush2.msra.mxu0 0.0
  %1809 = vmatprep.subr.mxu0 0.0
  %1810 = vmatpush2.msra.mxu0 0.0
  %1811 = vmatprep.subr.mxu0 0.0
  %1812 = vmatpush2.msra.mxu0 0.0
  %1813 = vmatprep.subr.mxu0 0.0
  %1814 = vmatpush2.msra.mxu0 0.0
  %1815 = vmatprep.subr.mxu0 0.0
  %1816 = vmatpush2.msra.mxu0 0.0
  %1817 = vmatprep.mubr.f32.mxu0 0.0
  %1818 = vmatmul.mubr.f32.gmra.mxu0 %v1751
  %v1819 = vpop.f32.mrf.mxu0
  %v1820 = vadd.f32 0.0, %v1819
  %v1821 = vpop.f32.mrf.mxu0
  %1822 = vdwg.mxu0
  %v1823 = vmul.f32 %v1747, %v1747
  %v1825 = vsel %vm794, %v1823, 0
  %1827 = vmatprep.subr.mxu0 0.0
  %1828 = vmatpush1.msra.mxu0 0.0
  %1829 = vmatprep.subr.mxu0 0.0
  %1830 = vmatpush1.msra.mxu0 0.0
  %1831 = vmatprep.subr.mxu0 0.0
  %1832 = vmatpush1.msra.mxu0 0.0
  %1833 = vmatprep.subr.mxu0 0.0
  %1834 = vmatpush1.msra.mxu0 0.0
  %1835 = vmatprep.subr.mxu0 0.0
  %1836 = vmatpush1.msra.mxu0 0.0
  %1837 = vmatprep.subr.mxu0 0.0
  %1838 = vmatpush1.msra.mxu0 0.0
  %1839 = vmatprep.subr.mxu0 0.0
  %1840 = vmatpush1.msra.mxu0 0.0
  %1841 = vmatprep.subr.mxu0 0.0
  %1842 = vmatpush1.msra.mxu0 0.0
  %1843 = vmatprep.subr.mxu0 0.0
  %1844 = vmatpush1.msra.mxu0 0.0
  %1845 = vmatprep.subr.mxu0 0.0
  %1846 = vmatpush1.msra.mxu0 0.0
  %1847 = vmatprep.subr.mxu0 0.0
  %1848 = vmatpush1.msra.mxu0 0.0
  %1849 = vmatprep.subr.mxu0 0.0
  %1850 = vmatpush1.msra.mxu0 0.0
  %1851 = vmatprep.subr.mxu0 0.0
  %1852 = vmatpush1.msra.mxu0 0.0
  %1853 = vmatprep.subr.mxu0 0.0
  %1854 = vmatpush1.msra.mxu0 0.0
  %1855 = vmatprep.subr.mxu0 0.0
  %1856 = vmatpush1.msra.mxu0 0.0
  %1857 = vmatprep.subr.mxu0 0.0
  %1858 = vmatpush1.msra.mxu0 %v1206
  %1859 = vmatprep.subr.mxu0 0.0
  %1860 = vmatpush2.msra.mxu0 0.0
  %1861 = vmatprep.subr.mxu0 0.0
  %1862 = vmatpush2.msra.mxu0 0.0
  %1863 = vmatprep.subr.mxu0 0.0
  %1864 = vmatpush2.msra.mxu0 0.0
  %1865 = vmatprep.subr.mxu0 0.0
  %1866 = vmatpush2.msra.mxu0 0.0
  %1867 = vmatprep.subr.mxu0 0.0
  %1868 = vmatpush2.msra.mxu0 0.0
  %1869 = vmatprep.subr.mxu0 0.0
  %1870 = vmatpush2.msra.mxu0 0.0
  %1871 = vmatprep.subr.mxu0 0.0
  %1872 = vmatpush2.msra.mxu0 0.0
  %1873 = vmatprep.subr.mxu0 0.0
  %1874 = vmatpush2.msra.mxu0 0.0
  %1875 = vmatprep.subr.mxu0 0.0
  %1876 = vmatpush2.msra.mxu0 0.0
  %1877 = vmatprep.subr.mxu0 0.0
  %1878 = vmatpush2.msra.mxu0 0.0
  %1879 = vmatprep.subr.mxu0 0.0
  %1880 = vmatpush2.msra.mxu0 0.0
  %1881 = vmatprep.subr.mxu0 0.0
  %1882 = vmatpush2.msra.mxu0 0.0
  %1883 = vmatprep.subr.mxu0 0.0
  %1884 = vmatpush2.msra.mxu0 0.0
  %1885 = vmatprep.subr.mxu0 0.0
  %1886 = vmatpush2.msra.mxu0 0.0
  %1887 = vmatprep.subr.mxu0 0.0
  %1888 = vmatpush2.msra.mxu0 0.0
  %1889 = vmatprep.subr.mxu0 0.0
  %1890 = vmatpush2.msra.mxu0 0.0
  %1891 = vmatprep.mubr.f32.mxu0 0.0
  %1892 = vmatmul.mubr.f32.gmra.mxu0 %v1825
  %v1893 = vpop.f32.mrf.mxu0
  %v1894 = vadd.f32 0.0, %v1893
  %v1895 = vpop.f32.mrf.mxu0
  %1896 = vdwg.mxu0
  %v1897 = vmul.f32 %v1820, %v1820
  %v1898 = vsub.f32 %v1894, %v1897
  %v1899 = vsub.f32 %v1747, %v1820
  %v1900 = vmax.f32 %v1898, 0.0
  %v1901 = vadd.f32 %v1900, 1e-05
  %v1902 = vrsqrt.pop %v1901
  %v1903 = vmul.f32 %v1899, %v1902
  %vm1904 = vcmp.gt.f32.partialorder %v1903, 0.0
  %v1905 = vmul.f32 %v1903, 0.2
  %v1906 = vsel %vm1904, %v1903, %v1905
  %v1907 = vld [vmem:[%s14] sm:$0xff]
  %v1908 = vld [vmem:[%s13] sm:$0xff]
  %1910 = vset.pattern.permute.xlu0 0
  %1911 = vperm.xlu0 %1910, %v1907
  %v1912 = vpop.permute.xlu0 %1911
  %v1915 = vsel %vm794, %v1908, 0
  %1917 = vmatprep.subr.mxu0 0.0
  %1918 = vmatpush1.msra.mxu0 0.0
  %1919 = vmatprep.subr.mxu0 0.0
  %1920 = vmatpush1.msra.mxu0 0.0
  %1921 = vmatprep.subr.mxu0 0.0
  %1922 = vmatpush1.msra.mxu0 0.0
  %1923 = vmatprep.subr.mxu0 0.0
  %1924 = vmatpush1.msra.mxu0 0.0
  %1925 = vmatprep.subr.mxu0 0.0
  %1926 = vmatpush1.msra.mxu0 0.0
  %1927 = vmatprep.subr.mxu0 0.0
  %1928 = vmatpush1.msra.mxu0 0.0
  %1929 = vmatprep.subr.mxu0 0.0
  %1930 = vmatpush1.msra.mxu0 0.0
  %1931 = vmatprep.subr.mxu0 0.0
  %1932 = vmatpush1.msra.mxu0 0.0
  %1933 = vmatprep.subr.mxu0 0.0
  %1934 = vmatpush1.msra.mxu0 0.0
  %1935 = vmatprep.subr.mxu0 0.0
  %1936 = vmatpush1.msra.mxu0 0.0
  %1937 = vmatprep.subr.mxu0 0.0
  %1938 = vmatpush1.msra.mxu0 0.0
  %1939 = vmatprep.subr.mxu0 0.0
  %1940 = vmatpush1.msra.mxu0 0.0
  %1941 = vmatprep.subr.mxu0 0.0
  %1942 = vmatpush1.msra.mxu0 0.0
  %1943 = vmatprep.subr.mxu0 0.0
  %1944 = vmatpush1.msra.mxu0 0.0
  %1945 = vmatprep.subr.mxu0 0.0
  %1946 = vmatpush1.msra.mxu0 0.0
  %1947 = vmatprep.subr.mxu0 0.0
  %1948 = vmatpush1.msra.mxu0 %v1906
  %1949 = vmatprep.subr.mxu0 0.0
  %1950 = vmatpush2.msra.mxu0 0.0
  %1951 = vmatprep.subr.mxu0 0.0
  %1952 = vmatpush2.msra.mxu0 0.0
  %1953 = vmatprep.subr.mxu0 0.0
  %1954 = vmatpush2.msra.mxu0 0.0
  %1955 = vmatprep.subr.mxu0 0.0
  %1956 = vmatpush2.msra.mxu0 0.0
  %1957 = vmatprep.subr.mxu0 0.0
  %1958 = vmatpush2.msra.mxu0 0.0
  %1959 = vmatprep.subr.mxu0 0.0
  %1960 = vmatpush2.msra.mxu0 0.0
  %1961 = vmatprep.subr.mxu0 0.0
  %1962 = vmatpush2.msra.mxu0 0.0
  %1963 = vmatprep.subr.mxu0 0.0
  %1964 = vmatpush2.msra.mxu0 0.0
  %1965 = vmatprep.subr.mxu0 0.0
  %1966 = vmatpush2.msra.mxu0 0.0
  %1967 = vmatprep.subr.mxu0 0.0
  %1968 = vmatpush2.msra.mxu0 0.0
  %1969 = vmatprep.subr.mxu0 0.0
  %1970 = vmatpush2.msra.mxu0 0.0
  %1971 = vmatprep.subr.mxu0 0.0
  %1972 = vmatpush2.msra.mxu0 0.0
  %1973 = vmatprep.subr.mxu0 0.0
  %1974 = vmatpush2.msra.mxu0 0.0
  %1975 = vmatprep.subr.mxu0 0.0
  %1976 = vmatpush2.msra.mxu0 0.0
  %1977 = vmatprep.subr.mxu0 0.0
  %1978 = vmatpush2.msra.mxu0 0.0
  %1979 = vmatprep.subr.mxu0 0.0
  %1980 = vmatpush2.msra.mxu0 0.0
  %1981 = vmatprep.mubr.f32.mxu0 0.0
  %1982 = vmatmul.mubr.f32.gmra.mxu0 %v1915
  %v1983 = vpop.f32.mrf.mxu0
  %v1984 = vadd.f32 %v1912, %v1983
  %v1985 = vpop.f32.mrf.mxu0
  %1986 = vdwg.mxu0
  %1987 = vst.msk [vmem:[%s25] sm:$0xff] %vm794, %v1984
  %v1988 = vld [vmem:[%s0] sm:$0xf]
  %v1989 = vld [vmem:[%s16] sm:$0xff]
  %v1990 = vld [vmem:[%s15] sm:$0xff]
  %v1991 = vld [vmem:[%s1] sm:$0xff]
  %v1992 = vld [vmem:[%s1 + $0x8] sm:$0xff]
  %v1993 = vld [vmem:[%s1 + $0x10] sm:$0xff]
  %v1994 = vld [vmem:[%s1 + $0x18] sm:$0xff]
  %v1996 = vsel %vm89, %v1988, 0
  %1998 = vmatprep.subr.mxu0 0.0
  %1999 = vmatpush1.msra.mxu0 0.0
  %2000 = vmatprep.subr.mxu0 0.0
  %2001 = vmatpush1.msra.mxu0 0.0
  %2002 = vmatprep.subr.mxu0 0.0
  %2003 = vmatpush1.msra.mxu0 0.0
  %2004 = vmatprep.subr.mxu0 0.0
  %2005 = vmatpush1.msra.mxu0 0.0
  %2006 = vmatprep.subr.mxu0 0.0
  %2007 = vmatpush1.msra.mxu0 0.0
  %2008 = vmatprep.subr.mxu0 0.0
  %2009 = vmatpush1.msra.mxu0 0.0
  %2010 = vmatprep.subr.mxu0 0.0
  %2011 = vmatpush1.msra.mxu0 0.0
  %2012 = vmatprep.subr.mxu0 0.0
  %2013 = vmatpush1.msra.mxu0 0.0
  %2014 = vmatprep.subr.mxu0 0.0
  %2015 = vmatpush1.msra.mxu0 0.0
  %2016 = vmatprep.subr.mxu0 0.0
  %2017 = vmatpush1.msra.mxu0 0.0
  %2018 = vmatprep.subr.mxu0 0.0
  %2019 = vmatpush1.msra.mxu0 0.0
  %2020 = vmatprep.subr.mxu0 0.0
  %2021 = vmatpush1.msra.mxu0 0.0
  %2022 = vmatprep.subr.mxu0 0.0
  %2023 = vmatpush1.msra.mxu0 %v1994
  %2024 = vmatprep.subr.mxu0 0.0
  %2025 = vmatpush1.msra.mxu0 %v1993
  %2026 = vmatprep.subr.mxu0 0.0
  %2027 = vmatpush1.msra.mxu0 %v1992
  %2028 = vmatprep.subr.mxu0 0.0
  %2029 = vmatpush1.msra.mxu0 %v1991
  %2030 = vmatprep.subr.mxu0 0.0
  %2031 = vmatpush2.msra.mxu0 0.0
  %2032 = vmatprep.subr.mxu0 0.0
  %2033 = vmatpush2.msra.mxu0 0.0
  %2034 = vmatprep.subr.mxu0 0.0
  %2035 = vmatpush2.msra.mxu0 0.0
  %2036 = vmatprep.subr.mxu0 0.0
  %2037 = vmatpush2.msra.mxu0 0.0
  %2038 = vmatprep.subr.mxu0 0.0
  %2039 = vmatpush2.msra.mxu0 0.0
  %2040 = vmatprep.subr.mxu0 0.0
  %2041 = vmatpush2.msra.mxu0 0.0
  %2042 = vmatprep.subr.mxu0 0.0
  %2043 = vmatpush2.msra.mxu0 0.0
  %2044 = vmatprep.subr.mxu0 0.0
  %2045 = vmatpush2.msra.mxu0 0.0
  %2046 = vmatprep.subr.mxu0 0.0
  %2047 = vmatpush2.msra.mxu0 0.0
  %2048 = vmatprep.subr.mxu0 0.0
  %2049 = vmatpush2.msra.mxu0 0.0
  %2050 = vmatprep.subr.mxu0 0.0
  %2051 = vmatpush2.msra.mxu0 0.0
  %2052 = vmatprep.subr.mxu0 0.0
  %2053 = vmatpush2.msra.mxu0 0.0
  %2054 = vmatprep.subr.mxu0 0.0
  %2055 = vmatpush2.msra.mxu0 0.0
  %2056 = vmatprep.subr.mxu0 0.0
  %2057 = vmatpush2.msra.mxu0 0.0
  %2058 = vmatprep.subr.mxu0 0.0
  %2059 = vmatpush2.msra.mxu0 0.0
  %2060 = vmatprep.subr.mxu0 0.0
  %2061 = vmatpush2.msra.mxu0 0.0
  %2062 = vmatprep.mubr.f32.mxu0 0.0
  %2063 = vmatmul.mubr.f32.gmra.mxu0 %v1996
  %v2064 = vpop.f32.mrf.mxu0
  %v2065 = vadd.f32 0.0, %v2064
  %v2066 = vpop.f32.mrf.mxu0
  %2067 = vdwg.mxu0
  %v2069 = vsel %vm163, %v1990, 0
  %v2072 = vsel %vm167, %v2065, 0
  %2074 = vmatprep.subr.mxu0 0.0
  %2075 = vmatpush1.msra.mxu0 0.0
  %2076 = vmatprep.subr.mxu0 0.0
  %2077 = vmatpush1.msra.mxu0 0.0
  %2078 = vmatprep.subr.mxu0 0.0
  %2079 = vmatpush1.msra.mxu0 0.0
  %2080 = vmatprep.subr.mxu0 0.0
  %2081 = vmatpush1.msra.mxu0 0.0
  %2082 = vmatprep.subr.mxu0 0.0
  %2083 = vmatpush1.msra.mxu0 0.0
  %2084 = vmatprep.subr.mxu0 0.0
  %2085 = vmatpush1.msra.mxu0 0.0
  %2086 = vmatprep.subr.mxu0 0.0
  %2087 = vmatpush1.msra.mxu0 0.0
  %2088 = vmatprep.subr.mxu0 0.0
  %2089 = vmatpush1.msra.mxu0 0.0
  %2090 = vmatprep.subr.mxu0 0.0
  %2091 = vmatpush1.msra.mxu0 0.0
  %2092 = vmatprep.subr.mxu0 0.0
  %2093 = vmatpush1.msra.mxu0 0.0
  %2094 = vmatprep.subr.mxu0 0.0
  %2095 = vmatpush1.msra.mxu0 0.0
  %2096 = vmatprep.subr.mxu0 0.0
  %2097 = vmatpush1.msra.mxu0 0.0
  %2098 = vmatprep.subr.mxu0 0.0
  %2099 = vmatpush1.msra.mxu0 0.0
  %2100 = vmatprep.subr.mxu0 0.0
  %2101 = vmatpush1.msra.mxu0 0.0
  %2102 = vmatprep.subr.mxu0 0.0
  %2103 = vmatpush1.msra.mxu0 0.0
  %2104 = vmatprep.subr.mxu0 0.0
  %2105 = vmatpush1.msra.mxu0 %v2072
  %2106 = vmatprep.subr.mxu0 0.0
  %2107 = vmatpush2.msra.mxu0 0.0
  %2108 = vmatprep.subr.mxu0 0.0
  %2109 = vmatpush2.msra.mxu0 0.0
  %2110 = vmatprep.subr.mxu0 0.0
  %2111 = vmatpush2.msra.mxu0 0.0
  %2112 = vmatprep.subr.mxu0 0.0
  %2113 = vmatpush2.msra.mxu0 0.0
  %2114 = vmatprep.subr.mxu0 0.0
  %2115 = vmatpush2.msra.mxu0 0.0
  %2116 = vmatprep.subr.mxu0 0.0
  %2117 = vmatpush2.msra.mxu0 0.0
  %2118 = vmatprep.subr.mxu0 0.0
  %2119 = vmatpush2.msra.mxu0 0.0
  %2120 = vmatprep.subr.mxu0 0.0
  %2121 = vmatpush2.msra.mxu0 0.0
  %2122 = vmatprep.subr.mxu0 0.0
  %2123 = vmatpush2.msra.mxu0 0.0
  %2124 = vmatprep.subr.mxu0 0.0
  %2125 = vmatpush2.msra.mxu0 0.0
  %2126 = vmatprep.subr.mxu0 0.0
  %2127 = vmatpush2.msra.mxu0 0.0
  %2128 = vmatprep.subr.mxu0 0.0
  %2129 = vmatpush2.msra.mxu0 0.0
  %2130 = vmatprep.subr.mxu0 0.0
  %2131 = vmatpush2.msra.mxu0 0.0
  %2132 = vmatprep.subr.mxu0 0.0
  %2133 = vmatpush2.msra.mxu0 0.0
  %2134 = vmatprep.subr.mxu0 0.0
  %2135 = vmatpush2.msra.mxu0 0.0
  %2136 = vmatprep.subr.mxu0 0.0
  %2137 = vmatpush2.msra.mxu0 0.0
  %2138 = vmatprep.mubr.f32.mxu0 0.0
  %2139 = vmatmul.mubr.f32.gmra.mxu0 %v2069
  %v2140 = vpop.f32.mrf.mxu0
  %v2141 = vadd.f32 0.0, %v2140
  %v2142 = vpop.f32.mrf.mxu0
  %2143 = vdwg.mxu0
  %2145 = vset.pattern.permute.xlu0 0
  %2146 = vperm.xlu0 %2145, %v1989
  %v2147 = vpop.permute.xlu0 %2146
  %v2149 = vadd.f32 %v2147, %v2141
  %s2150 = scalar_lea.vmem %s15, 8
  %v2151 = vld [vmem:[%s2150] sm:$0xff]
  %v2152 = vld [vmem:[%s249] sm:$0xff]
  %v2153 = vld [vmem:[%s249 + $0x8] sm:$0xff]
  %v2154 = vld [vmem:[%s249 + $0x10] sm:$0xff]
  %v2155 = vld [vmem:[%s249 + $0x18] sm:$0xff]
  %2156 = vmatprep.subr.mxu0 0.0
  %2157 = vmatpush1.msra.mxu0 0.0
  %2158 = vmatprep.subr.mxu0 0.0
  %2159 = vmatpush1.msra.mxu0 0.0
  %2160 = vmatprep.subr.mxu0 0.0
  %2161 = vmatpush1.msra.mxu0 0.0
  %2162 = vmatprep.subr.mxu0 0.0
  %2163 = vmatpush1.msra.mxu0 0.0
  %2164 = vmatprep.subr.mxu0 0.0
  %2165 = vmatpush1.msra.mxu0 0.0
  %2166 = vmatprep.subr.mxu0 0.0
  %2167 = vmatpush1.msra.mxu0 0.0
  %2168 = vmatprep.subr.mxu0 0.0
  %2169 = vmatpush1.msra.mxu0 0.0
  %2170 = vmatprep.subr.mxu0 0.0
  %2171 = vmatpush1.msra.mxu0 0.0
  %2172 = vmatprep.subr.mxu0 0.0
  %2173 = vmatpush1.msra.mxu0 0.0
  %2174 = vmatprep.subr.mxu0 0.0
  %2175 = vmatpush1.msra.mxu0 0.0
  %2176 = vmatprep.subr.mxu0 0.0
  %2177 = vmatpush1.msra.mxu0 0.0
  %2178 = vmatprep.subr.mxu0 0.0
  %2179 = vmatpush1.msra.mxu0 0.0
  %2180 = vmatprep.subr.mxu0 0.0
  %2181 = vmatpush1.msra.mxu0 %v2155
  %2182 = vmatprep.subr.mxu0 0.0
  %2183 = vmatpush1.msra.mxu0 %v2154
  %2184 = vmatprep.subr.mxu0 0.0
  %2185 = vmatpush1.msra.mxu0 %v2153
  %2186 = vmatprep.subr.mxu0 0.0
  %2187 = vmatpush1.msra.mxu0 %v2152
  %2188 = vmatprep.subr.mxu0 0.0
  %2189 = vmatpush2.msra.mxu0 0.0
  %2190 = vmatprep.subr.mxu0 0.0
  %2191 = vmatpush2.msra.mxu0 0.0
  %2192 = vmatprep.subr.mxu0 0.0
  %2193 = vmatpush2.msra.mxu0 0.0
  %2194 = vmatprep.subr.mxu0 0.0
  %2195 = vmatpush2.msra.mxu0 0.0
  %2196 = vmatprep.subr.mxu0 0.0
  %2197 = vmatpush2.msra.mxu0 0.0
  %2198 = vmatprep.subr.mxu0 0.0
  %2199 = vmatpush2.msra.mxu0 0.0
  %2200 = vmatprep.subr.mxu0 0.0
  %2201 = vmatpush2.msra.mxu0 0.0
  %2202 = vmatprep.subr.mxu0 0.0
  %2203 = vmatpush2.msra.mxu0 0.0
  %2204 = vmatprep.subr.mxu0 0.0
  %2205 = vmatpush2.msra.mxu0 0.0
  %2206 = vmatprep.subr.mxu0 0.0
  %2207 = vmatpush2.msra.mxu0 0.0
  %2208 = vmatprep.subr.mxu0 0.0
  %2209 = vmatpush2.msra.mxu0 0.0
  %2210 = vmatprep.subr.mxu0 0.0
  %2211 = vmatpush2.msra.mxu0 0.0
  %2212 = vmatprep.subr.mxu0 0.0
  %2213 = vmatpush2.msra.mxu0 0.0
  %2214 = vmatprep.subr.mxu0 0.0
  %2215 = vmatpush2.msra.mxu0 0.0
  %2216 = vmatprep.subr.mxu0 0.0
  %2217 = vmatpush2.msra.mxu0 0.0
  %2218 = vmatprep.subr.mxu0 0.0
  %2219 = vmatpush2.msra.mxu0 0.0
  %2220 = vmatprep.mubr.f32.mxu0 0.0
  %2221 = vmatmul.mubr.f32.gmra.mxu0 %v1996
  %v2222 = vpop.f32.mrf.mxu0
  %v2223 = vadd.f32 0.0, %v2222
  %v2224 = vpop.f32.mrf.mxu0
  %2225 = vdwg.mxu0
  %v2227 = vsel %vm163, %v2151, 0
  %v2230 = vsel %vm167, %v2223, 0
  %2232 = vmatprep.subr.mxu0 0.0
  %2233 = vmatpush1.msra.mxu0 0.0
  %2234 = vmatprep.subr.mxu0 0.0
  %2235 = vmatpush1.msra.mxu0 0.0
  %2236 = vmatprep.subr.mxu0 0.0
  %2237 = vmatpush1.msra.mxu0 0.0
  %2238 = vmatprep.subr.mxu0 0.0
  %2239 = vmatpush1.msra.mxu0 0.0
  %2240 = vmatprep.subr.mxu0 0.0
  %2241 = vmatpush1.msra.mxu0 0.0
  %2242 = vmatprep.subr.mxu0 0.0
  %2243 = vmatpush1.msra.mxu0 0.0
  %2244 = vmatprep.subr.mxu0 0.0
  %2245 = vmatpush1.msra.mxu0 0.0
  %2246 = vmatprep.subr.mxu0 0.0
  %2247 = vmatpush1.msra.mxu0 0.0
  %2248 = vmatprep.subr.mxu0 0.0
  %2249 = vmatpush1.msra.mxu0 0.0
  %2250 = vmatprep.subr.mxu0 0.0
  %2251 = vmatpush1.msra.mxu0 0.0
  %2252 = vmatprep.subr.mxu0 0.0
  %2253 = vmatpush1.msra.mxu0 0.0
  %2254 = vmatprep.subr.mxu0 0.0
  %2255 = vmatpush1.msra.mxu0 0.0
  %2256 = vmatprep.subr.mxu0 0.0
  %2257 = vmatpush1.msra.mxu0 0.0
  %2258 = vmatprep.subr.mxu0 0.0
  %2259 = vmatpush1.msra.mxu0 0.0
  %2260 = vmatprep.subr.mxu0 0.0
  %2261 = vmatpush1.msra.mxu0 0.0
  %2262 = vmatprep.subr.mxu0 0.0
  %2263 = vmatpush1.msra.mxu0 %v2230
  %2264 = vmatprep.subr.mxu0 0.0
  %2265 = vmatpush2.msra.mxu0 0.0
  %2266 = vmatprep.subr.mxu0 0.0
  %2267 = vmatpush2.msra.mxu0 0.0
  %2268 = vmatprep.subr.mxu0 0.0
  %2269 = vmatpush2.msra.mxu0 0.0
  %2270 = vmatprep.subr.mxu0 0.0
  %2271 = vmatpush2.msra.mxu0 0.0
  %2272 = vmatprep.subr.mxu0 0.0
  %2273 = vmatpush2.msra.mxu0 0.0
  %2274 = vmatprep.subr.mxu0 0.0
  %2275 = vmatpush2.msra.mxu0 0.0
  %2276 = vmatprep.subr.mxu0 0.0
  %2277 = vmatpush2.msra.mxu0 0.0
  %2278 = vmatprep.subr.mxu0 0.0
  %2279 = vmatpush2.msra.mxu0 0.0
  %2280 = vmatprep.subr.mxu0 0.0
  %2281 = vmatpush2.msra.mxu0 0.0
  %2282 = vmatprep.subr.mxu0 0.0
  %2283 = vmatpush2.msra.mxu0 0.0
  %2284 = vmatprep.subr.mxu0 0.0
  %2285 = vmatpush2.msra.mxu0 0.0
  %2286 = vmatprep.subr.mxu0 0.0
  %2287 = vmatpush2.msra.mxu0 0.0
  %2288 = vmatprep.subr.mxu0 0.0
  %2289 = vmatpush2.msra.mxu0 0.0
  %2290 = vmatprep.subr.mxu0 0.0
  %2291 = vmatpush2.msra.mxu0 0.0
  %2292 = vmatprep.subr.mxu0 0.0
  %2293 = vmatpush2.msra.mxu0 0.0
  %2294 = vmatprep.subr.mxu0 0.0
  %2295 = vmatpush2.msra.mxu0 0.0
  %2296 = vmatprep.mubr.f32.mxu0 0.0
  %2297 = vmatmul.mubr.f32.gmra.mxu0 %v2227
  %v2298 = vpop.f32.mrf.mxu0
  %v2299 = vadd.f32 0.0, %v2298
  %v2300 = vpop.f32.mrf.mxu0
  %2301 = vdwg.mxu0
  %v2302 = vadd.f32 %v2149, %v2299
  %s2303 = scalar_lea.vmem %s15, 16
  %v2304 = vld [vmem:[%s2303] sm:$0xff]
  %v2305 = vld [vmem:[%s403] sm:$0xff]
  %v2306 = vld [vmem:[%s403 + $0x8] sm:$0xff]
  %v2307 = vld [vmem:[%s403 + $0x10] sm:$0xff]
  %v2308 = vld [vmem:[%s403 + $0x18] sm:$0xff]
  %2309 = vmatprep.subr.mxu0 0.0
  %2310 = vmatpush1.msra.mxu0 0.0
  %2311 = vmatprep.subr.mxu0 0.0
  %2312 = vmatpush1.msra.mxu0 0.0
  %2313 = vmatprep.subr.mxu0 0.0
  %2314 = vmatpush1.msra.mxu0 0.0
  %2315 = vmatprep.subr.mxu0 0.0
  %2316 = vmatpush1.msra.mxu0 0.0
  %2317 = vmatprep.subr.mxu0 0.0
  %2318 = vmatpush1.msra.mxu0 0.0
  %2319 = vmatprep.subr.mxu0 0.0
  %2320 = vmatpush1.msra.mxu0 0.0
  %2321 = vmatprep.subr.mxu0 0.0
  %2322 = vmatpush1.msra.mxu0 0.0
  %2323 = vmatprep.subr.mxu0 0.0
  %2324 = vmatpush1.msra.mxu0 0.0
  %2325 = vmatprep.subr.mxu0 0.0
  %2326 = vmatpush1.msra.mxu0 0.0
  %2327 = vmatprep.subr.mxu0 0.0
  %2328 = vmatpush1.msra.mxu0 0.0
  %2329 = vmatprep.subr.mxu0 0.0
  %2330 = vmatpush1.msra.mxu0 0.0
  %2331 = vmatprep.subr.mxu0 0.0
  %2332 = vmatpush1.msra.mxu0 0.0
  %2333 = vmatprep.subr.mxu0 0.0
  %2334 = vmatpush1.msra.mxu0 %v2308
  %2335 = vmatprep.subr.mxu0 0.0
  %2336 = vmatpush1.msra.mxu0 %v2307
  %2337 = vmatprep.subr.mxu0 0.0
  %2338 = vmatpush1.msra.mxu0 %v2306
  %2339 = vmatprep.subr.mxu0 0.0
  %2340 = vmatpush1.msra.mxu0 %v2305
  %2341 = vmatprep.subr.mxu0 0.0
  %2342 = vmatpush2.msra.mxu0 0.0
  %2343 = vmatprep.subr.mxu0 0.0
  %2344 = vmatpush2.msra.mxu0 0.0
  %2345 = vmatprep.subr.mxu0 0.0
  %2346 = vmatpush2.msra.mxu0 0.0
  %2347 = vmatprep.subr.mxu0 0.0
  %2348 = vmatpush2.msra.mxu0 0.0
  %2349 = vmatprep.subr.mxu0 0.0
  %2350 = vmatpush2.msra.mxu0 0.0
  %2351 = vmatprep.subr.mxu0 0.0
  %2352 = vmatpush2.msra.mxu0 0.0
  %2353 = vmatprep.subr.mxu0 0.0
  %2354 = vmatpush2.msra.mxu0 0.0
  %2355 = vmatprep.subr.mxu0 0.0
  %2356 = vmatpush2.msra.mxu0 0.0
  %2357 = vmatprep.subr.mxu0 0.0
  %2358 = vmatpush2.msra.mxu0 0.0
  %2359 = vmatprep.subr.mxu0 0.0
  %2360 = vmatpush2.msra.mxu0 0.0
  %2361 = vmatprep.subr.mxu0 0.0
  %2362 = vmatpush2.msra.mxu0 0.0
  %2363 = vmatprep.subr.mxu0 0.0
  %2364 = vmatpush2.msra.mxu0 0.0
  %2365 = vmatprep.subr.mxu0 0.0
  %2366 = vmatpush2.msra.mxu0 0.0
  %2367 = vmatprep.subr.mxu0 0.0
  %2368 = vmatpush2.msra.mxu0 0.0
  %2369 = vmatprep.subr.mxu0 0.0
  %2370 = vmatpush2.msra.mxu0 0.0
  %2371 = vmatprep.subr.mxu0 0.0
  %2372 = vmatpush2.msra.mxu0 0.0
  %2373 = vmatprep.mubr.f32.mxu0 0.0
  %2374 = vmatmul.mubr.f32.gmra.mxu0 %v1996
  %v2375 = vpop.f32.mrf.mxu0
  %v2376 = vadd.f32 0.0, %v2375
  %v2377 = vpop.f32.mrf.mxu0
  %2378 = vdwg.mxu0
  %v2380 = vsel %vm163, %v2304, 0
  %v2383 = vsel %vm167, %v2376, 0
  %2385 = vmatprep.subr.mxu0 0.0
  %2386 = vmatpush1.msra.mxu0 0.0
  %2387 = vmatprep.subr.mxu0 0.0
  %2388 = vmatpush1.msra.mxu0 0.0
  %2389 = vmatprep.subr.mxu0 0.0
  %2390 = vmatpush1.msra.mxu0 0.0
  %2391 = vmatprep.subr.mxu0 0.0
  %2392 = vmatpush1.msra.mxu0 0.0
  %2393 = vmatprep.subr.mxu0 0.0
  %2394 = vmatpush1.msra.mxu0 0.0
  %2395 = vmatprep.subr.mxu0 0.0
  %2396 = vmatpush1.msra.mxu0 0.0
  %2397 = vmatprep.subr.mxu0 0.0
  %2398 = vmatpush1.msra.mxu0 0.0
  %2399 = vmatprep.subr.mxu0 0.0
  %2400 = vmatpush1.msra.mxu0 0.0
  %2401 = vmatprep.subr.mxu0 0.0
  %2402 = vmatpush1.msra.mxu0 0.0
  %2403 = vmatprep.subr.mxu0 0.0
  %2404 = vmatpush1.msra.mxu0 0.0
  %2405 = vmatprep.subr.mxu0 0.0
  %2406 = vmatpush1.msra.mxu0 0.0
  %2407 = vmatprep.subr.mxu0 0.0
  %2408 = vmatpush1.msra.mxu0 0.0
  %2409 = vmatprep.subr.mxu0 0.0
  %2410 = vmatpush1.msra.mxu0 0.0
  %2411 = vmatprep.subr.mxu0 0.0
  %2412 = vmatpush1.msra.mxu0 0.0
  %2413 = vmatprep.subr.mxu0 0.0
  %2414 = vmatpush1.msra.mxu0 0.0
  %2415 = vmatprep.subr.mxu0 0.0
  %2416 = vmatpush1.msra.mxu0 %v2383
  %2417 = vmatprep.subr.mxu0 0.0
  %2418 = vmatpush2.msra.mxu0 0.0
  %2419 = vmatprep.subr.mxu0 0.0
  %2420 = vmatpush2.msra.mxu0 0.0
  %2421 = vmatprep.subr.mxu0 0.0
  %2422 = vmatpush2.msra.mxu0 0.0
  %2423 = vmatprep.subr.mxu0 0.0
  %2424 = vmatpush2.msra.mxu0 0.0
  %2425 = vmatprep.subr.mxu0 0.0
  %2426 = vmatpush2.msra.mxu0 0.0
  %2427 = vmatprep.subr.mxu0 0.0
  %2428 = vmatpush2.msra.mxu0 0.0
  %2429 = vmatprep.subr.mxu0 0.0
  %2430 = vmatpush2.msra.mxu0 0.0
  %2431 = vmatprep.subr.mxu0 0.0
  %2432 = vmatpush2.msra.mxu0 0.0
  %2433 = vmatprep.subr.mxu0 0.0
  %2434 = vmatpush2.msra.mxu0 0.0
  %2435 = vmatprep.subr.mxu0 0.0
  %2436 = vmatpush2.msra.mxu0 0.0
  %2437 = vmatprep.subr.mxu0 0.0
  %2438 = vmatpush2.msra.mxu0 0.0
  %2439 = vmatprep.subr.mxu0 0.0
  %2440 = vmatpush2.msra.mxu0 0.0
  %2441 = vmatprep.subr.mxu0 0.0
  %2442 = vmatpush2.msra.mxu0 0.0
  %2443 = vmatprep.subr.mxu0 0.0
  %2444 = vmatpush2.msra.mxu0 0.0
  %2445 = vmatprep.subr.mxu0 0.0
  %2446 = vmatpush2.msra.mxu0 0.0
  %2447 = vmatprep.subr.mxu0 0.0
  %2448 = vmatpush2.msra.mxu0 0.0
  %2449 = vmatprep.mubr.f32.mxu0 0.0
  %2450 = vmatmul.mubr.f32.gmra.mxu0 %v2380
  %v2451 = vpop.f32.mrf.mxu0
  %v2452 = vadd.f32 0.0, %v2451
  %v2453 = vpop.f32.mrf.mxu0
  %2454 = vdwg.mxu0
  %v2455 = vadd.f32 %v2302, %v2452
  %vm2456 = vcmp.gt.f32.partialorder %v2455, 0.0
  %v2457 = vmul.f32 %v2455, 0.2
  %v2458 = vsel %vm2456, %v2455, %v2457
  %v2459 = vld [vmem:[%s18] sm:$0xff]
  %v2460 = vld [vmem:[%s18 + $0x8] sm:$0xff]
  %v2461 = vld [vmem:[%s17] sm:$0xff]
  %v2462 = vld [vmem:[%s17 + $0x8] sm:$0xff]
  %v2463 = vld [vmem:[%s5] sm:$0xff]
  %v2464 = vld [vmem:[%s5 + $0x8] sm:$0xff]
  %v2466 = vsel %vm557, %v2458, 0
  %2468 = vmatprep.subr.mxu0 0.0
  %2469 = vmatpush1.msra.mxu0 0.0
  %2470 = vmatprep.subr.mxu0 0.0
  %2471 = vmatpush1.msra.mxu0 0.0
  %2472 = vmatprep.subr.mxu0 0.0
  %2473 = vmatpush1.msra.mxu0 0.0
  %2474 = vmatprep.subr.mxu0 0.0
  %2475 = vmatpush1.msra.mxu0 0.0
  %2476 = vmatprep.subr.mxu0 0.0
  %2477 = vmatpush1.msra.mxu0 0.0
  %2478 = vmatprep.subr.mxu0 0.0
  %2479 = vmatpush1.msra.mxu0 0.0
  %2480 = vmatprep.subr.mxu0 0.0
  %2481 = vmatpush1.msra.mxu0 0.0
  %2482 = vmatprep.subr.mxu0 0.0
  %2483 = vmatpush1.msra.mxu0 0.0
  %2484 = vmatprep.subr.mxu0 0.0
  %2485 = vmatpush1.msra.mxu0 0.0
  %2486 = vmatprep.subr.mxu0 0.0
  %2487 = vmatpush1.msra.mxu0 0.0
  %2488 = vmatprep.subr.mxu0 0.0
  %2489 = vmatpush1.msra.mxu0 0.0
  %2490 = vmatprep.subr.mxu0 0.0
  %2491 = vmatpush1.msra.mxu0 0.0
  %2492 = vmatprep.subr.mxu0 0.0
  %2493 = vmatpush1.msra.mxu0 0.0
  %2494 = vmatprep.subr.mxu0 0.0
  %2495 = vmatpush1.msra.mxu0 0.0
  %2496 = vmatprep.subr.mxu0 0.0
  %2497 = vmatpush1.msra.mxu0 %v2464
  %2498 = vmatprep.subr.mxu0 0.0
  %2499 = vmatpush1.msra.mxu0 %v2463
  %2500 = vmatprep.subr.mxu0 0.0
  %2501 = vmatpush2.msra.mxu0 0.0
  %2502 = vmatprep.subr.mxu0 0.0
  %2503 = vmatpush2.msra.mxu0 0.0
  %2504 = vmatprep.subr.mxu0 0.0
  %2505 = vmatpush2.msra.mxu0 0.0
  %2506 = vmatprep.subr.mxu0 0.0
  %2507 = vmatpush2.msra.mxu0 0.0
  %2508 = vmatprep.subr.mxu0 0.0
  %2509 = vmatpush2.msra.mxu0 0.0
  %2510 = vmatprep.subr.mxu0 0.0
  %2511 = vmatpush2.msra.mxu0 0.0
  %2512 = vmatprep.subr.mxu0 0.0
  %2513 = vmatpush2.msra.mxu0 0.0
  %2514 = vmatprep.subr.mxu0 0.0
  %2515 = vmatpush2.msra.mxu0 0.0
  %2516 = vmatprep.subr.mxu0 0.0
  %2517 = vmatpush2.msra.mxu0 0.0
  %2518 = vmatprep.subr.mxu0 0.0
  %2519 = vmatpush2.msra.mxu0 0.0
  %2520 = vmatprep.subr.mxu0 0.0
  %2521 = vmatpush2.msra.mxu0 0.0
  %2522 = vmatprep.subr.mxu0 0.0
  %2523 = vmatpush2.msra.mxu0 0.0
  %2524 = vmatprep.subr.mxu0 0.0
  %2525 = vmatpush2.msra.mxu0 0.0
  %2526 = vmatprep.subr.mxu0 0.0
  %2527 = vmatpush2.msra.mxu0 0.0
  %2528 = vmatprep.subr.mxu0 0.0
  %2529 = vmatpush2.msra.mxu0 0.0
  %2530 = vmatprep.subr.mxu0 0.0
  %2531 = vmatpush2.msra.mxu0 0.0
  %2532 = vmatprep.mubr.f32.mxu0 0.0
  %2533 = vmatmul.mubr.f32.gmra.mxu0 %v2466
  %v2534 = vpop.f32.mrf.mxu0
  %v2535 = vadd.f32 0.0, %v2534
  %v2536 = vpop.f32.mrf.mxu0
  %2537 = vdwg.mxu0
  %v2539 = vsel %vm794, %v2461, 0
  %v2542 = vsel %vm794, %v2462, 0
  %2544 = vmatprep.subr.mxu0 0.0
  %2545 = vmatpush1.msra.mxu0 0.0
  %2546 = vmatprep.subr.mxu0 0.0
  %2547 = vmatpush1.msra.mxu0 0.0
  %2548 = vmatprep.subr.mxu0 0.0
  %2549 = vmatpush1.msra.mxu0 0.0
  %2550 = vmatprep.subr.mxu0 0.0
  %2551 = vmatpush1.msra.mxu0 0.0
  %2552 = vmatprep.subr.mxu0 0.0
  %2553 = vmatpush1.msra.mxu0 0.0
  %2554 = vmatprep.subr.mxu0 0.0
  %2555 = vmatpush1.msra.mxu0 0.0
  %2556 = vmatprep.subr.mxu0 0.0
  %2557 = vmatpush1.msra.mxu0 0.0
  %2558 = vmatprep.subr.mxu0 0.0
  %2559 = vmatpush1.msra.mxu0 0.0
  %2560 = vmatprep.subr.mxu0 0.0
  %2561 = vmatpush1.msra.mxu0 0.0
  %2562 = vmatprep.subr.mxu0 0.0
  %2563 = vmatpush1.msra.mxu0 0.0
  %2564 = vmatprep.subr.mxu0 0.0
  %2565 = vmatpush1.msra.mxu0 0.0
  %2566 = vmatprep.subr.mxu0 0.0
  %2567 = vmatpush1.msra.mxu0 0.0
  %2568 = vmatprep.subr.mxu0 0.0
  %2569 = vmatpush1.msra.mxu0 0.0
  %2570 = vmatprep.subr.mxu0 0.0
  %2571 = vmatpush1.msra.mxu0 0.0
  %2572 = vmatprep.subr.mxu0 0.0
  %2573 = vmatpush1.msra.mxu0 0.0
  %2574 = vmatprep.subr.mxu0 0.0
  %2575 = vmatpush1.msra.mxu0 %v2535
  %2576 = vmatprep.subr.mxu0 0.0
  %2577 = vmatpush2.msra.mxu0 0.0
  %2578 = vmatprep.subr.mxu0 0.0
  %2579 = vmatpush2.msra.mxu0 0.0
  %2580 = vmatprep.subr.mxu0 0.0
  %2581 = vmatpush2.msra.mxu0 0.0
  %2582 = vmatprep.subr.mxu0 0.0
  %2583 = vmatpush2.msra.mxu0 0.0
  %2584 = vmatprep.subr.mxu0 0.0
  %2585 = vmatpush2.msra.mxu0 0.0
  %2586 = vmatprep.subr.mxu0 0.0
  %2587 = vmatpush2.msra.mxu0 0.0
  %2588 = vmatprep.subr.mxu0 0.0
  %2589 = vmatpush2.msra.mxu0 0.0
  %2590 = vmatprep.subr.mxu0 0.0
  %2591 = vmatpush2.msra.mxu0 0.0
  %2592 = vmatprep.subr.mxu0 0.0
  %2593 = vmatpush2.msra.mxu0 0.0
  %2594 = vmatprep.subr.mxu0 0.0
  %2595 = vmatpush2.msra.mxu0 0.0
  %2596 = vmatprep.subr.mxu0 0.0
  %2597 = vmatpush2.msra.mxu0 0.0
  %2598 = vmatprep.subr.mxu0 0.0
  %2599 = vmatpush2.msra.mxu0 0.0
  %2600 = vmatprep.subr.mxu0 0.0
  %2601 = vmatpush2.msra.mxu0 0.0
  %2602 = vmatprep.subr.mxu0 0.0
  %2603 = vmatpush2.msra.mxu0 0.0
  %2604 = vmatprep.subr.mxu0 0.0
  %2605 = vmatpush2.msra.mxu0 0.0
  %2606 = vmatprep.subr.mxu0 0.0
  %2607 = vmatpush2.msra.mxu0 0.0
  %2608 = vmatprep.mubr.f32.mxu0 0.0
  %2609 = vmatmul.mubr.f32.gmra.mxu0 %v2539
  %v2610 = vpop.f32.mrf.mxu0
  %v2611 = vadd.f32 0.0, %v2610
  %v2612 = vpop.f32.mrf.mxu0
  %2613 = vmatprep.mubr.f32.mxu0 0.0
  %2614 = vmatmul.mubr.f32.gmra.mxu0 %v2542
  %v2615 = vpop.f32.mrf.mxu0
  %v2616 = vadd.f32 0.0, %v2615
  %v2617 = vpop.f32.mrf.mxu0
  %2618 = vdwg.mxu0
  %2620 = vset.pattern.permute.xlu0 0
  %2621 = vperm.xlu0 %2620, %v2459
  %v2622 = vpop.permute.xlu0 %2621
  %2625 = vset.pattern.permute.xlu0 0
  %2626 = vperm.xlu0 %2625, %v2460
  %v2627 = vpop.permute.xlu0 %2626
  %v2629 = vadd.f32 %v2622, %v2611
  %v2630 = vadd.f32 %v2627, %v2616
  %s2631 = scalar_lea.vmem %s17, 16
  %v2632 = vld [vmem:[%s2631] sm:$0xff]
  %v2633 = vld [vmem:[%s2631 + $0x8] sm:$0xff]
  %v2634 = vld [vmem:[%s891] sm:$0xff]
  %v2635 = vld [vmem:[%s891 + $0x8] sm:$0xff]
  %2636 = vmatprep.subr.mxu0 0.0
  %2637 = vmatpush1.msra.mxu0 0.0
  %2638 = vmatprep.subr.mxu0 0.0
  %2639 = vmatpush1.msra.mxu0 0.0
  %2640 = vmatprep.subr.mxu0 0.0
  %2641 = vmatpush1.msra.mxu0 0.0
  %2642 = vmatprep.subr.mxu0 0.0
  %2643 = vmatpush1.msra.mxu0 0.0
  %2644 = vmatprep.subr.mxu0 0.0
  %2645 = vmatpush1.msra.mxu0 0.0
  %2646 = vmatprep.subr.mxu0 0.0
  %2647 = vmatpush1.msra.mxu0 0.0
  %2648 = vmatprep.subr.mxu0 0.0
  %2649 = vmatpush1.msra.mxu0 0.0
  %2650 = vmatprep.subr.mxu0 0.0
  %2651 = vmatpush1.msra.mxu0 0.0
  %2652 = vmatprep.subr.mxu0 0.0
  %2653 = vmatpush1.msra.mxu0 0.0
  %2654 = vmatprep.subr.mxu0 0.0
  %2655 = vmatpush1.msra.mxu0 0.0
  %2656 = vmatprep.subr.mxu0 0.0
  %2657 = vmatpush1.msra.mxu0 0.0
  %2658 = vmatprep.subr.mxu0 0.0
  %2659 = vmatpush1.msra.mxu0 0.0
  %2660 = vmatprep.subr.mxu0 0.0
  %2661 = vmatpush1.msra.mxu0 0.0
  %2662 = vmatprep.subr.mxu0 0.0
  %2663 = vmatpush1.msra.mxu0 0.0
  %2664 = vmatprep.subr.mxu0 0.0
  %2665 = vmatpush1.msra.mxu0 %v2635
  %2666 = vmatprep.subr.mxu0 0.0
  %2667 = vmatpush1.msra.mxu0 %v2634
  %2668 = vmatprep.subr.mxu0 0.0
  %2669 = vmatpush2.msra.mxu0 0.0
  %2670 = vmatprep.subr.mxu0 0.0
  %2671 = vmatpush2.msra.mxu0 0.0
  %2672 = vmatprep.subr.mxu0 0.0
  %2673 = vmatpush2.msra.mxu0 0.0
  %2674 = vmatprep.subr.mxu0 0.0
  %2675 = vmatpush2.msra.mxu0 0.0
  %2676 = vmatprep.subr.mxu0 0.0
  %2677 = vmatpush2.msra.mxu0 0.0
  %2678 = vmatprep.subr.mxu0 0.0
  %2679 = vmatpush2.msra.mxu0 0.0
  %2680 = vmatprep.subr.mxu0 0.0
  %2681 = vmatpush2.msra.mxu0 0.0
  %2682 = vmatprep.subr.mxu0 0.0
  %2683 = vmatpush2.msra.mxu0 0.0
  %2684 = vmatprep.subr.mxu0 0.0
  %2685 = vmatpush2.msra.mxu0 0.0
  %2686 = vmatprep.subr.mxu0 0.0
  %2687 = vmatpush2.msra.mxu0 0.0
  %2688 = vmatprep.subr.mxu0 0.0
  %2689 = vmatpush2.msra.mxu0 0.0
  %2690 = vmatprep.subr.mxu0 0.0
  %2691 = vmatpush2.msra.mxu0 0.0
  %2692 = vmatprep.subr.mxu0 0.0
  %2693 = vmatpush2.msra.mxu0 0.0
  %2694 = vmatprep.subr.mxu0 0.0
  %2695 = vmatpush2.msra.mxu0 0.0
  %2696 = vmatprep.subr.mxu0 0.0
  %2697 = vmatpush2.msra.mxu0 0.0
  %2698 = vmatprep.subr.mxu0 0.0
  %2699 = vmatpush2.msra.mxu0 0.0
  %2700 = vmatprep.mubr.f32.mxu0 0.0
  %2701 = vmatmul.mubr.f32.gmra.mxu0 %v2466
  %v2702 = vpop.f32.mrf.mxu0
  %v2703 = vadd.f32 0.0, %v2702
  %v2704 = vpop.f32.mrf.mxu0
  %2705 = vdwg.mxu0
  %v2707 = vsel %vm794, %v2632, 0
  %v2710 = vsel %vm794, %v2633, 0
  %2712 = vmatprep.subr.mxu0 0.0
  %2713 = vmatpush1.msra.mxu0 0.0
  %2714 = vmatprep.subr.mxu0 0.0
  %2715 = vmatpush1.msra.mxu0 0.0
  %2716 = vmatprep.subr.mxu0 0.0
  %2717 = vmatpush1.msra.mxu0 0.0
  %2718 = vmatprep.subr.mxu0 0.0
  %2719 = vmatpush1.msra.mxu0 0.0
  %2720 = vmatprep.subr.mxu0 0.0
  %2721 = vmatpush1.msra.mxu0 0.0
  %2722 = vmatprep.subr.mxu0 0.0
  %2723 = vmatpush1.msra.mxu0 0.0
  %2724 = vmatprep.subr.mxu0 0.0
  %2725 = vmatpush1.msra.mxu0 0.0
  %2726 = vmatprep.subr.mxu0 0.0
  %2727 = vmatpush1.msra.mxu0 0.0
  %2728 = vmatprep.subr.mxu0 0.0
  %2729 = vmatpush1.msra.mxu0 0.0
  %2730 = vmatprep.subr.mxu0 0.0
  %2731 = vmatpush1.msra.mxu0 0.0
  %2732 = vmatprep.subr.mxu0 0.0
  %2733 = vmatpush1.msra.mxu0 0.0
  %2734 = vmatprep.subr.mxu0 0.0
  %2735 = vmatpush1.msra.mxu0 0.0
  %2736 = vmatprep.subr.mxu0 0.0
  %2737 = vmatpush1.msra.mxu0 0.0
  %2738 = vmatprep.subr.mxu0 0.0
  %2739 = vmatpush1.msra.mxu0 0.0
  %2740 = vmatprep.subr.mxu0 0.0
  %2741 = vmatpush1.msra.mxu0 0.0
  %2742 = vmatprep.subr.mxu0 0.0
  %2743 = vmatpush1.msra.mxu0 %v2703
  %2744 = vmatprep.subr.mxu0 0.0
  %2745 = vmatpush2.msra.mxu0 0.0
  %2746 = vmatprep.subr.mxu0 0.0
  %2747 = vmatpush2.msra.mxu0 0.0
  %2748 = vmatprep.subr.mxu0 0.0
  %2749 = vmatpush2.msra.mxu0 0.0
  %2750 = vmatprep.subr.mxu0 0.0
  %2751 = vmatpush2.msra.mxu0 0.0
  %2752 = vmatprep.subr.mxu0 0.0
  %2753 = vmatpush2.msra.mxu0 0.0
  %2754 = vmatprep.subr.mxu0 0.0
  %2755 = vmatpush2.msra.mxu0 0.0
  %2756 = vmatprep.subr.mxu0 0.0
  %2757 = vmatpush2.msra.mxu0 0.0
  %2758 = vmatprep.subr.mxu0 0.0
  %2759 = vmatpush2.msra.mxu0 0.0
  %2760 = vmatprep.subr.mxu0 0.0
  %2761 = vmatpush2.msra.mxu0 0.0
  %2762 = vmatprep.subr.mxu0 0.0
  %2763 = vmatpush2.msra.mxu0 0.0
  %2764 = vmatprep.subr.mxu0 0.0
  %2765 = vmatpush2.msra.mxu0 0.0
  %2766 = vmatprep.subr.mxu0 0.0
  %2767 = vmatpush2.msra.mxu0 0.0
  %2768 = vmatprep.subr.mxu0 0.0
  %2769 = vmatpush2.msra.mxu0 0.0
  %2770 = vmatprep.subr.mxu0 0.0
  %2771 = vmatpush2.msra.mxu0 0.0
  %2772 = vmatprep.subr.mxu0 0.0
  %2773 = vmatpush2.msra.mxu0 0.0
  %2774 = vmatprep.subr.mxu0 0.0
  %2775 = vmatpush2.msra.mxu0 0.0
  %2776 = vmatprep.mubr.f32.mxu0 0.0
  %2777 = vmatmul.mubr.f32.gmra.mxu0 %v2707
  %v2778 = vpop.f32.mrf.mxu0
  %v2779 = vadd.f32 0.0, %v2778
  %v2780 = vpop.f32.mrf.mxu0
  %2781 = vmatprep.mubr.f32.mxu0 0.0
  %2782 = vmatmul.mubr.f32.gmra.mxu0 %v2710
  %v2783 = vpop.f32.mrf.mxu0
  %v2784 = vadd.f32 0.0, %v2783
  %v2785 = vpop.f32.mrf.mxu0
  %2786 = vdwg.mxu0
  %v2787 = vadd.f32 %v2629, %v2779
  %v2788 = vadd.f32 %v2630, %v2784
  %s2789 = scalar_lea.vmem %s17, 32
  %v2790 = vld [vmem:[%s2789] sm:$0xff]
  %v2791 = vld [vmem:[%s2789 + $0x8] sm:$0xff]
  %v2792 = vld [vmem:[%s1050] sm:$0xff]
  %v2793 = vld [vmem:[%s1050 + $0x8] sm:$0xff]
  %2794 = vmatprep.subr.mxu0 0.0
  %2795 = vmatpush1.msra.mxu0 0.0
  %2796 = vmatprep.subr.mxu0 0.0
  %2797 = vmatpush1.msra.mxu0 0.0
  %2798 = vmatprep.subr.mxu0 0.0
  %2799 = vmatpush1.msra.mxu0 0.0
  %2800 = vmatprep.subr.mxu0 0.0
  %2801 = vmatpush1.msra.mxu0 0.0
  %2802 = vmatprep.subr.mxu0 0.0
  %2803 = vmatpush1.msra.mxu0 0.0
  %2804 = vmatprep.subr.mxu0 0.0
  %2805 = vmatpush1.msra.mxu0 0.0
  %2806 = vmatprep.subr.mxu0 0.0
  %2807 = vmatpush1.msra.mxu0 0.0
  %2808 = vmatprep.subr.mxu0 0.0
  %2809 = vmatpush1.msra.mxu0 0.0
  %2810 = vmatprep.subr.mxu0 0.0
  %2811 = vmatpush1.msra.mxu0 0.0
  %2812 = vmatprep.subr.mxu0 0.0
  %2813 = vmatpush1.msra.mxu0 0.0
  %2814 = vmatprep.subr.mxu0 0.0
  %2815 = vmatpush1.msra.mxu0 0.0
  %2816 = vmatprep.subr.mxu0 0.0
  %2817 = vmatpush1.msra.mxu0 0.0
  %2818 = vmatprep.subr.mxu0 0.0
  %2819 = vmatpush1.msra.mxu0 0.0
  %2820 = vmatprep.subr.mxu0 0.0
  %2821 = vmatpush1.msra.mxu0 0.0
  %2822 = vmatprep.subr.mxu0 0.0
  %2823 = vmatpush1.msra.mxu0 %v2793
  %2824 = vmatprep.subr.mxu0 0.0
  %2825 = vmatpush1.msra.mxu0 %v2792
  %2826 = vmatprep.subr.mxu0 0.0
  %2827 = vmatpush2.msra.mxu0 0.0
  %2828 = vmatprep.subr.mxu0 0.0
  %2829 = vmatpush2.msra.mxu0 0.0
  %2830 = vmatprep.subr.mxu0 0.0
  %2831 = vmatpush2.msra.mxu0 0.0
  %2832 = vmatprep.subr.mxu0 0.0
  %2833 = vmatpush2.msra.mxu0 0.0
  %2834 = vmatprep.subr.mxu0 0.0
  %2835 = vmatpush2.msra.mxu0 0.0
  %2836 = vmatprep.subr.mxu0 0.0
  %2837 = vmatpush2.msra.mxu0 0.0
  %2838 = vmatprep.subr.mxu0 0.0
  %2839 = vmatpush2.msra.mxu0 0.0
  %2840 = vmatprep.subr.mxu0 0.0
  %2841 = vmatpush2.msra.mxu0 0.0
  %2842 = vmatprep.subr.mxu0 0.0
  %2843 = vmatpush2.msra.mxu0 0.0
  %2844 = vmatprep.subr.mxu0 0.0
  %2845 = vmatpush2.msra.mxu0 0.0
  %2846 = vmatprep.subr.mxu0 0.0
  %2847 = vmatpush2.msra.mxu0 0.0
  %2848 = vmatprep.subr.mxu0 0.0
  %2849 = vmatpush2.msra.mxu0 0.0
  %2850 = vmatprep.subr.mxu0 0.0
  %2851 = vmatpush2.msra.mxu0 0.0
  %2852 = vmatprep.subr.mxu0 0.0
  %2853 = vmatpush2.msra.mxu0 0.0
  %2854 = vmatprep.subr.mxu0 0.0
  %2855 = vmatpush2.msra.mxu0 0.0
  %2856 = vmatprep.subr.mxu0 0.0
  %2857 = vmatpush2.msra.mxu0 0.0
  %2858 = vmatprep.mubr.f32.mxu0 0.0
  %2859 = vmatmul.mubr.f32.gmra.mxu0 %v2466
  %v2860 = vpop.f32.mrf.mxu0
  %v2861 = vadd.f32 0.0, %v2860
  %v2862 = vpop.f32.mrf.mxu0
  %2863 = vdwg.mxu0
  %v2865 = vsel %vm794, %v2790, 0
  %v2868 = vsel %vm794, %v2791, 0
  %2870 = vmatprep.subr.mxu0 0.0
  %2871 = vmatpush1.msra.mxu0 0.0
  %2872 = vmatprep.subr.mxu0 0.0
  %2873 = vmatpush1.msra.mxu0 0.0
  %2874 = vmatprep.subr.mxu0 0.0
  %2875 = vmatpush1.msra.mxu0 0.0
  %2876 = vmatprep.subr.mxu0 0.0
  %2877 = vmatpush1.msra.mxu0 0.0
  %2878 = vmatprep.subr.mxu0 0.0
  %2879 = vmatpush1.msra.mxu0 0.0
  %2880 = vmatprep.subr.mxu0 0.0
  %2881 = vmatpush1.msra.mxu0 0.0
  %2882 = vmatprep.subr.mxu0 0.0
  %2883 = vmatpush1.msra.mxu0 0.0
  %2884 = vmatprep.subr.mxu0 0.0
  %2885 = vmatpush1.msra.mxu0 0.0
  %2886 = vmatprep.subr.mxu0 0.0
  %2887 = vmatpush1.msra.mxu0 0.0
  %2888 = vmatprep.subr.mxu0 0.0
  %2889 = vmatpush1.msra.mxu0 0.0
  %2890 = vmatprep.subr.mxu0 0.0
  %2891 = vmatpush1.msra.mxu0 0.0
  %2892 = vmatprep.subr.mxu0 0.0
  %2893 = vmatpush1.msra.mxu0 0.0
  %2894 = vmatprep.subr.mxu0 0.0
  %2895 = vmatpush1.msra.mxu0 0.0
  %2896 = vmatprep.subr.mxu0 0.0
  %2897 = vmatpush1.msra.mxu0 0.0
  %2898 = vmatprep.subr.mxu0 0.0
  %2899 = vmatpush1.msra.mxu0 0.0
  %2900 = vmatprep.subr.mxu0 0.0
  %2901 = vmatpush1.msra.mxu0 %v2861
  %2902 = vmatprep.subr.mxu0 0.0
  %2903 = vmatpush2.msra.mxu0 0.0
  %2904 = vmatprep.subr.mxu0 0.0
  %2905 = vmatpush2.msra.mxu0 0.0
  %2906 = vmatprep.subr.mxu0 0.0
  %2907 = vmatpush2.msra.mxu0 0.0
  %2908 = vmatprep.subr.mxu0 0.0
  %2909 = vmatpush2.msra.mxu0 0.0
  %2910 = vmatprep.subr.mxu0 0.0
  %2911 = vmatpush2.msra.mxu0 0.0
  %2912 = vmatprep.subr.mxu0 0.0
  %2913 = vmatpush2.msra.mxu0 0.0
  %2914 = vmatprep.subr.mxu0 0.0
  %2915 = vmatpush2.msra.mxu0 0.0
  %2916 = vmatprep.subr.mxu0 0.0
  %2917 = vmatpush2.msra.mxu0 0.0
  %2918 = vmatprep.subr.mxu0 0.0
  %2919 = vmatpush2.msra.mxu0 0.0
  %2920 = vmatprep.subr.mxu0 0.0
  %2921 = vmatpush2.msra.mxu0 0.0
  %2922 = vmatprep.subr.mxu0 0.0
  %2923 = vmatpush2.msra.mxu0 0.0
  %2924 = vmatprep.subr.mxu0 0.0
  %2925 = vmatpush2.msra.mxu0 0.0
  %2926 = vmatprep.subr.mxu0 0.0
  %2927 = vmatpush2.msra.mxu0 0.0
  %2928 = vmatprep.subr.mxu0 0.0
  %2929 = vmatpush2.msra.mxu0 0.0
  %2930 = vmatprep.subr.mxu0 0.0
  %2931 = vmatpush2.msra.mxu0 0.0
  %2932 = vmatprep.subr.mxu0 0.0
  %2933 = vmatpush2.msra.mxu0 0.0
  %2934 = vmatprep.mubr.f32.mxu0 0.0
  %2935 = vmatmul.mubr.f32.gmra.mxu0 %v2865
  %v2936 = vpop.f32.mrf.mxu0
  %v2937 = vadd.f32 0.0, %v2936
  %v2938 = vpop.f32.mrf.mxu0
  %2939 = vmatprep.mubr.f32.mxu0 0.0
  %2940 = vmatmul.mubr.f32.gmra.mxu0 %v2868
  %v2941 = vpop.f32.mrf.mxu0
  %v2942 = vadd.f32 0.0, %v2941
  %v2943 = vpop.f32.mrf.mxu0
  %2944 = vdwg.mxu0
  %v2945 = vadd.f32 %v2787, %v2937
  %v2946 = vadd.f32 %v2788, %v2942
  %vm2947 = vcmp.gt.f32.partialorder %v2945, 0.0
  %vm2948 = vcmp.gt.f32.partialorder %v2946, 0.0
  %v2949 = vmul.f32 %v2945, 0.2
  %v2950 = vmul.f32 %v2946, 0.2
  %v2951 = vsel %vm2947, %v2945, %v2949
  %v2952 = vsel %vm2948, %v2946, %v2950
  %v2953 = vld [vmem:[%s21] sm:$0xff]
  %v2954 = vld [vmem:[%s21 + $0x8] sm:$0xff]
  %v2955 = vld [vmem:[%s20] sm:$0xff]
  %v2956 = vld [vmem:[%s20 + $0x8] sm:$0xff]
  %v2957 = vld [vmem:[%s19] sm:$0xff]
  %v2959 = vsel %vm794, %v2951, 0
  %v2962 = vsel %vm794, %v2952, 0
  %2964 = vmatprep.subr.mxu0 0.0
  %2965 = vmatpush1.msra.mxu0 0.0
  %2966 = vmatprep.subr.mxu0 0.0
  %2967 = vmatpush1.msra.mxu0 0.0
  %2968 = vmatprep.subr.mxu0 0.0
  %2969 = vmatpush1.msra.mxu0 0.0
  %2970 = vmatprep.subr.mxu0 0.0
  %2971 = vmatpush1.msra.mxu0 0.0
  %2972 = vmatprep.subr.mxu0 0.0
  %2973 = vmatpush1.msra.mxu0 0.0
  %2974 = vmatprep.subr.mxu0 0.0
  %2975 = vmatpush1.msra.mxu0 0.0
  %2976 = vmatprep.subr.mxu0 0.0
  %2977 = vmatpush1.msra.mxu0 0.0
  %2978 = vmatprep.subr.mxu0 0.0
  %2979 = vmatpush1.msra.mxu0 0.0
  %2980 = vmatprep.subr.mxu0 0.0
  %2981 = vmatpush1.msra.mxu0 0.0
  %2982 = vmatprep.subr.mxu0 0.0
  %2983 = vmatpush1.msra.mxu0 0.0
  %2984 = vmatprep.subr.mxu0 0.0
  %2985 = vmatpush1.msra.mxu0 0.0
  %2986 = vmatprep.subr.mxu0 0.0
  %2987 = vmatpush1.msra.mxu0 0.0
  %2988 = vmatprep.subr.mxu0 0.0
  %2989 = vmatpush1.msra.mxu0 0.0
  %2990 = vmatprep.subr.mxu0 0.0
  %2991 = vmatpush1.msra.mxu0 0.0
  %2992 = vmatprep.subr.mxu0 0.0
  %2993 = vmatpush1.msra.mxu0 0.0
  %2994 = vmatprep.subr.mxu0 0.0
  %2995 = vmatpush1.msra.mxu0 %v2957
  %2996 = vmatprep.subr.mxu0 0.0
  %2997 = vmatpush2.msra.mxu0 0.0
  %2998 = vmatprep.subr.mxu0 0.0
  %2999 = vmatpush2.msra.mxu0 0.0
  %3000 = vmatprep.subr.mxu0 0.0
  %3001 = vmatpush2.msra.mxu0 0.0
  %3002 = vmatprep.subr.mxu0 0.0
  %3003 = vmatpush2.msra.mxu0 0.0
  %3004 = vmatprep.subr.mxu0 0.0
  %3005 = vmatpush2.msra.mxu0 0.0
  %3006 = vmatprep.subr.mxu0 0.0
  %3007 = vmatpush2.msra.mxu0 0.0
  %3008 = vmatprep.subr.mxu0 0.0
  %3009 = vmatpush2.msra.mxu0 0.0
  %3010 = vmatprep.subr.mxu0 0.0
  %3011 = vmatpush2.msra.mxu0 0.0
  %3012 = vmatprep.subr.mxu0 0.0
  %3013 = vmatpush2.msra.mxu0 0.0
  %3014 = vmatprep.subr.mxu0 0.0
  %3015 = vmatpush2.msra.mxu0 0.0
  %3016 = vmatprep.subr.mxu0 0.0
  %3017 = vmatpush2.msra.mxu0 0.0
  %3018 = vmatprep.subr.mxu0 0.0
  %3019 = vmatpush2.msra.mxu0 0.0
  %3020 = vmatprep.subr.mxu0 0.0
  %3021 = vmatpush2.msra.mxu0 0.0
  %3022 = vmatprep.subr.mxu0 0.0
  %3023 = vmatpush2.msra.mxu0 0.0
  %3024 = vmatprep.subr.mxu0 0.0
  %3025 = vmatpush2.msra.mxu0 0.0
  %3026 = vmatprep.subr.mxu0 0.0
  %3027 = vmatpush2.msra.mxu0 0.0
  %3028 = vmatprep.mubr.f32.mxu0 0.0
  %3029 = vmatmul.mubr.f32.gmra.mxu0 %v2959
  %v3030 = vpop.f32.mrf.mxu0
  %v3031 = vadd.f32 0.0, %v3030
  %v3032 = vpop.f32.mrf.mxu0
  %3033 = vmatprep.mubr.f32.mxu0 0.0
  %3034 = vmatmul.mubr.f32.gmra.mxu0 %v2962
  %v3035 = vpop.f32.mrf.mxu0
  %v3036 = vadd.f32 0.0, %v3035
  %v3037 = vpop.f32.mrf.mxu0
  %3038 = vdwg.mxu0
  %v3040 = vsel %vm557, %v2955, 0
  %v3043 = vsel %vm557, %v2956, 0
  %3045 = vmatprep.subr.mxu0 0.0
  %3046 = vmatpush1.msra.mxu0 0.0
  %3047 = vmatprep.subr.mxu0 0.0
  %3048 = vmatpush1.msra.mxu0 0.0
  %3049 = vmatprep.subr.mxu0 0.0
  %3050 = vmatpush1.msra.mxu0 0.0
  %3051 = vmatprep.subr.mxu0 0.0
  %3052 = vmatpush1.msra.mxu0 0.0
  %3053 = vmatprep.subr.mxu0 0.0
  %3054 = vmatpush1.msra.mxu0 0.0
  %3055 = vmatprep.subr.mxu0 0.0
  %3056 = vmatpush1.msra.mxu0 0.0
  %3057 = vmatprep.subr.mxu0 0.0
  %3058 = vmatpush1.msra.mxu0 0.0
  %3059 = vmatprep.subr.mxu0 0.0
  %3060 = vmatpush1.msra.mxu0 0.0
  %3061 = vmatprep.subr.mxu0 0.0
  %3062 = vmatpush1.msra.mxu0 0.0
  %3063 = vmatprep.subr.mxu0 0.0
  %3064 = vmatpush1.msra.mxu0 0.0
  %3065 = vmatprep.subr.mxu0 0.0
  %3066 = vmatpush1.msra.mxu0 0.0
  %3067 = vmatprep.subr.mxu0 0.0
  %3068 = vmatpush1.msra.mxu0 0.0
  %3069 = vmatprep.subr.mxu0 0.0
  %3070 = vmatpush1.msra.mxu0 0.0
  %3071 = vmatprep.subr.mxu0 0.0
  %3072 = vmatpush1.msra.mxu0 0.0
  %3073 = vmatprep.subr.mxu0 0.0
  %3074 = vmatpush1.msra.mxu0 %v3036
  %3075 = vmatprep.subr.mxu0 0.0
  %3076 = vmatpush1.msra.mxu0 %v3031
  %3077 = vmatprep.subr.mxu0 0.0
  %3078 = vmatpush2.msra.mxu0 0.0
  %3079 = vmatprep.subr.mxu0 0.0
  %3080 = vmatpush2.msra.mxu0 0.0
  %3081 = vmatprep.subr.mxu0 0.0
  %3082 = vmatpush2.msra.mxu0 0.0
  %3083 = vmatprep.subr.mxu0 0.0
  %3084 = vmatpush2.msra.mxu0 0.0
  %3085 = vmatprep.subr.mxu0 0.0
  %3086 = vmatpush2.msra.mxu0 0.0
  %3087 = vmatprep.subr.mxu0 0.0
  %3088 = vmatpush2.msra.mxu0 0.0
  %3089 = vmatprep.subr.mxu0 0.0
  %3090 = vmatpush2.msra.mxu0 0.0
  %3091 = vmatprep.subr.mxu0 0.0
  %3092 = vmatpush2.msra.mxu0 0.0
  %3093 = vmatprep.subr.mxu0 0.0
  %3094 = vmatpush2.msra.mxu0 0.0
  %3095 = vmatprep.subr.mxu0 0.0
  %3096 = vmatpush2.msra.mxu0 0.0
  %3097 = vmatprep.subr.mxu0 0.0
  %3098 = vmatpush2.msra.mxu0 0.0
  %3099 = vmatprep.subr.mxu0 0.0
  %3100 = vmatpush2.msra.mxu0 0.0
  %3101 = vmatprep.subr.mxu0 0.0
  %3102 = vmatpush2.msra.mxu0 0.0
  %3103 = vmatprep.subr.mxu0 0.0
  %3104 = vmatpush2.msra.mxu0 0.0
  %3105 = vmatprep.subr.mxu0 0.0
  %3106 = vmatpush2.msra.mxu0 0.0
  %3107 = vmatprep.subr.mxu0 0.0
  %3108 = vmatpush2.msra.mxu0 0.0
  %3109 = vmatprep.mubr.f32.mxu0 0.0
  %3110 = vmatmul.mubr.f32.gmra.mxu0 %v3040
  %v3111 = vpop.f32.mrf.mxu0
  %v3112 = vadd.f32 0.0, %v3111
  %v3113 = vpop.f32.mrf.mxu0
  %3114 = vmatprep.mubr.f32.mxu0 0.0
  %3115 = vmatmul.mubr.f32.gmra.mxu0 %v3043
  %v3116 = vpop.f32.mrf.mxu0
  %v3117 = vadd.f32 0.0, %v3116
  %v3118 = vpop.f32.mrf.mxu0
  %3119 = vdwg.mxu0
  %3121 = vset.pattern.permute.xlu0 0
  %3122 = vperm.xlu0 %3121, %v2953
  %v3123 = vpop.permute.xlu0 %3122
  %3126 = vset.pattern.permute.xlu0 0
  %3127 = vperm.xlu0 %3126, %v2954
  %v3128 = vpop.permute.xlu0 %3127
  %v3130 = vadd.f32 %v3123, %v3112
  %v3131 = vadd.f32 %v3128, %v3117
  %s3132 = scalar_lea.vmem %s20, 16
  %v3133 = vld [vmem:[%s3132] sm:$0xff]
  %v3134 = vld [vmem:[%s3132 + $0x8] sm:$0xff]
  %s3135 = scalar_lea.vmem %s19, 8
  %v3136 = vld [vmem:[%s3135] sm:$0xff]
  %3137 = vmatprep.subr.mxu0 0.0
  %3138 = vmatpush1.msra.mxu0 0.0
  %3139 = vmatprep.subr.mxu0 0.0
  %3140 = vmatpush1.msra.mxu0 0.0
  %3141 = vmatprep.subr.mxu0 0.0
  %3142 = vmatpush1.msra.mxu0 0.0
  %3143 = vmatprep.subr.mxu0 0.0
  %3144 = vmatpush1.msra.mxu0 0.0
  %3145 = vmatprep.subr.mxu0 0.0
  %3146 = vmatpush1.msra.mxu0 0.0
  %3147 = vmatprep.subr.mxu0 0.0
  %3148 = vmatpush1.msra.mxu0 0.0
  %3149 = vmatprep.subr.mxu0 0.0
  %3150 = vmatpush1.msra.mxu0 0.0
  %3151 = vmatprep.subr.mxu0 0.0
  %3152 = vmatpush1.msra.mxu0 0.0
  %3153 = vmatprep.subr.mxu0 0.0
  %3154 = vmatpush1.msra.mxu0 0.0
  %3155 = vmatprep.subr.mxu0 0.0
  %3156 = vmatpush1.msra.mxu0 0.0
  %3157 = vmatprep.subr.mxu0 0.0
  %3158 = vmatpush1.msra.mxu0 0.0
  %3159 = vmatprep.subr.mxu0 0.0
  %3160 = vmatpush1.msra.mxu0 0.0
  %3161 = vmatprep.subr.mxu0 0.0
  %3162 = vmatpush1.msra.mxu0 0.0
  %3163 = vmatprep.subr.mxu0 0.0
  %3164 = vmatpush1.msra.mxu0 0.0
  %3165 = vmatprep.subr.mxu0 0.0
  %3166 = vmatpush1.msra.mxu0 0.0
  %3167 = vmatprep.subr.mxu0 0.0
  %3168 = vmatpush1.msra.mxu0 %v3136
  %3169 = vmatprep.subr.mxu0 0.0
  %3170 = vmatpush2.msra.mxu0 0.0
  %3171 = vmatprep.subr.mxu0 0.0
  %3172 = vmatpush2.msra.mxu0 0.0
  %3173 = vmatprep.subr.mxu0 0.0
  %3174 = vmatpush2.msra.mxu0 0.0
  %3175 = vmatprep.subr.mxu0 0.0
  %3176 = vmatpush2.msra.mxu0 0.0
  %3177 = vmatprep.subr.mxu0 0.0
  %3178 = vmatpush2.msra.mxu0 0.0
  %3179 = vmatprep.subr.mxu0 0.0
  %3180 = vmatpush2.msra.mxu0 0.0
  %3181 = vmatprep.subr.mxu0 0.0
  %3182 = vmatpush2.msra.mxu0 0.0
  %3183 = vmatprep.subr.mxu0 0.0
  %3184 = vmatpush2.msra.mxu0 0.0
  %3185 = vmatprep.subr.mxu0 0.0
  %3186 = vmatpush2.msra.mxu0 0.0
  %3187 = vmatprep.subr.mxu0 0.0
  %3188 = vmatpush2.msra.mxu0 0.0
  %3189 = vmatprep.subr.mxu0 0.0
  %3190 = vmatpush2.msra.mxu0 0.0
  %3191 = vmatprep.subr.mxu0 0.0
  %3192 = vmatpush2.msra.mxu0 0.0
  %3193 = vmatprep.subr.mxu0 0.0
  %3194 = vmatpush2.msra.mxu0 0.0
  %3195 = vmatprep.subr.mxu0 0.0
  %3196 = vmatpush2.msra.mxu0 0.0
  %3197 = vmatprep.subr.mxu0 0.0
  %3198 = vmatpush2.msra.mxu0 0.0
  %3199 = vmatprep.subr.mxu0 0.0
  %3200 = vmatpush2.msra.mxu0 0.0
  %3201 = vmatprep.mubr.f32.mxu0 0.0
  %3202 = vmatmul.mubr.f32.gmra.mxu0 %v2959
  %v3203 = vpop.f32.mrf.mxu0
  %v3204 = vadd.f32 0.0, %v3203
  %v3205 = vpop.f32.mrf.mxu0
  %3206 = vmatprep.mubr.f32.mxu0 0.0
  %3207 = vmatmul.mubr.f32.gmra.mxu0 %v2962
  %v3208 = vpop.f32.mrf.mxu0
  %v3209 = vadd.f32 0.0, %v3208
  %v3210 = vpop.f32.mrf.mxu0
  %3211 = vdwg.mxu0
  %v3213 = vsel %vm557, %v3133, 0
  %v3216 = vsel %vm557, %v3134, 0
  %3218 = vmatprep.subr.mxu0 0.0
  %3219 = vmatpush1.msra.mxu0 0.0
  %3220 = vmatprep.subr.mxu0 0.0
  %3221 = vmatpush1.msra.mxu0 0.0
  %3222 = vmatprep.subr.mxu0 0.0
  %3223 = vmatpush1.msra.mxu0 0.0
  %3224 = vmatprep.subr.mxu0 0.0
  %3225 = vmatpush1.msra.mxu0 0.0
  %3226 = vmatprep.subr.mxu0 0.0
  %3227 = vmatpush1.msra.mxu0 0.0
  %3228 = vmatprep.subr.mxu0 0.0
  %3229 = vmatpush1.msra.mxu0 0.0
  %3230 = vmatprep.subr.mxu0 0.0
  %3231 = vmatpush1.msra.mxu0 0.0
  %3232 = vmatprep.subr.mxu0 0.0
  %3233 = vmatpush1.msra.mxu0 0.0
  %3234 = vmatprep.subr.mxu0 0.0
  %3235 = vmatpush1.msra.mxu0 0.0
  %3236 = vmatprep.subr.mxu0 0.0
  %3237 = vmatpush1.msra.mxu0 0.0
  %3238 = vmatprep.subr.mxu0 0.0
  %3239 = vmatpush1.msra.mxu0 0.0
  %3240 = vmatprep.subr.mxu0 0.0
  %3241 = vmatpush1.msra.mxu0 0.0
  %3242 = vmatprep.subr.mxu0 0.0
  %3243 = vmatpush1.msra.mxu0 0.0
  %3244 = vmatprep.subr.mxu0 0.0
  %3245 = vmatpush1.msra.mxu0 0.0
  %3246 = vmatprep.subr.mxu0 0.0
  %3247 = vmatpush1.msra.mxu0 %v3209
  %3248 = vmatprep.subr.mxu0 0.0
  %3249 = vmatpush1.msra.mxu0 %v3204
  %3250 = vmatprep.subr.mxu0 0.0
  %3251 = vmatpush2.msra.mxu0 0.0
  %3252 = vmatprep.subr.mxu0 0.0
  %3253 = vmatpush2.msra.mxu0 0.0
  %3254 = vmatprep.subr.mxu0 0.0
  %3255 = vmatpush2.msra.mxu0 0.0
  %3256 = vmatprep.subr.mxu0 0.0
  %3257 = vmatpush2.msra.mxu0 0.0
  %3258 = vmatprep.subr.mxu0 0.0
  %3259 = vmatpush2.msra.mxu0 0.0
  %3260 = vmatprep.subr.mxu0 0.0
  %3261 = vmatpush2.msra.mxu0 0.0
  %3262 = vmatprep.subr.mxu0 0.0
  %3263 = vmatpush2.msra.mxu0 0.0
  %3264 = vmatprep.subr.mxu0 0.0
  %3265 = vmatpush2.msra.mxu0 0.0
  %3266 = vmatprep.subr.mxu0 0.0
  %3267 = vmatpush2.msra.mxu0 0.0
  %3268 = vmatprep.subr.mxu0 0.0
  %3269 = vmatpush2.msra.mxu0 0.0
  %3270 = vmatprep.subr.mxu0 0.0
  %3271 = vmatpush2.msra.mxu0 0.0
  %3272 = vmatprep.subr.mxu0 0.0
  %3273 = vmatpush2.msra.mxu0 0.0
  %3274 = vmatprep.subr.mxu0 0.0
  %3275 = vmatpush2.msra.mxu0 0.0
  %3276 = vmatprep.subr.mxu0 0.0
  %3277 = vmatpush2.msra.mxu0 0.0
  %3278 = vmatprep.subr.mxu0 0.0
  %3279 = vmatpush2.msra.mxu0 0.0
  %3280 = vmatprep.subr.mxu0 0.0
  %3281 = vmatpush2.msra.mxu0 0.0
  %3282 = vmatprep.mubr.f32.mxu0 0.0
  %3283 = vmatmul.mubr.f32.gmra.mxu0 %v3213
  %v3284 = vpop.f32.mrf.mxu0
  %v3285 = vadd.f32 0.0, %v3284
  %v3286 = vpop.f32.mrf.mxu0
  %3287 = vmatprep.mubr.f32.mxu0 0.0
  %3288 = vmatmul.mubr.f32.gmra.mxu0 %v3216
  %v3289 = vpop.f32.mrf.mxu0
  %v3290 = vadd.f32 0.0, %v3289
  %v3291 = vpop.f32.mrf.mxu0
  %3292 = vdwg.mxu0
  %v3293 = vadd.f32 %v3130, %v3285
  %v3294 = vadd.f32 %v3131, %v3290
  %s3295 = scalar_lea.vmem %s20, 32
  %v3296 = vld [vmem:[%s3295] sm:$0xff]
  %v3297 = vld [vmem:[%s3295 + $0x8] sm:$0xff]
  %s3298 = scalar_lea.vmem %s19, 16
  %v3299 = vld [vmem:[%s3298] sm:$0xff]
  %3300 = vmatprep.subr.mxu0 0.0
  %3301 = vmatpush1.msra.mxu0 0.0
  %3302 = vmatprep.subr.mxu0 0.0
  %3303 = vmatpush1.msra.mxu0 0.0
  %3304 = vmatprep.subr.mxu0 0.0
  %3305 = vmatpush1.msra.mxu0 0.0
  %3306 = vmatprep.subr.mxu0 0.0
  %3307 = vmatpush1.msra.mxu0 0.0
  %3308 = vmatprep.subr.mxu0 0.0
  %3309 = vmatpush1.msra.mxu0 0.0
  %3310 = vmatprep.subr.mxu0 0.0
  %3311 = vmatpush1.msra.mxu0 0.0
  %3312 = vmatprep.subr.mxu0 0.0
  %3313 = vmatpush1.msra.mxu0 0.0
  %3314 = vmatprep.subr.mxu0 0.0
  %3315 = vmatpush1.msra.mxu0 0.0
  %3316 = vmatprep.subr.mxu0 0.0
  %3317 = vmatpush1.msra.mxu0 0.0
  %3318 = vmatprep.subr.mxu0 0.0
  %3319 = vmatpush1.msra.mxu0 0.0
  %3320 = vmatprep.subr.mxu0 0.0
  %3321 = vmatpush1.msra.mxu0 0.0
  %3322 = vmatprep.subr.mxu0 0.0
  %3323 = vmatpush1.msra.mxu0 0.0
  %3324 = vmatprep.subr.mxu0 0.0
  %3325 = vmatpush1.msra.mxu0 0.0
  %3326 = vmatprep.subr.mxu0 0.0
  %3327 = vmatpush1.msra.mxu0 0.0
  %3328 = vmatprep.subr.mxu0 0.0
  %3329 = vmatpush1.msra.mxu0 0.0
  %3330 = vmatprep.subr.mxu0 0.0
  %3331 = vmatpush1.msra.mxu0 %v3299
  %3332 = vmatprep.subr.mxu0 0.0
  %3333 = vmatpush2.msra.mxu0 0.0
  %3334 = vmatprep.subr.mxu0 0.0
  %3335 = vmatpush2.msra.mxu0 0.0
  %3336 = vmatprep.subr.mxu0 0.0
  %3337 = vmatpush2.msra.mxu0 0.0
  %3338 = vmatprep.subr.mxu0 0.0
  %3339 = vmatpush2.msra.mxu0 0.0
  %3340 = vmatprep.subr.mxu0 0.0
  %3341 = vmatpush2.msra.mxu0 0.0
  %3342 = vmatprep.subr.mxu0 0.0
  %3343 = vmatpush2.msra.mxu0 0.0
  %3344 = vmatprep.subr.mxu0 0.0
  %3345 = vmatpush2.msra.mxu0 0.0
  %3346 = vmatprep.subr.mxu0 0.0
  %3347 = vmatpush2.msra.mxu0 0.0
  %3348 = vmatprep.subr.mxu0 0.0
  %3349 = vmatpush2.msra.mxu0 0.0
  %3350 = vmatprep.subr.mxu0 0.0
  %3351 = vmatpush2.msra.mxu0 0.0
  %3352 = vmatprep.subr.mxu0 0.0
  %3353 = vmatpush2.msra.mxu0 0.0
  %3354 = vmatprep.subr.mxu0 0.0
  %3355 = vmatpush2.msra.mxu0 0.0
  %3356 = vmatprep.subr.mxu0 0.0
  %3357 = vmatpush2.msra.mxu0 0.0
  %3358 = vmatprep.subr.mxu0 0.0
  %3359 = vmatpush2.msra.mxu0 0.0
  %3360 = vmatprep.subr.mxu0 0.0
  %3361 = vmatpush2.msra.mxu0 0.0
  %3362 = vmatprep.subr.mxu0 0.0
  %3363 = vmatpush2.msra.mxu0 0.0
  %3364 = vmatprep.mubr.f32.mxu0 0.0
  %3365 = vmatmul.mubr.f32.gmra.mxu0 %v2959
  %v3366 = vpop.f32.mrf.mxu0
  %v3367 = vadd.f32 0.0, %v3366
  %v3368 = vpop.f32.mrf.mxu0
  %3369 = vmatprep.mubr.f32.mxu0 0.0
  %3370 = vmatmul.mubr.f32.gmra.mxu0 %v2962
  %v3371 = vpop.f32.mrf.mxu0
  %v3372 = vadd.f32 0.0, %v3371
  %v3373 = vpop.f32.mrf.mxu0
  %3374 = vdwg.mxu0
  %v3376 = vsel %vm557, %v3296, 0
  %v3379 = vsel %vm557, %v3297, 0
  %3381 = vmatprep.subr.mxu0 0.0
  %3382 = vmatpush1.msra.mxu0 0.0
  %3383 = vmatprep.subr.mxu0 0.0
  %3384 = vmatpush1.msra.mxu0 0.0
  %3385 = vmatprep.subr.mxu0 0.0
  %3386 = vmatpush1.msra.mxu0 0.0
  %3387 = vmatprep.subr.mxu0 0.0
  %3388 = vmatpush1.msra.mxu0 0.0
  %3389 = vmatprep.subr.mxu0 0.0
  %3390 = vmatpush1.msra.mxu0 0.0
  %3391 = vmatprep.subr.mxu0 0.0
  %3392 = vmatpush1.msra.mxu0 0.0
  %3393 = vmatprep.subr.mxu0 0.0
  %3394 = vmatpush1.msra.mxu0 0.0
  %3395 = vmatprep.subr.mxu0 0.0
  %3396 = vmatpush1.msra.mxu0 0.0
  %3397 = vmatprep.subr.mxu0 0.0
  %3398 = vmatpush1.msra.mxu0 0.0
  %3399 = vmatprep.subr.mxu0 0.0
  %3400 = vmatpush1.msra.mxu0 0.0
  %3401 = vmatprep.subr.mxu0 0.0
  %3402 = vmatpush1.msra.mxu0 0.0
  %3403 = vmatprep.subr.mxu0 0.0
  %3404 = vmatpush1.msra.mxu0 0.0
  %3405 = vmatprep.subr.mxu0 0.0
  %3406 = vmatpush1.msra.mxu0 0.0
  %3407 = vmatprep.subr.mxu0 0.0
  %3408 = vmatpush1.msra.mxu0 0.0
  %3409 = vmatprep.subr.mxu0 0.0
  %3410 = vmatpush1.msra.mxu0 %v3372
  %3411 = vmatprep.subr.mxu0 0.0
  %3412 = vmatpush1.msra.mxu0 %v3367
  %3413 = vmatprep.subr.mxu0 0.0
  %3414 = vmatpush2.msra.mxu0 0.0
  %3415 = vmatprep.subr.mxu0 0.0
  %3416 = vmatpush2.msra.mxu0 0.0
  %3417 = vmatprep.subr.mxu0 0.0
  %3418 = vmatpush2.msra.mxu0 0.0
  %3419 = vmatprep.subr.mxu0 0.0
  %3420 = vmatpush2.msra.mxu0 0.0
  %3421 = vmatprep.subr.mxu0 0.0
  %3422 = vmatpush2.msra.mxu0 0.0
  %3423 = vmatprep.subr.mxu0 0.0
  %3424 = vmatpush2.msra.mxu0 0.0
  %3425 = vmatprep.subr.mxu0 0.0
  %3426 = vmatpush2.msra.mxu0 0.0
  %3427 = vmatprep.subr.mxu0 0.0
  %3428 = vmatpush2.msra.mxu0 0.0
  %3429 = vmatprep.subr.mxu0 0.0
  %3430 = vmatpush2.msra.mxu0 0.0
  %3431 = vmatprep.subr.mxu0 0.0
  %3432 = vmatpush2.msra.mxu0 0.0
  %3433 = vmatprep.subr.mxu0 0.0
  %3434 = vmatpush2.msra.mxu0 0.0
  %3435 = vmatprep.subr.mxu0 0.0
  %3436 = vmatpush2.msra.mxu0 0.0
  %3437 = vmatprep.subr.mxu0 0.0
  %3438 = vmatpush2.msra.mxu0 0.0
  %3439 = vmatprep.subr.mxu0 0.0
  %3440 = vmatpush2.msra.mxu0 0.0
  %3441 = vmatprep.subr.mxu0 0.0
  %3442 = vmatpush2.msra.mxu0 0.0
  %3443 = vmatprep.subr.mxu0 0.0
  %3444 = vmatpush2.msra.mxu0 0.0
  %3445 = vmatprep.mubr.f32.mxu0 0.0
  %3446 = vmatmul.mubr.f32.gmra.mxu0 %v3376
  %v3447 = vpop.f32.mrf.mxu0
  %v3448 = vadd.f32 0.0, %v3447
  %v3449 = vpop.f32.mrf.mxu0
  %3450 = vmatprep.mubr.f32.mxu0 0.0
  %3451 = vmatmul.mubr.f32.gmra.mxu0 %v3379
  %v3452 = vpop.f32.mrf.mxu0
  %v3453 = vadd.f32 0.0, %v3452
  %v3454 = vpop.f32.mrf.mxu0
  %3455 = vdwg.mxu0
  %v3456 = vadd.f32 %v3293, %v3448
  %v3457 = vadd.f32 %v3294, %v3453
  %vm3458 = vcmp.gt.f32.partialorder %v3456, 0.0
  %vm3459 = vcmp.gt.f32.partialorder %v3457, 0.0
  %v3460 = vmul.f32 %v3456, 0.2
  %v3461 = vmul.f32 %v3457, 0.2
  %v3462 = vsel %vm3458, %v3456, %v3460
  %v3463 = vsel %vm3459, %v3457, %v3461
  %v3464 = vld [vmem:[%s22] sm:$0xf]
  %v3466 = vsel %vm163, %v3462, 0
  %v3469 = vsel %vm163, %v3463, 0
  %v3472 = vsel %vm167, %v3464, 0
  %3474 = vmatprep.subr.mxu0 0.0
  %3475 = vmatpush1.msra.mxu0 0.0
  %3476 = vmatprep.subr.mxu0 0.0
  %3477 = vmatpush1.msra.mxu0 0.0
  %3478 = vmatprep.subr.mxu0 0.0
  %3479 = vmatpush1.msra.mxu0 0.0
  %3480 = vmatprep.subr.mxu0 0.0
  %3481 = vmatpush1.msra.mxu0 0.0
  %3482 = vmatprep.subr.mxu0 0.0
  %3483 = vmatpush1.msra.mxu0 0.0
  %3484 = vmatprep.subr.mxu0 0.0
  %3485 = vmatpush1.msra.mxu0 0.0
  %3486 = vmatprep.subr.mxu0 0.0
  %3487 = vmatpush1.msra.mxu0 0.0
  %3488 = vmatprep.subr.mxu0 0.0
  %3489 = vmatpush1.msra.mxu0 0.0
  %3490 = vmatprep.subr.mxu0 0.0
  %3491 = vmatpush1.msra.mxu0 0.0
  %3492 = vmatprep.subr.mxu0 0.0
  %3493 = vmatpush1.msra.mxu0 0.0
  %3494 = vmatprep.subr.mxu0 0.0
  %3495 = vmatpush1.msra.mxu0 0.0
  %3496 = vmatprep.subr.mxu0 0.0
  %3497 = vmatpush1.msra.mxu0 0.0
  %3498 = vmatprep.subr.mxu0 0.0
  %3499 = vmatpush1.msra.mxu0 0.0
  %3500 = vmatprep.subr.mxu0 0.0
  %3501 = vmatpush1.msra.mxu0 0.0
  %3502 = vmatprep.subr.mxu0 0.0
  %3503 = vmatpush1.msra.mxu0 0.0
  %3504 = vmatprep.subr.mxu0 0.0
  %3505 = vmatpush1.msra.mxu0 %v3472
  %3506 = vmatprep.subr.mxu0 0.0
  %3507 = vmatpush2.msra.mxu0 0.0
  %3508 = vmatprep.subr.mxu0 0.0
  %3509 = vmatpush2.msra.mxu0 0.0
  %3510 = vmatprep.subr.mxu0 0.0
  %3511 = vmatpush2.msra.mxu0 0.0
  %3512 = vmatprep.subr.mxu0 0.0
  %3513 = vmatpush2.msra.mxu0 0.0
  %3514 = vmatprep.subr.mxu0 0.0
  %3515 = vmatpush2.msra.mxu0 0.0
  %3516 = vmatprep.subr.mxu0 0.0
  %3517 = vmatpush2.msra.mxu0 0.0
  %3518 = vmatprep.subr.mxu0 0.0
  %3519 = vmatpush2.msra.mxu0 0.0
  %3520 = vmatprep.subr.mxu0 0.0
  %3521 = vmatpush2.msra.mxu0 0.0
  %3522 = vmatprep.subr.mxu0 0.0
  %3523 = vmatpush2.msra.mxu0 0.0
  %3524 = vmatprep.subr.mxu0 0.0
  %3525 = vmatpush2.msra.mxu0 0.0
  %3526 = vmatprep.subr.mxu0 0.0
  %3527 = vmatpush2.msra.mxu0 0.0
  %3528 = vmatprep.subr.mxu0 0.0
  %3529 = vmatpush2.msra.mxu0 0.0
  %3530 = vmatprep.subr.mxu0 0.0
  %3531 = vmatpush2.msra.mxu0 0.0
  %3532 = vmatprep.subr.mxu0 0.0
  %3533 = vmatpush2.msra.mxu0 0.0
  %3534 = vmatprep.subr.mxu0 0.0
  %3535 = vmatpush2.msra.mxu0 0.0
  %3536 = vmatprep.subr.mxu0 0.0
  %3537 = vmatpush2.msra.mxu0 0.0
  %3538 = vmatprep.mubr.f32.mxu0 0.0
  %3539 = vmatmul.mubr.f32.gmra.mxu0 %v3466
  %v3540 = vpop.f32.mrf.mxu0
  %v3541 = vadd.f32 0.0, %v3540
  %v3542 = vpop.f32.mrf.mxu0
  %3543 = vmatprep.mubr.f32.mxu0 0.0
  %3544 = vmatmul.mubr.f32.gmra.mxu0 %v3469
  %v3545 = vpop.f32.mrf.mxu0
  %v3546 = vadd.f32 0.0, %v3545
  %v3547 = vpop.f32.mrf.mxu0
  %3548 = vdwg.mxu0
  %v3549 = vld [vmem:[%s23] sm:$0xff]
  %v3550 = vld [vmem:[%s23 + $0x8] sm:$0xff]
  %v3551 = vld [vmem:[%s23 + $0x10] sm:$0xff]
  %v3552 = vld [vmem:[%s23 + $0x18] sm:$0xff]
  %v3553 = vld [vmem:[%s24] sm:$0xff]
  %v3554 = vld [vmem:[%s24 + $0x8] sm:$0xff]
  %v3555 = vld [vmem:[%s24 + $0x10] sm:$0xff]
  %v3556 = vld [vmem:[%s24 + $0x18] sm:$0xff]
  %3558 = vset.pattern.permute.xlu0 0
  %3559 = vperm.xlu0 %3558, %v3553
  %v3560 = vpop.permute.xlu0 %3559
  %3563 = vset.pattern.permute.xlu0 0
  %3564 = vperm.xlu0 %3563, %v3554
  %v3565 = vpop.permute.xlu0 %3564
  %3568 = vset.pattern.permute.xlu0 0
  %3569 = vperm.xlu0 %3568, %v3555
  %v3570 = vpop.permute.xlu0 %3569
  %3573 = vset.pattern.permute.xlu0 0
  %3574 = vperm.xlu0 %3573, %v3556
  %v3575 = vpop.permute.xlu0 %3574
  %v3578 = vsel %vm557, %v3549, 0
  %v3581 = vsel %vm557, %v3550, 0
  %v3584 = vsel %vm557, %v3551, 0
  %v3587 = vsel %vm557, %v3552, 0
  %3589 = vmatprep.subr.mxu0 0.0
  %3590 = vmatpush1.msra.mxu0 0.0
  %3591 = vmatprep.subr.mxu0 0.0
  %3592 = vmatpush1.msra.mxu0 0.0
  %3593 = vmatprep.subr.mxu0 0.0
  %3594 = vmatpush1.msra.mxu0 0.0
  %3595 = vmatprep.subr.mxu0 0.0
  %3596 = vmatpush1.msra.mxu0 0.0
  %3597 = vmatprep.subr.mxu0 0.0
  %3598 = vmatpush1.msra.mxu0 0.0
  %3599 = vmatprep.subr.mxu0 0.0
  %3600 = vmatpush1.msra.mxu0 0.0
  %3601 = vmatprep.subr.mxu0 0.0
  %3602 = vmatpush1.msra.mxu0 0.0
  %3603 = vmatprep.subr.mxu0 0.0
  %3604 = vmatpush1.msra.mxu0 0.0
  %3605 = vmatprep.subr.mxu0 0.0
  %3606 = vmatpush1.msra.mxu0 0.0
  %3607 = vmatprep.subr.mxu0 0.0
  %3608 = vmatpush1.msra.mxu0 0.0
  %3609 = vmatprep.subr.mxu0 0.0
  %3610 = vmatpush1.msra.mxu0 0.0
  %3611 = vmatprep.subr.mxu0 0.0
  %3612 = vmatpush1.msra.mxu0 0.0
  %3613 = vmatprep.subr.mxu0 0.0
  %3614 = vmatpush1.msra.mxu0 0.0
  %3615 = vmatprep.subr.mxu0 0.0
  %3616 = vmatpush1.msra.mxu0 0.0
  %3617 = vmatprep.subr.mxu0 0.0
  %3618 = vmatpush1.msra.mxu0 %v3546
  %3619 = vmatprep.subr.mxu0 0.0
  %3620 = vmatpush1.msra.mxu0 %v3541
  %3621 = vmatprep.subr.mxu0 0.0
  %3622 = vmatpush2.msra.mxu0 0.0
  %3623 = vmatprep.subr.mxu0 0.0
  %3624 = vmatpush2.msra.mxu0 0.0
  %3625 = vmatprep.subr.mxu0 0.0
  %3626 = vmatpush2.msra.mxu0 0.0
  %3627 = vmatprep.subr.mxu0 0.0
  %3628 = vmatpush2.msra.mxu0 0.0
  %3629 = vmatprep.subr.mxu0 0.0
  %3630 = vmatpush2.msra.mxu0 0.0
  %3631 = vmatprep.subr.mxu0 0.0
  %3632 = vmatpush2.msra.mxu0 0.0
  %3633 = vmatprep.subr.mxu0 0.0
  %3634 = vmatpush2.msra.mxu0 0.0
  %3635 = vmatprep.subr.mxu0 0.0
  %3636 = vmatpush2.msra.mxu0 0.0
  %3637 = vmatprep.subr.mxu0 0.0
  %3638 = vmatpush2.msra.mxu0 0.0
  %3639 = vmatprep.subr.mxu0 0.0
  %3640 = vmatpush2.msra.mxu0 0.0
  %3641 = vmatprep.subr.mxu0 0.0
  %3642 = vmatpush2.msra.mxu0 0.0
  %3643 = vmatprep.subr.mxu0 0.0
  %3644 = vmatpush2.msra.mxu0 0.0
  %3645 = vmatprep.subr.mxu0 0.0
  %3646 = vmatpush2.msra.mxu0 0.0
  %3647 = vmatprep.subr.mxu0 0.0
  %3648 = vmatpush2.msra.mxu0 0.0
  %3649 = vmatprep.subr.mxu0 0.0
  %3650 = vmatpush2.msra.mxu0 0.0
  %3651 = vmatprep.subr.mxu0 0.0
  %3652 = vmatpush2.msra.mxu0 0.0
  %3653 = vmatprep.mubr.f32.mxu0 0.0
  %3654 = vmatmul.mubr.f32.gmra.mxu0 %v3578
  %v3655 = vpop.f32.mrf.mxu0
  %v3656 = vadd.f32 %v3560, %v3655
  %v3657 = vpop.f32.mrf.mxu0
  %3658 = vmatprep.mubr.f32.mxu0 0.0
  %3659 = vmatmul.mubr.f32.gmra.mxu0 %v3581
  %v3660 = vpop.f32.mrf.mxu0
  %v3661 = vadd.f32 %v3565, %v3660
  %v3662 = vpop.f32.mrf.mxu0
  %3663 = vmatprep.mubr.f32.mxu0 0.0
  %3664 = vmatmul.mubr.f32.gmra.mxu0 %v3584
  %v3665 = vpop.f32.mrf.mxu0
  %v3666 = vadd.f32 %v3570, %v3665
  %v3667 = vpop.f32.mrf.mxu0
  %3668 = vmatprep.mubr.f32.mxu0 0.0
  %3669 = vmatmul.mubr.f32.gmra.mxu0 %v3587
  %v3670 = vpop.f32.mrf.mxu0
  %v3671 = vadd.f32 %v3575, %v3670
  %v3672 = vpop.f32.mrf.mxu0
  %3673 = vdwg.mxu0
  %vm3674 = vcmask 15360
  %3675 = vst.msk [vmem:[%s26] sm:$0xff] %vm3674, %v3656
  %3676 = vst.msk [vmem:[%s26 + $0x8] sm:$0xff] %vm3674, %v3661
  %3677 = vst.msk [vmem:[%s26 + $0x10] sm:$0xff] %vm3674, %v3666
  %3678 = vst.msk [vmem:[%s26 + $0x18] sm:$0xff] %vm3674, %v3671
  // Predicated region
  $region102: #{style_content_encoder.1} parent=0 // pred_check
    _
  $region103: #{style_content_encoder.1} parent=0 // pred_check_branch
    %3680 = sbr.rel (0) target = $region105
  $region104: #{style_content_encoder.1} parent=0 // pred_region
    _
  $region105: #{style_content_encoder.1} parent=0 // pred_fallthru
    _
  // Predicated region
  $region106: #{style_content_encoder.1} parent=0 // pred_check
    _
  $region107: #{style_content_encoder.1} parent=0 // pred_check_branch
    %3682 = sbr.rel (0) target = $region109
  $region108: #{style_content_encoder.1} parent=0 // pred_region
    _
  $region109: #{style_content_encoder.1} parent=0 // pred_fallthru
    _
  // Predicated region
  $region110: #{style_content_encoder.1} parent=0 // pred_check
    _
  $region111: #{style_content_encoder.1} parent=0 // pred_check_branch
    %3684 = sbr.rel (0) target = $region113
  $region112: #{style_content_encoder.1} parent=0 // pred_region
    _
  $region113: #{style_content_encoder.1} parent=0 // pred_fallthru
    _
  // Predicated region
  $region114: #{style_content_encoder.1} parent=0 // pred_check
    _
  $region115: #{style_content_encoder.1} parent=0 // pred_check_branch
    %3686 = sbr.rel (0) target = $region117
  $region116: #{style_content_encoder.1} parent=0 // pred_region
    _
  $region117: #{style_content_encoder.1} parent=0 // pred_fallthru
    _

</llo_original>
